<compile_context>
chip_gen: v7x
topology: tpu7x:2x2x1
jax: 0.10.0
libtpu: 0.0.40
codegen_flags: <defaults>
</compile_context>

<pallas_src>
import jax
import jax.numpy as jnp
from jax import lax
from jax.experimental import pallas as pl
from jax.experimental.pallas import tpu as pltpu

LANES = 128


def _round_up(x, m):
    return (x + m - 1) // m * m


def _double_conv_kernel(x_ref, w1_ref, s1_ref, b1_ref, w2_ref, s2_ref, b2_ref,
                        o_ref, xpad_ref, mid_ref):
    """Fused (conv3x3 + BN + ReLU) x 2 for one batch element / one H tile.

    x_ref:    (1, H, W, Cin)      raw f32 input (one batch element)
    w1_ref:   (K1, Cmid)          bf16 im2col weight, rows=(ky,kx,ci), K1=rnd128(9*Cin)
    s1/b1:    (1, Cmid)           folded BN scale / bias (f32)
    w2_ref:   (K2, Cout_p)        bf16 im2col weight, K2=rnd128(9*Cmid)
    s2/b2:    (1, Cout_p)
    o_ref:    (1, TH*W, Cout_p)   lane-dense output slab (f32)
    xpad_ref: (H+4, W+2, Cin)     bf16 scratch: zero-padded input, filled at
                                  th==0 and reused by later H tiles of the SAME
                                  batch element -> the H grid axis must stay
                                  "arbitrary" (sequential, in order, one core).
    mid_ref:  (TH+2, W+2, Cmid)   bf16 scratch: padded intermediate tile
    """
    th = pl.program_id(1)
    last_th = pl.num_programs(1) - 1
    H, W, Cin = x_ref.shape[1], x_ref.shape[2], x_ref.shape[3]
    Cmid = mid_ref.shape[2]
    TH = mid_ref.shape[0] - 2
    K1 = w1_ref.shape[0]
    K2 = w2_ref.shape[0]
    t0 = pl.multiple_of(th * TH, TH)

    # ---- once per batch element: zero only the halo bands, copy the image ----
    @pl.when(th == 0)
    def _():
        zr = jnp.zeros((2, W + 2, Cin), xpad_ref.dtype)
        xpad_ref[0:2] = zr                                 # top 2 pad rows
        xpad_ref[H + 2:H + 4] = zr                         # bottom 2 pad rows
        zc = jnp.zeros((H + 4, 1, Cin), xpad_ref.dtype)
        xpad_ref[:, 0:1] = zc                              # left pad column
        xpad_ref[:, W + 1:W + 2] = zc                      # right pad column
        xpad_ref[2:2 + H, 1:1 + W] = x_ref[0].astype(xpad_ref.dtype)
        zm = jnp.zeros((TH + 2, 1, Cmid), mid_ref.dtype)
        mid_ref[:, 0:1] = zm                               # conv2 W halo: never
        mid_ref[:, W + 1:W + 2] = zm                       # written below

    # ---- stage 1: conv1 + BN + ReLU on TH+2 rows (1-row halo for conv2) ----
    x_tile = xpad_ref[pl.ds(t0, TH + 4), :, :]             # (TH+4, W+2, Cin) bf16
    rows1 = (TH + 2) * W
    cols = [x_tile[ky:ky + TH + 2, kx:kx + W, :].reshape(rows1, Cin)
            for ky in range(3) for kx in range(3)]
    if K1 > 9 * Cin:                                       # lane-pad K to 128
        cols.append(jnp.zeros((rows1, K1 - 9 * Cin), x_tile.dtype))
    a1 = jnp.concatenate(cols, axis=1)                     # (rows1, K1) bf16
    mid = jnp.dot(a1, w1_ref[...], preferred_element_type=jnp.float32)
    mid = jnp.maximum(mid * s1_ref[...] + b1_ref[...], 0.0)
    mid_ref[:, 1:1 + W, :] = mid.reshape(TH + 2, W, Cmid).astype(mid_ref.dtype)

    # Halo rows outside the image are conv2's zero padding, not conv1 outputs.
    @pl.when(th == 0)
    def _():
        mid_ref[0:1, 1:1 + W, :] = jnp.zeros((1, W, Cmid), mid_ref.dtype)

    @pl.when(th == last_th)
    def _():
        mid_ref[TH + 1:TH + 2, 1:1 + W, :] = jnp.zeros((1, W, Cmid), mid_ref.dtype)

    # ---- stage 2: conv2 + BN + ReLU on the TH output rows ----
    m_tile = mid_ref[...]                                   # (TH+2, W+2, Cmid) bf16
    rows2 = TH * W
    cols2 = [m_tile[ky:ky + TH, kx:kx + W, :].reshape(rows2, Cmid)
             for ky in range(3) for kx in range(3)]
    if K2 > 9 * Cmid:
        cols2.append(jnp.zeros((rows2, K2 - 9 * Cmid), m_tile.dtype))
    a2 = jnp.concatenate(cols2, axis=1)                     # (rows2, K2) bf16
    out = jnp.dot(a2, w2_ref[...], preferred_element_type=jnp.float32)
    out = jnp.maximum(out * s2_ref[...] + b2_ref[...], 0.0)
    o_ref[0] = out.astype(o_ref.dtype)


def _fold_bn(p, cout_pad, eps):
    scale = p["gamma"] / jnp.sqrt(p["var"] + eps)
    bias = (p["b"] - p["mean"]) * scale + p["beta"]
    cout = scale.shape[0]
    scale = jnp.pad(scale, (0, cout_pad - cout)).reshape(1, cout_pad)
    bias = jnp.pad(bias, (0, cout_pad - cout)).reshape(1, cout_pad)
    return scale.astype(jnp.float32), bias.astype(jnp.float32)


def _pack_weight(w, k_pad, cout_pad):
    # (Cout, Cin, 3, 3) -> (k_pad, cout_pad); row index = (ky*3 + kx)*Cin + ci.
    cout, cin = w.shape[0], w.shape[1]
    w = jnp.transpose(w, (2, 3, 1, 0)).reshape(9 * cin, cout)   # (9*Cin, Cout)
    w = jnp.pad(w, ((0, k_pad - 9 * cin), (0, cout_pad - cout)))
    return w.astype(jnp.bfloat16)


def _pick_tile_h(H, tile_h):
    # Largest divisor of H that is <= tile_h: no ragged last tile and no
    # fallback to TH=H (the old VMEM trap when H % tile_h != 0).
    # TODO(synk): support a masked ragged last tile instead of a divisor search.
    t = max(1, min(tile_h, H))
    while H % t:
        t -= 1
    return t


def double_conv_forward(x_nchw, params, eps=1e-5, tile_h=8):
    """DoubleConv forward. Input NCHW (PyTorch), output NCHW.

    tile_h: output rows per grid step; sweep up to 16-32 at real UNet sizes on
    v5e/v6e (128 MiB VMEM) to amortize per-step overhead and halo recompute.
    """
    p1, p2 = params["block1"], params["block2"]
    x = jnp.transpose(x_nchw, (0, 2, 3, 1)).astype(jnp.float32)   # NHWC
    N, H, W, Cin = x.shape
    Cmid, Cout = p1["w"].shape[0], p2["w"].shape[0]

    K1 = _round_up(9 * Cin, LANES)        # conv1 im2col K (no per-tap 128 pad)
    K2 = _round_up(9 * Cmid, LANES)       # conv2 im2col K
    Cout_p = _round_up(Cout, LANES)       # lane-dense output slab
    TH = _pick_tile_h(H, tile_h)
    num_th = H // TH

    w1 = _pack_weight(p1["w"], K1, Cmid)
    w2 = _pack_weight(p2["w"], K2, Cout_p)
    s1, b1 = _fold_bn(p1, Cmid, eps)
    s2, b2 = _fold_bn(p2, Cout_p, eps)

    out_flat = pl.pallas_call(
        _double_conv_kernel,
        out_shape=jax.ShapeDtypeStruct((N, H * W, Cout_p), jnp.float32),
        grid_spec=pltpu.PrefetchScalarGridSpec(
            num_scalar_prefetch=0,
            grid=(N, num_th),
            in_specs=[
                # Full image per batch element; block index is constant in t,
                # so Pallas only DMAs it once per batch element.
                pl.BlockSpec((1, H, W, Cin), lambda n, t: (n, 0, 0, 0)),
                pl.BlockSpec((K1, Cmid), lambda n, t: (0, 0)),
                pl.BlockSpec((1, Cmid), lambda n, t: (0, 0)),
                pl.BlockSpec((1, Cmid), lambda n, t: (0, 0)),
                pl.BlockSpec((K2, Cout_p), lambda n, t: (0, 0)),
                pl.BlockSpec((1, Cout_p), lambda n, t: (0, 0)),
                pl.BlockSpec((1, Cout_p), lambda n, t: (0, 0)),
            ],
            out_specs=pl.BlockSpec((1, TH * W, Cout_p), lambda n, t: (n, t, 0)),
            scratch_shapes=[
                pltpu.VMEM((H + 4, W + 2, Cin), jnp.bfloat16),
                pltpu.VMEM((TH + 2, W + 2, Cmid), jnp.bfloat16),
            ],
        ),
        compiler_params=pltpu.CompilerParams(
            # H axis MUST stay "arbitrary": the padded-input scratch is filled
            # at th==0 and reused in order by later H tiles of the same batch
            # element. Only the batch axis may be marked parallel.
            dimension_semantics=("parallel", "arbitrary"),
            # Raise toward ~100 MiB on v5e/v6e (128 MiB VMEM) with larger
            # tile_h; keep <= ~56 MiB on v7x (64 MiB VMEM).
            vmem_limit_bytes=48 * 1024 * 1024,
        ),
    )(x, w1, s1, b1, w2, s2, b2)

    out = out_flat[:, :, :Cout].reshape(N, H, W, Cout)      # strip lane padding
    return jnp.transpose(out, (0, 3, 1, 2))                 # NHWC -> NCHW


def _init_block(key, cin, cout):
    k1, k2, k3, k4 = jax.random.split(key, 4)
    return {
        "w": 0.1 * jax.random.normal(k1, (cout, cin, 3, 3), jnp.float32),
        "b": 0.1 * jax.random.normal(k2, (cout,), jnp.float32),
        "gamma": 1.0 + 0.1 * jax.random.normal(k3, (cout,), jnp.float32),
        "beta": 0.1 * jax.random.normal(k4, (cout,), jnp.float32),
        # Eval-mode BN running statistics (deterministic, nontrivial).
        "mean": 0.05 * jnp.arange(cout, dtype=jnp.float32),
        "var": 1.0 + 0.01 * jnp.arange(cout, dtype=jnp.float32),
    }


def _reference_block(x_nhwc, p, eps=1e-5):
    """Pure-JAX reference with matching precision (bf16 inputs, f32 accum)."""
    w = jnp.transpose(p["w"], (2, 3, 1, 0)).astype(jnp.bfloat16)   # HWIO
    y = lax.conv_general_dilated(
        x_nhwc.astype(jnp.bfloat16), w, window_strides=(1, 1),
        padding=((1, 1), (1, 1)),
        dimension_numbers=("NHWC", "HWIO", "NHWC"),
        preferred_element_type=jnp.float32)
    y = y + p["b"]
    scale = p["gamma"] / jnp.sqrt(p["var"] + eps)
    y = (y - p["mean"]) * scale + p["beta"]
    return jnp.maximum(y, 0.0)


if __name__ == "__main__":
    key = jax.random.PRNGKey(0)
    kx, kb1, kb2 = jax.random.split(key, 3)

    N, Cin, C, H, W = 2, 4, 8, 16, 16
    x_nchw = jax.random.normal(kx, (N, Cin, H, W), jnp.float32)

    params = {
        "block1": _init_block(kb1, Cin, C),
        "block2": _init_block(kb2, C, C),
    }

    out = double_conv_forward(x_nchw, params)
    out = jax.block_until_ready(out)

    # Cross-check against a pure-JAX reference (same bf16/f32 mixed precision).
    x_nhwc = jnp.transpose(x_nchw, (0, 2, 3, 1))
    ref = _reference_block(x_nhwc, params["block1"])
    ref = _reference_block(ref, params["block2"])
    ref = jnp.transpose(ref, (0, 3, 1, 2))
    assert out.shape == (N, C, H, W)
    err = float(jnp.max(jnp.abs(out - ref)))
    assert jnp.allclose(out, ref, atol=5e-3, rtol=5e-3), err

    print("KERNEL_OK")
</pallas_src>

<mosaic_0001>
module attributes {stable_mosaic.version = 11 : i64} {
  func.func @_double_conv_kernel(%arg0: i32, %arg1: i32, %arg2: memref<1x16x16x4xf32, #tpu.memory_space<vmem>>, %arg3: memref<128x8xbf16, #tpu.memory_space<vmem>>, %arg4: memref<1x8xf32, #tpu.memory_space<vmem>>, %arg5: memref<1x8xf32, #tpu.memory_space<vmem>>, %arg6: memref<128x128xbf16, #tpu.memory_space<vmem>>, %arg7: memref<1x128xf32, #tpu.memory_space<vmem>>, %arg8: memref<1x128xf32, #tpu.memory_space<vmem>>, %arg9: memref<1x128x128xf32, #tpu.memory_space<vmem>>, %arg10: memref<20x18x4xbf16, #tpu.memory_space<vmem>>, %arg11: memref<10x18x8xbf16, #tpu.memory_space<vmem>>) attributes {dimension_semantics = [#tpu.dimension_semantics<parallel>, #tpu.dimension_semantics<arbitrary>], iteration_bounds = array<i64: 2, 2>, scalar_prefetch = 0 : i64, scratch_operands = 2 : i64, tpu.core_type = #tpu.core_type<tc>, window_params = [{transform_indices = @transform_0, window_bounds = array<i64: 1, 16, 16, 4>}, {pipeline_mode = #tpu.pipeline_mode<synchronous>, transform_indices = @transform_1, window_bounds = array<i64: 128, 8>}, {pipeline_mode = #tpu.pipeline_mode<synchronous>, transform_indices = @transform_2, window_bounds = array<i64: 1, 8>}, {pipeline_mode = #tpu.pipeline_mode<synchronous>, transform_indices = @transform_3, window_bounds = array<i64: 1, 8>}, {pipeline_mode = #tpu.pipeline_mode<synchronous>, transform_indices = @transform_4, window_bounds = array<i64: 128, 128>}, {pipeline_mode = #tpu.pipeline_mode<synchronous>, transform_indices = @transform_5, window_bounds = array<i64: 1, 128>}, {pipeline_mode = #tpu.pipeline_mode<synchronous>, transform_indices = @transform_6, window_bounds = array<i64: 1, 128>}, {transform_indices = @transform_7, window_bounds = array<i64: 1, 128, 128>}]} {
    %c8_i32 = arith.constant 8 : i32
    %0 = arith.muli %arg1, %c8_i32 : i32
    %1 = tpu.assume_multiple %0, 8 : i32
    %c0_i32 = arith.constant 0 : i32
    %2 = arith.cmpi eq, %arg1, %c0_i32 : i32
    %3 = arith.extui %2 : i1 to i32
    %c0_i32_0 = arith.constant 0 : i32
    %4 = arith.cmpi ne, %3, %c0_i32_0 : i32
    scf.if %4 {
      %cst_30 = arith.constant 0.000000e+00 : bf16
      %80 = vector.broadcast %cst_30 : bf16 to vector<2x18x4xbf16>
      %c0_31 = arith.constant 0 : index
      %c0_32 = arith.constant 0 : index
      %c0_33 = arith.constant 0 : index
      %81 = vector.load %arg10[%c0_31, %c0_32, %c0_33] : memref<20x18x4xbf16, #tpu.memory_space<vmem>>, vector<2x18x4xbf16>
      tpu.vector_store %arg10[%c0_31, %c0_32, %c0_33], %80 {strides = array<i32>} : memref<20x18x4xbf16, #tpu.memory_space<vmem>>, vector<2x18x4xbf16>,
      %c18 = arith.constant 18 : index
      %c0_34 = arith.constant 0 : index
      %c0_35 = arith.constant 0 : index
      %82 = vector.load %arg10[%c18, %c0_34, %c0_35] : memref<20x18x4xbf16, #tpu.memory_space<vmem>>, vector<2x18x4xbf16>
      tpu.vector_store %arg10[%c18, %c0_34, %c0_35], %80 {strides = array<i32>} : memref<20x18x4xbf16, #tpu.memory_space<vmem>>, vector<2x18x4xbf16>,
      %cst_36 = arith.constant 0.000000e+00 : bf16
      %83 = vector.broadcast %cst_36 : bf16 to vector<20x1x4xbf16>
      %c0_37 = arith.constant 0 : index
      %c0_38 = arith.constant 0 : index
      %c0_39 = arith.constant 0 : index
      %84 = vector.load %arg10[%c0_37, %c0_38, %c0_39] : memref<20x18x4xbf16, #tpu.memory_space<vmem>>, vector<20x1x4xbf16>
      tpu.vector_store %arg10[%c0_37, %c0_38, %c0_39], %83 {strides = array<i32>} : memref<20x18x4xbf16, #tpu.memory_space<vmem>>, vector<20x1x4xbf16>,
      %c0_40 = arith.constant 0 : index
      %c17 = arith.constant 17 : index
      %c0_41 = arith.constant 0 : index
      %85 = vector.load %arg10[%c0_40, %c17, %c0_41] : memref<20x18x4xbf16, #tpu.memory_space<vmem>>, vector<20x1x4xbf16>
      tpu.vector_store %arg10[%c0_40, %c17, %c0_41], %83 {strides = array<i32>} : memref<20x18x4xbf16, #tpu.memory_space<vmem>>, vector<20x1x4xbf16>,
      %c0_42 = arith.constant 0 : index
      %c0_43 = arith.constant 0 : index
      %c0_44 = arith.constant 0 : index
      %c0_45 = arith.constant 0 : index
      %86 = vector.load %arg2[%c0_42, %c0_43, %c0_44, %c0_45] : memref<1x16x16x4xf32, #tpu.memory_space<vmem>>, vector<1x16x16x4xf32>
      %87 = vector.shape_cast %86 : vector<1x16x16x4xf32> to vector<16x16x4xf32>
      %88 = arith.truncf %87 : vector<16x16x4xf32> to vector<16x16x4xbf16>
      %c2 = arith.constant 2 : index
      %c1_46 = arith.constant 1 : index
      %c0_47 = arith.constant 0 : index
      %89 = vector.load %arg10[%c2, %c1_46, %c0_47] : memref<20x18x4xbf16, #tpu.memory_space<vmem>>, vector<16x16x4xbf16>
      tpu.vector_store %arg10[%c2, %c1_46, %c0_47], %88 {strides = array<i32>} : memref<20x18x4xbf16, #tpu.memory_space<vmem>>, vector<16x16x4xbf16>,
      %cst_48 = arith.constant 0.000000e+00 : bf16
      %90 = vector.broadcast %cst_48 : bf16 to vector<10x1x8xbf16>
      %c0_49 = arith.constant 0 : index
      %c0_50 = arith.constant 0 : index
      %c0_51 = arith.constant 0 : index
      %91 = vector.load %arg11[%c0_49, %c0_50, %c0_51] : memref<10x18x8xbf16, #tpu.memory_space<vmem>>, vector<10x1x8xbf16>
      tpu.vector_store %arg11[%c0_49, %c0_50, %c0_51], %90 {strides = array<i32>} : memref<10x18x8xbf16, #tpu.memory_space<vmem>>, vector<10x1x8xbf16>,
      %c0_52 = arith.constant 0 : index
      %c17_53 = arith.constant 17 : index
      %c0_54 = arith.constant 0 : index
      %92 = vector.load %arg11[%c0_52, %c17_53, %c0_54] : memref<10x18x8xbf16, #tpu.memory_space<vmem>>, vector<10x1x8xbf16>
      tpu.vector_store %arg11[%c0_52, %c17_53, %c0_54], %90 {strides = array<i32>} : memref<10x18x8xbf16, #tpu.memory_space<vmem>>, vector<10x1x8xbf16>,
    } else {
    }
    %5 = arith.index_cast %1 : i32 to index
    %c0 = arith.constant 0 : index
    %c0_1 = arith.constant 0 : index
    %6 = vector.load %arg10[%5, %c0, %c0_1] : memref<20x18x4xbf16, #tpu.memory_space<vmem>>, vector<12x18x4xbf16>
    %7 = vector.extract_strided_slice %6 {offsets = [0, 0, 0], sizes = [10, 16, 4], strides = [1, 1, 1]} : vector<12x18x4xbf16> to vector<10x16x4xbf16>
    %8 = vector.shape_cast %7 : vector<10x16x4xbf16> to vector<160x4xbf16>
    %9 = vector.extract_strided_slice %6 {offsets = [0, 1, 0], sizes = [10, 16, 4], strides = [1, 1, 1]} : vector<12x18x4xbf16> to vector<10x16x4xbf16>
    %10 = vector.shape_cast %9 : vector<10x16x4xbf16> to vector<160x4xbf16>
    %11 = vector.extract_strided_slice %6 {offsets = [0, 2, 0], sizes = [10, 16, 4], strides = [1, 1, 1]} : vector<12x18x4xbf16> to vector<10x16x4xbf16>
    %12 = vector.shape_cast %11 : vector<10x16x4xbf16> to vector<160x4xbf16>
    %13 = vector.extract_strided_slice %6 {offsets = [1, 0, 0], sizes = [10, 16, 4], strides = [1, 1, 1]} : vector<12x18x4xbf16> to vector<10x16x4xbf16>
    %14 = vector.shape_cast %13 : vector<10x16x4xbf16> to vector<160x4xbf16>
    %15 = vector.extract_strided_slice %6 {offsets = [1, 1, 0], sizes = [10, 16, 4], strides = [1, 1, 1]} : vector<12x18x4xbf16> to vector<10x16x4xbf16>
    %16 = vector.shape_cast %15 : vector<10x16x4xbf16> to vector<160x4xbf16>
    %17 = vector.extract_strided_slice %6 {offsets = [1, 2, 0], sizes = [10, 16, 4], strides = [1, 1, 1]} : vector<12x18x4xbf16> to vector<10x16x4xbf16>
    %18 = vector.shape_cast %17 : vector<10x16x4xbf16> to vector<160x4xbf16>
    %19 = vector.extract_strided_slice %6 {offsets = [2, 0, 0], sizes = [10, 16, 4], strides = [1, 1, 1]} : vector<12x18x4xbf16> to vector<10x16x4xbf16>
    %20 = vector.shape_cast %19 : vector<10x16x4xbf16> to vector<160x4xbf16>
    %21 = vector.extract_strided_slice %6 {offsets = [2, 1, 0], sizes = [10, 16, 4], strides = [1, 1, 1]} : vector<12x18x4xbf16> to vector<10x16x4xbf16>
    %22 = vector.shape_cast %21 : vector<10x16x4xbf16> to vector<160x4xbf16>
    %23 = vector.extract_strided_slice %6 {offsets = [2, 2, 0], sizes = [10, 16, 4], strides = [1, 1, 1]} : vector<12x18x4xbf16> to vector<10x16x4xbf16>
    %24 = vector.shape_cast %23 : vector<10x16x4xbf16> to vector<160x4xbf16>
    %cst = arith.constant 0.000000e+00 : bf16
    %25 = vector.broadcast %cst : bf16 to vector<160x92xbf16>
    %26 = tpu.concatenate %8, %10, %12, %14, %16, %18, %20, %22, %24, %25 in 1 : vector<160x4xbf16>, vector<160x4xbf16>, vector<160x4xbf16>, vector<160x4xbf16>, vector<160x4xbf16>, vector<160x4xbf16>, vector<160x4xbf16>, vector<160x4xbf16>, vector<160x4xbf16>, vector<160x92xbf16> -> vector<160x128xbf16>
    %c0_2 = arith.constant 0 : index
    %c0_3 = arith.constant 0 : index
    %27 = vector.load %arg3[%c0_2, %c0_3] : memref<128x8xbf16, #tpu.memory_space<vmem>>, vector<128x8xbf16>
    %cst_4 = arith.constant dense<0.000000e+00> : vector<160x8xf32>
    %28 = tpu.matmul %26, %27, %cst_4 {dimension_numbers = #tpu.dot_dimension_numbers<[1], [0], [0], [1], [0, 0, 1, 1], [], []>} : vector<160x128xbf16>, vector<128x8xbf16>, vector<160x8xf32> -> vector<160x8xf32>
    %c0_5 = arith.constant 0 : index
    %c0_6 = arith.constant 0 : index
    %29 = vector.load %arg4[%c0_5, %c0_6] : memref<1x8xf32, #tpu.memory_space<vmem>>, vector<1x8xf32>
    %30 = vector.broadcast %29 : vector<1x8xf32> to vector<160x8xf32>
    %31 = arith.mulf %28, %30 : vector<160x8xf32>
    %c0_7 = arith.constant 0 : index
    %c0_8 = arith.constant 0 : index
    %32 = vector.load %arg5[%c0_7, %c0_8] : memref<1x8xf32, #tpu.memory_space<vmem>>, vector<1x8xf32>
    %33 = vector.broadcast %32 : vector<1x8xf32> to vector<160x8xf32>
    %34 = arith.addf %31, %33 : vector<160x8xf32>
    %cst_9 = arith.constant 0.000000e+00 : f32
    %35 = vector.broadcast %cst_9 : f32 to vector<160x8xf32>
    %36 = arith.maximumf %34, %35 : vector<160x8xf32>
    %37 = vector.shape_cast %36 : vector<160x8xf32> to vector<10x16x8xf32>
    %38 = arith.truncf %37 : vector<10x16x8xf32> to vector<10x16x8xbf16>
    %c0_10 = arith.constant 0 : index
    %c1 = arith.constant 1 : index
    %c0_11 = arith.constant 0 : index
    %39 = vector.load %arg11[%c0_10, %c1, %c0_11] : memref<10x18x8xbf16, #tpu.memory_space<vmem>>, vector<10x16x8xbf16>
    tpu.vector_store %arg11[%c0_10, %c1, %c0_11], %38 {strides = array<i32>} : memref<10x18x8xbf16, #tpu.memory_space<vmem>>, vector<10x16x8xbf16>,
    %c0_i32_12 = arith.constant 0 : i32
    %40 = arith.cmpi eq, %arg1, %c0_i32_12 : i32
    %41 = arith.extui %40 : i1 to i32
    %c0_i32_13 = arith.constant 0 : i32
    %42 = arith.cmpi ne, %41, %c0_i32_13 : i32
    scf.if %42 {
      %cst_30 = arith.constant 0.000000e+00 : bf16
      %80 = vector.broadcast %cst_30 : bf16 to vector<1x16x8xbf16>
      %c0_31 = arith.constant 0 : index
      %c1_32 = arith.constant 1 : index
      %c0_33 = arith.constant 0 : index
      %81 = vector.load %arg11[%c0_31, %c1_32, %c0_33] : memref<10x18x8xbf16, #tpu.memory_space<vmem>>, vector<1x16x8xbf16>
      tpu.vector_store %arg11[%c0_31, %c1_32, %c0_33], %80 {strides = array<i32>} : memref<10x18x8xbf16, #tpu.memory_space<vmem>>, vector<1x16x8xbf16>,
    } else {
    }
    %c1_i32 = arith.constant 1 : i32
    %43 = arith.cmpi eq, %arg1, %c1_i32 : i32
    %44 = arith.extui %43 : i1 to i32
    %c0_i32_14 = arith.constant 0 : i32
    %45 = arith.cmpi ne, %44, %c0_i32_14 : i32
    scf.if %45 {
      %cst_30 = arith.constant 0.000000e+00 : bf16
      %80 = vector.broadcast %cst_30 : bf16 to vector<1x16x8xbf16>
      %c9 = arith.constant 9 : index
      %c1_31 = arith.constant 1 : index
      %c0_32 = arith.constant 0 : index
      %81 = vector.load %arg11[%c9, %c1_31, %c0_32] : memref<10x18x8xbf16, #tpu.memory_space<vmem>>, vector<1x16x8xbf16>
      tpu.vector_store %arg11[%c9, %c1_31, %c0_32], %80 {strides = array<i32>} : memref<10x18x8xbf16, #tpu.memory_space<vmem>>, vector<1x16x8xbf16>,
    } else {
    }
    %c0_15 = arith.constant 0 : index
    %c0_16 = arith.constant 0 : index
    %c0_17 = arith.constant 0 : index
    %46 = vector.load %arg11[%c0_15, %c0_16, %c0_17] : memref<10x18x8xbf16, #tpu.memory_space<vmem>>, vector<10x18x8xbf16>
    %47 = vector.extract_strided_slice %46 {offsets = [0, 0, 0], sizes = [8, 16, 8], strides = [1, 1, 1]} : vector<10x18x8xbf16> to vector<8x16x8xbf16>
    %48 = vector.shape_cast %47 : vector<8x16x8xbf16> to vector<128x8xbf16>
    %49 = vector.extract_strided_slice %46 {offsets = [0, 1, 0], sizes = [8, 16, 8], strides = [1, 1, 1]} : vector<10x18x8xbf16> to vector<8x16x8xbf16>
    %50 = vector.shape_cast %49 : vector<8x16x8xbf16> to vector<128x8xbf16>
    %51 = vector.extract_strided_slice %46 {offsets = [0, 2, 0], sizes = [8, 16, 8], strides = [1, 1, 1]} : vector<10x18x8xbf16> to vector<8x16x8xbf16>
    %52 = vector.shape_cast %51 : vector<8x16x8xbf16> to vector<128x8xbf16>
    %53 = vector.extract_strided_slice %46 {offsets = [1, 0, 0], sizes = [8, 16, 8], strides = [1, 1, 1]} : vector<10x18x8xbf16> to vector<8x16x8xbf16>
    %54 = vector.shape_cast %53 : vector<8x16x8xbf16> to vector<128x8xbf16>
    %55 = vector.extract_strided_slice %46 {offsets = [1, 1, 0], sizes = [8, 16, 8], strides = [1, 1, 1]} : vector<10x18x8xbf16> to vector<8x16x8xbf16>
    %56 = vector.shape_cast %55 : vector<8x16x8xbf16> to vector<128x8xbf16>
    %57 = vector.extract_strided_slice %46 {offsets = [1, 2, 0], sizes = [8, 16, 8], strides = [1, 1, 1]} : vector<10x18x8xbf16> to vector<8x16x8xbf16>
    %58 = vector.shape_cast %57 : vector<8x16x8xbf16> to vector<128x8xbf16>
    %59 = vector.extract_strided_slice %46 {offsets = [2, 0, 0], sizes = [8, 16, 8], strides = [1, 1, 1]} : vector<10x18x8xbf16> to vector<8x16x8xbf16>
    %60 = vector.shape_cast %59 : vector<8x16x8xbf16> to vector<128x8xbf16>
    %61 = vector.extract_strided_slice %46 {offsets = [2, 1, 0], sizes = [8, 16, 8], strides = [1, 1, 1]} : vector<10x18x8xbf16> to vector<8x16x8xbf16>
    %62 = vector.shape_cast %61 : vector<8x16x8xbf16> to vector<128x8xbf16>
    %63 = vector.extract_strided_slice %46 {offsets = [2, 2, 0], sizes = [8, 16, 8], strides = [1, 1, 1]} : vector<10x18x8xbf16> to vector<8x16x8xbf16>
    %64 = vector.shape_cast %63 : vector<8x16x8xbf16> to vector<128x8xbf16>
    %cst_18 = arith.constant 0.000000e+00 : bf16
    %65 = vector.broadcast %cst_18 : bf16 to vector<128x56xbf16>
    %66 = tpu.concatenate %48, %50, %52, %54, %56, %58, %60, %62, %64, %65 in 1 : vector<128x8xbf16>, vector<128x8xbf16>, vector<128x8xbf16>, vector<128x8xbf16>, vector<128x8xbf16>, vector<128x8xbf16>, vector<128x8xbf16>, vector<128x8xbf16>, vector<128x8xbf16>, vector<128x56xbf16> -> vector<128x128xbf16>
    %c0_19 = arith.constant 0 : index
    %c0_20 = arith.constant 0 : index
    %67 = vector.load %arg6[%c0_19, %c0_20] : memref<128x128xbf16, #tpu.memory_space<vmem>>, vector<128x128xbf16>
    %cst_21 = arith.constant dense<0.000000e+00> : vector<128x128xf32>
    %68 = tpu.matmul %66, %67, %cst_21 {dimension_numbers = #tpu.dot_dimension_numbers<[1], [0], [0], [1], [0, 0, 1, 1], [], []>} : vector<128x128xbf16>, vector<128x128xbf16>, vector<128x128xf32> -> vector<128x128xf32>
    %c0_22 = arith.constant 0 : index
    %c0_23 = arith.constant 0 : index
    %69 = vector.load %arg7[%c0_22, %c0_23] : memref<1x128xf32, #tpu.memory_space<vmem>>, vector<1x128xf32>
    %70 = vector.broadcast %69 : vector<1x128xf32> to vector<128x128xf32>
    %71 = arith.mulf %68, %70 : vector<128x128xf32>
    %c0_24 = arith.constant 0 : index
    %c0_25 = arith.constant 0 : index
    %72 = vector.load %arg8[%c0_24, %c0_25] : memref<1x128xf32, #tpu.memory_space<vmem>>, vector<1x128xf32>
    %73 = vector.broadcast %72 : vector<1x128xf32> to vector<128x128xf32>
    %74 = arith.addf %71, %73 : vector<128x128xf32>
    %cst_26 = arith.constant 0.000000e+00 : f32
    %75 = vector.broadcast %cst_26 : f32 to vector<128x128xf32>
    %76 = arith.maximumf %74, %75 : vector<128x128xf32>
    %c0_27 = arith.constant 0 : index
    %c0_28 = arith.constant 0 : index
    %c0_29 = arith.constant 0 : index
    %77 = vector.load %arg9[%c0_27, %c0_28, %c0_29] : memref<1x128x128xf32, #tpu.memory_space<vmem>>, vector<1x128x128xf32>
    %78 = vector.shape_cast %77 : vector<1x128x128xf32> to vector<128x128xf32>
    %79 = vector.shape_cast %76 : vector<128x128xf32> to vector<1x128x128xf32>
    tpu.vector_store %arg9[%c0_27, %c0_28, %c0_29], %79 {strides = array<i32>} : memref<1x128x128xf32, #tpu.memory_space<vmem>>, vector<1x128x128xf32>,
    return
  }
  func.func @transform_0(%arg0: i32, %arg1: i32) -> (i32, i32, i32, i32) {
    %c0_i32 = arith.constant 0 : i32
    %c0_i32_0 = arith.constant 0 : i32
    %c0_i32_1 = arith.constant 0 : i32
    %c0_i32_2 = arith.constant 0 : i32
    return %arg0, %c0_i32, %c0_i32_0, %c0_i32_1 : i32, i32, i32, i32
  }
  func.func @transform_1(%arg0: i32, %arg1: i32) -> (i32, i32) {
    %c0_i32 = arith.constant 0 : i32
    %c0_i32_0 = arith.constant 0 : i32
    %c0_i32_1 = arith.constant 0 : i32
    return %c0_i32, %c0_i32_0 : i32, i32
  }
  func.func @transform_2(%arg0: i32, %arg1: i32) -> (i32, i32) {
    %c0_i32 = arith.constant 0 : i32
    %c0_i32_0 = arith.constant 0 : i32
    %c0_i32_1 = arith.constant 0 : i32
    return %c0_i32, %c0_i32_0 : i32, i32
  }
  func.func @transform_3(%arg0: i32, %arg1: i32) -> (i32, i32) {
    %c0_i32 = arith.constant 0 : i32
    %c0_i32_0 = arith.constant 0 : i32
    %c0_i32_1 = arith.constant 0 : i32
    return %c0_i32, %c0_i32_0 : i32, i32
  }
  func.func @transform_4(%arg0: i32, %arg1: i32) -> (i32, i32) {
    %c0_i32 = arith.constant 0 : i32
    %c0_i32_0 = arith.constant 0 : i32
    %c0_i32_1 = arith.constant 0 : i32
    return %c0_i32, %c0_i32_0 : i32, i32
  }
  func.func @transform_5(%arg0: i32, %arg1: i32) -> (i32, i32) {
    %c0_i32 = arith.constant 0 : i32
    %c0_i32_0 = arith.constant 0 : i32
    %c0_i32_1 = arith.constant 0 : i32
    return %c0_i32, %c0_i32_0 : i32, i32
  }
  func.func @transform_6(%arg0: i32, %arg1: i32) -> (i32, i32) {
    %c0_i32 = arith.constant 0 : i32
    %c0_i32_0 = arith.constant 0 : i32
    %c0_i32_1 = arith.constant 0 : i32
    return %c0_i32, %c0_i32_0 : i32, i32
  }
  func.func @transform_7(%arg0: i32, %arg1: i32) -> (i32, i32, i32) {
    %c0_i32 = arith.constant 0 : i32
    %c0_i32_0 = arith.constant 0 : i32
    return %arg0, %arg1, %c0_i32 : i32, i32, i32
  }
}

</mosaic_0001>

<llo_original>
// kernel: tpu_custom_call.1
$region0: #{tpu_custom_call.1}
  #allocation0 [shape = 'u32[]', space=smem, size = 0x4, offset = 0x4, fixed_abs, tag = 'smem constant byte address 0x4 - core index']
  #allocation1 [shape = 'u32[144,128]{1,0:T(1,128)}', space=vmem, size = 0x12000, scoped, tag = 'internal scratch']
  #allocation2 [shape = 'bf16[20,18,4]{2,1,0:T(8,128)(2,1)}', space=vmem, size = 0x1e000, scoped, tag = 'scratch operand']
  #allocation3 [shape = 'bf16[10,18,8]{2,1,0:T(8,128)(2,1)}', space=vmem, size = 0xf000, scoped, tag = 'scratch operand']
  %s0 = inlined_call_operand.vmem [shape: f32[2,16,16,4], index: 0, kind: input, shape index: {}]
  %s1 = inlined_call_operand.vmem [shape: bf16[128,8], index: 1, kind: input, shape index: {}]
  %s2 = inlined_call_operand.vmem [shape: f32[1,8], index: 2, kind: input, shape index: {}]
  %s3 = inlined_call_operand.vmem [shape: f32[1,8], index: 3, kind: input, shape index: {}]
  %s4 = inlined_call_operand.vmem [shape: bf16[128,128], index: 4, kind: input, shape index: {}]
  %s5 = inlined_call_operand.vmem [shape: f32[1,128], index: 5, kind: input, shape index: {}]
  %s6 = inlined_call_operand.vmem [shape: f32[1,128], index: 6, kind: input, shape index: {}]
  %s7 = inlined_call_operand.hbm [shape: f32[2,256,128], index: 7, kind: output, shape index: {}]
  %s8 = sld [smem:[#allocation0]]
  $region73: #{tpu_custom_call.1} parent=0
    _
  %s10 = ssub.s32 1, %s8
  %s11 = scalar_select 0, %s10, %s8
  $region1: #{tpu_custom_call.1} parent=0
    #allocation4 [shape = 'u8[131072]{0}', space=vmem, size = 0x20000, scoped, tag = 'output window, operand 0']
    #allocation5 [shape = 's32[2]{0}', space=sflag, size = 0x8, scoped, tag = 'scoped memory for tpu_custom_call.1']
    %12 = vsyncpa [#allocation5], 0
    %s13 = scalar_lea.sflag [#allocation5], 1
    %14 = vsyncpa %s13, 0
    loop: start=0, step=1, limit=6
    $region2: #{tpu_custom_call.1} parent=1 // loop_pre_header
      _
    $region3: #{tpu_custom_call.1} parent=1 // loop_header
      %s16 = sphi 0, %s20
      %p17 = scmp.ge.s32.totalorder %s16, 6
      %s23 = sphi 0, %s35
      %s24 = sphi 0, %s31
      %s25 = sphi 0, %s23
      %s26 = sphi 0, %s24
      %s27 = sphi 0, %s25
      %s28 = sphi 0, %s26
      %s38 = sphi 0, %s40
      %s41 = sphi 0, %s38
      %s42 = sphi 0, %s41
      %s58 = sphi 0, %s42
      %s62 = sphi 0, %s62
      %s64 = sphi 0, %s62
      %s65 = sphi 0, %s64
      %s79 = sphi 0, %s65
      %s83 = sphi 0, %s83
      %s85 = sphi 0, %s83
      %s86 = sphi 0, %s85
      %s100 = sphi 0, %s86
      %s104 = sphi 0, %s104
      %s106 = sphi 0, %s104
      %s107 = sphi 0, %s106
      %s121 = sphi 0, %s107
      %s125 = sphi 0, %s125
      %s127 = sphi 0, %s125
      %s128 = sphi 0, %s127
      %s142 = sphi 0, %s128
      %s146 = sphi 0, %s146
      %s148 = sphi 0, %s146
      %s149 = sphi 0, %s148
      %s163 = sphi 0, %s149
      %s167 = sphi 0, %s167
      %s169 = sphi 0, %s167
      %s170 = sphi 0, %s169
      %s184 = sphi 0, %s170
      %s192 = sphi 0, %s194
      %s195 = sphi 0, %s192
      %s196 = sphi 0, %s195
      %s212 = sphi 0, %s196
    $region4: #{tpu_custom_call.1} parent=1 // loop_header_branch
      %19 = sbr.rel (%p17) target = $region8
    $region5: #{tpu_custom_call.1} parent=1 // loop_body
      %s21 = ssub.s32 %s16, 1
      %s22 = ssub.s32 %s16, 2
      %s29 = sadd.s32 1, %s24
      %p30 = scmp.ge.s32.totalorder %s29, 2
      %s31 = scalar_select %p30, 0, %s29
      %s32 = sadd.s32 1, %s23
      %s33 = scalar_select %p30, %s32, %s23
      %p34 = scmp.ge.s32.totalorder %s33, 2
      %s35 = scalar_select %p34, 0, %s33
      %s36 = ssub.s32 %s23, %s35
      %p37 = scmp.eq.s32.totalorder %s36, 0
      %s39 = sadd.s32 %s38, 1
      %s40 = scalar_select %p37, %s38, %s39
      %p43 = pneg %p37
      %p44 = scmp.eq.s32.totalorder %s16, 3
      %p45 = por %p43, %p44
      %p46 = scmp.ne.s32.totalorder %s38, %s41
      %p47 = scmp.eq.s32.totalorder %s16, 0
      %p48 = por %p46, %p47
      %p49 = scmp.ne.s32.totalorder %s38, %s41
      %p50 = scmp.eq.s32.totalorder %s21, 3
      %p51 = por %p49, %p50
      %p52 = scmp.ne.s32.totalorder %s41, %s42
      %p53 = scmp.eq.s32.totalorder %s21, 0
      %p54 = por %p52, %p53
      %p55 = scmp.ne.s32.totalorder %s41, %s42
      %p56 = scmp.eq.s32.totalorder %s22, 3
      %p57 = por %p55, %p56
      %p59 = scmp.ne.s32.totalorder %s42, %s58
      %p60 = scmp.eq.s32.totalorder %s22, 0
      %p61 = por %p59, %p60
      %s63 = sadd.s32 %s62, 1
      %p66 = scmp.eq.s32.totalorder %s16, 3
      %p67 = scmp.ne.s32.totalorder %s62, %s64
      %p68 = scmp.eq.s32.totalorder %s16, 0
      %p69 = por %p67, %p68
      %p70 = scmp.ne.s32.totalorder %s62, %s64
      %p71 = scmp.eq.s32.totalorder %s21, 3
      %p72 = por %p70, %p71
      %p73 = scmp.ne.s32.totalorder %s64, %s65
      %p74 = scmp.eq.s32.totalorder %s21, 0
      %p75 = por %p73, %p74
      %p76 = scmp.ne.s32.totalorder %s64, %s65
      %p77 = scmp.eq.s32.totalorder %s22, 3
      %p78 = por %p76, %p77
      %p80 = scmp.ne.s32.totalorder %s65, %s79
      %p81 = scmp.eq.s32.totalorder %s22, 0
      %p82 = por %p80, %p81
      %s84 = sadd.s32 %s83, 1
      %p87 = scmp.eq.s32.totalorder %s16, 3
      %p88 = scmp.ne.s32.totalorder %s83, %s85
      %p89 = scmp.eq.s32.totalorder %s16, 0
      %p90 = por %p88, %p89
      %p91 = scmp.ne.s32.totalorder %s83, %s85
      %p92 = scmp.eq.s32.totalorder %s21, 3
      %p93 = por %p91, %p92
      %p94 = scmp.ne.s32.totalorder %s85, %s86
      %p95 = scmp.eq.s32.totalorder %s21, 0
      %p96 = por %p94, %p95
      %p97 = scmp.ne.s32.totalorder %s85, %s86
      %p98 = scmp.eq.s32.totalorder %s22, 3
      %p99 = por %p97, %p98
      %p101 = scmp.ne.s32.totalorder %s86, %s100
      %p102 = scmp.eq.s32.totalorder %s22, 0
      %p103 = por %p101, %p102
      %s105 = sadd.s32 %s104, 1
      %p108 = scmp.eq.s32.totalorder %s16, 3
      %p109 = scmp.ne.s32.totalorder %s104, %s106
      %p110 = scmp.eq.s32.totalorder %s16, 0
      %p111 = por %p109, %p110
      %p112 = scmp.ne.s32.totalorder %s104, %s106
      %p113 = scmp.eq.s32.totalorder %s21, 3
      %p114 = por %p112, %p113
      %p115 = scmp.ne.s32.totalorder %s106, %s107
      %p116 = scmp.eq.s32.totalorder %s21, 0
      %p117 = por %p115, %p116
      %p118 = scmp.ne.s32.totalorder %s106, %s107
      %p119 = scmp.eq.s32.totalorder %s22, 3
      %p120 = por %p118, %p119
      %p122 = scmp.ne.s32.totalorder %s107, %s121
      %p123 = scmp.eq.s32.totalorder %s22, 0
      %p124 = por %p122, %p123
      %s126 = sadd.s32 %s125, 1
      %p129 = scmp.eq.s32.totalorder %s16, 3
      %p130 = scmp.ne.s32.totalorder %s125, %s127
      %p131 = scmp.eq.s32.totalorder %s16, 0
      %p132 = por %p130, %p131
      %p133 = scmp.ne.s32.totalorder %s125, %s127
      %p134 = scmp.eq.s32.totalorder %s21, 3
      %p135 = por %p133, %p134
      %p136 = scmp.ne.s32.totalorder %s127, %s128
      %p137 = scmp.eq.s32.totalorder %s21, 0
      %p138 = por %p136, %p137
      %p139 = scmp.ne.s32.totalorder %s127, %s128
      %p140 = scmp.eq.s32.totalorder %s22, 3
      %p141 = por %p139, %p140
      %p143 = scmp.ne.s32.totalorder %s128, %s142
      %p144 = scmp.eq.s32.totalorder %s22, 0
      %p145 = por %p143, %p144
      %s147 = sadd.s32 %s146, 1
      %p150 = scmp.eq.s32.totalorder %s16, 3
      %p151 = scmp.ne.s32.totalorder %s146, %s148
      %p152 = scmp.eq.s32.totalorder %s16, 0
      %p153 = por %p151, %p152
      %p154 = scmp.ne.s32.totalorder %s146, %s148
      %p155 = scmp.eq.s32.totalorder %s21, 3
      %p156 = por %p154, %p155
      %p157 = scmp.ne.s32.totalorder %s148, %s149
      %p158 = scmp.eq.s32.totalorder %s21, 0
      %p159 = por %p157, %p158
      %p160 = scmp.ne.s32.totalorder %s148, %s149
      %p161 = scmp.eq.s32.totalorder %s22, 3
      %p162 = por %p160, %p161
      %p164 = scmp.ne.s32.totalorder %s149, %s163
      %p165 = scmp.eq.s32.totalorder %s22, 0
      %p166 = por %p164, %p165
      %s168 = sadd.s32 %s167, 1
      %p171 = scmp.eq.s32.totalorder %s16, 3
      %p172 = scmp.ne.s32.totalorder %s167, %s169
      %p173 = scmp.eq.s32.totalorder %s16, 0
      %p174 = por %p172, %p173
      %p175 = scmp.ne.s32.totalorder %s167, %s169
      %p176 = scmp.eq.s32.totalorder %s21, 3
      %p177 = por %p175, %p176
      %p178 = scmp.ne.s32.totalorder %s169, %s170
      %p179 = scmp.eq.s32.totalorder %s21, 0
      %p180 = por %p178, %p179
      %p181 = scmp.ne.s32.totalorder %s169, %s170
      %p182 = scmp.eq.s32.totalorder %s22, 3
      %p183 = por %p181, %p182
      %p185 = scmp.ne.s32.totalorder %s170, %s184
      %p186 = scmp.eq.s32.totalorder %s22, 0
      %p187 = por %p185, %p186
      %s188 = ssub.s32 %s23, %s35
      %s189 = ssub.s32 %s24, %s31
      %s190 = sor.u32 %s188, %s189
      %p191 = scmp.eq.s32.totalorder %s190, 0
      %s193 = sadd.s32 %s192, 1
      %s194 = scalar_select %p191, %s192, %s193
      %p197 = pneg %p191
      %p198 = scmp.eq.s32.totalorder %s16, 3
      %p199 = por %p197, %p198
      %p200 = scmp.ne.s32.totalorder %s192, %s195
      %p201 = scmp.eq.s32.totalorder %s16, 0
      %p202 = por %p200, %p201
      %p203 = scmp.ne.s32.totalorder %s192, %s195
      %p204 = scmp.eq.s32.totalorder %s21, 3
      %p205 = por %p203, %p204
      %p206 = scmp.ne.s32.totalorder %s195, %s196
      %p207 = scmp.eq.s32.totalorder %s21, 0
      %p208 = por %p206, %p207
      %p209 = scmp.ne.s32.totalorder %s195, %s196
      %p210 = scmp.eq.s32.totalorder %s22, 3
      %p211 = por %p209, %p210
      %p213 = scmp.ne.s32.totalorder %s196, %s212
      %p214 = scmp.eq.s32.totalorder %s22, 0
      %p215 = por %p213, %p214
      %p216 = scmp.le.s32.totalorder 1, %s16
      %p217 = scmp.lt.s32.totalorder %s16, 5
      %p218 = pnand %p216, %p217
      %p219 = pneg %p218
      // Predicated region
      $region9: #{tpu_custom_call.1} parent=5 // pred_check
        _
      $region10: #{tpu_custom_call.1} parent=5 // pred_check_branch
        %221 = sbr.rel (%p218) target = $region12
      $region11: #{tpu_custom_call.1} parent=5 // pred_region
        %s222 = ssub.s32 %s16, 1
        // Predicated region
        $region13: #{tpu_custom_call.1} parent=11 // pred_check
          %p223 = pneg %p75
        $region14: #{tpu_custom_call.1} parent=11 // pred_check_branch
          %225 = sbr.rel (%p223) target = $region16
        $region15: #{tpu_custom_call.1} parent=11 // pred_region
          _
        $region16: #{tpu_custom_call.1} parent=11 // pred_fallthru
          _
        // Predicated region
        $region17: #{tpu_custom_call.1} parent=11 // pred_check
          %p226 = pneg %p96
        $region18: #{tpu_custom_call.1} parent=11 // pred_check_branch
          %228 = sbr.rel (%p226) target = $region20
        $region19: #{tpu_custom_call.1} parent=11 // pred_region
          _
        $region20: #{tpu_custom_call.1} parent=11 // pred_fallthru
          _
        // Predicated region
        $region21: #{tpu_custom_call.1} parent=11 // pred_check
          %p229 = pneg %p117
        $region22: #{tpu_custom_call.1} parent=11 // pred_check_branch
          %231 = sbr.rel (%p229) target = $region24
        $region23: #{tpu_custom_call.1} parent=11 // pred_region
          _
        $region24: #{tpu_custom_call.1} parent=11 // pred_fallthru
          _
        // Predicated region
        $region25: #{tpu_custom_call.1} parent=11 // pred_check
          %p232 = pneg %p138
        $region26: #{tpu_custom_call.1} parent=11 // pred_check_branch
          %234 = sbr.rel (%p232) target = $region28
        $region27: #{tpu_custom_call.1} parent=11 // pred_region
          _
        $region28: #{tpu_custom_call.1} parent=11 // pred_fallthru
          _
        // Predicated region
        $region29: #{tpu_custom_call.1} parent=11 // pred_check
          %p235 = pneg %p159
        $region30: #{tpu_custom_call.1} parent=11 // pred_check_branch
          %237 = sbr.rel (%p235) target = $region32
        $region31: #{tpu_custom_call.1} parent=11 // pred_region
          _
        $region32: #{tpu_custom_call.1} parent=11 // pred_fallthru
          _
        // Predicated region
        $region33: #{tpu_custom_call.1} parent=11 // pred_check
          %p238 = pneg %p180
        $region34: #{tpu_custom_call.1} parent=11 // pred_check_branch
          %240 = sbr.rel (%p238) target = $region36
        $region35: #{tpu_custom_call.1} parent=11 // pred_region
          _
        $region36: #{tpu_custom_call.1} parent=11 // pred_fallthru
          _
      $region12: #{tpu_custom_call.1} parent=5 // pred_fallthru
        _
      %p241 = scmp.lt.s32.totalorder %s16, 4
      // Predicated region
      $region37: #{tpu_custom_call.1} parent=5 // pred_check
        %p242 = pneg %p241
      $region38: #{tpu_custom_call.1} parent=5 // pred_check_branch
        %244 = sbr.rel (%p242) target = $region40
      $region39: #{tpu_custom_call.1} parent=5 // pred_region
        // Predicated region
        $region41: #{tpu_custom_call.1} parent=39 // pred_check
          %p245 = pneg %p48
        $region42: #{tpu_custom_call.1} parent=39 // pred_check_branch
          %247 = sbr.rel (%p245) target = $region44
        $region43: #{tpu_custom_call.1} parent=39 // pred_region
          %p248 = scmp.lt.s32.totalorder %s23, 1
          %s249 = scalar_select %p248, %s23, 1
          %s250 = smul.addr %s249, 32
          %s251 = smul.addr %s250, 8
          %s252 = scalar_lea.vmem %s0, %s251
        $region44: #{tpu_custom_call.1} parent=39 // pred_fallthru
          _
      $region40: #{tpu_custom_call.1} parent=5 // pred_fallthru
        _
      %p253 = scmp.le.s32.totalorder 1, %s16
      %p254 = scmp.lt.s32.totalorder %s16, 5
      %p255 = pnand %p253, %p254
      %p256 = pneg %p255
      // Predicated region
      $region45: #{tpu_custom_call.1} parent=5 // pred_check
        _
      $region46: #{tpu_custom_call.1} parent=5 // pred_check_branch
        %258 = sbr.rel (%p255) target = $region48
      $region47: #{tpu_custom_call.1} parent=5 // pred_region
        %s259 = ssub.s32 %s16, 1
        %p260 = scmp.lt.s32.totalorder %s25, 1
        %s261 = scalar_select %p260, %s25, 1
        %s262 = smul.addr %s261, 32
        %s263 = smul.addr %s262, 8
        %s264 = scalar_lea.vmem %s0, %s263
        %p265 = pneg %p54
        %p266 = pneg %p51
        %p267 = pneg %p75
        %p268 = pneg %p72
        %p269 = pneg %p96
        %p270 = pneg %p93
        %p271 = pneg %p117
        %p272 = pneg %p114
        %p273 = pneg %p138
        %p274 = pneg %p135
        %p275 = pneg %p159
        %p276 = pneg %p156
        %p277 = pneg %p180
        %p278 = pneg %p177
        %p279 = pneg %p208
        %p280 = pneg %p205
        %s281 = sand.u32 %s195, 1
        %s282 = scalar_lea.sflag [#allocation5], %s281
        %s283 = sand.u32 %s195, 1
        %s284 = smul.addr %s283, 128
        %s285 = scalar_lea.vmem [#allocation4], %s284
        %p286 = scmp.lt.s32.totalorder %s25, 1
        %s287 = scalar_select %p286, %s25, 1
        %s288 = smul.addr %s287, 32
        %s289 = smul.addr %s288, 8
        %s290 = scalar_lea.vmem %s0, %s289
        %s291 = smul.u32 16, %s26
        %s293 = smul.u32 %s26, 8
        %p294 = scmp.eq.s32.totalorder %s26, 0
        // Predicated region
        $region49: #{tpu_custom_call.1} parent=47 // pred_check
          %p295 = pneg %p294
        $region50: #{tpu_custom_call.1} parent=47 // pred_check_branch
          %297 = sbr.rel (%p295) target = $region52
        $region51: #{tpu_custom_call.1} parent=47 // pred_region
          %vm298 = vcmask 27648
          %299 = vst.msk [vmem:[#allocation2] sm:$0xf] %vm298, 0
          %300 = vst.msk [vmem:[#allocation2 + $0x4] sm:$0xf] %vm298, 0
          %vm301 = vcmask 24576
          %302 = vst.msk [vmem:[#allocation2 + $0x8] sm:$0x1] %vm301, 0
          %303 = vst.msk [vmem:[#allocation2 + $0xc] sm:$0xf] %vm298, 0
          %304 = vst.msk [vmem:[#allocation2 + $0x10] sm:$0xf] %vm298, 0
          %305 = vst.msk [vmem:[#allocation2 + $0x14] sm:$0x1] %vm301, 0
          %s306 = scalar_lea.vmem [#allocation2], 216
          %307 = vst.msk [vmem:[%s306] sm:$0xf] %vm298, 0
          %308 = vst.msk [vmem:[%s306 + $0x4] sm:$0xf] %vm298, 0
          %309 = vst.msk [vmem:[%s306 + $0x8] sm:$0x1] %vm301, 0
          %310 = vst.msk [vmem:[%s306 + $0xc] sm:$0xf] %vm298, 0
          %311 = vst.msk [vmem:[%s306 + $0x10] sm:$0xf] %vm298, 0
          %312 = vst.msk [vmem:[%s306 + $0x14] sm:$0x1] %vm301, 0
          %vm313 = vcmask 24576
          %vm314 = vsmask.f32 256
          %vm315 = vmand %vm313, %vm314
          %v316 = vld [vmem:[#allocation2] sm:$0x1]
          %v317 = vsel %vm315, 0, %v316
          %318 = vst [vmem:[#allocation2] sm:$0x1] %v317
          %v319 = vld [vmem:[#allocation2 + $0xc] sm:$0x1]
          %v320 = vsel %vm315, 0, %v319
          %321 = vst [vmem:[#allocation2 + $0xc] sm:$0x1] %v320
          %v322 = vld [vmem:[#allocation2 + $0x18] sm:$0x1]
          %v323 = vsel %vm315, 0, %v322
          %324 = vst [vmem:[#allocation2 + $0x18] sm:$0x1] %v323
          %v325 = vld [vmem:[#allocation2 + $0x24] sm:$0x1]
          %v326 = vsel %vm315, 0, %v325
          %327 = vst [vmem:[#allocation2 + $0x24] sm:$0x1] %v326
          %v328 = vld [vmem:[#allocation2 + $0x30] sm:$0x1]
          %v329 = vsel %vm315, 0, %v328
          %330 = vst [vmem:[#allocation2 + $0x30] sm:$0x1] %v329
          %v331 = vld [vmem:[#allocation2 + $0x3c] sm:$0x1]
          %v332 = vsel %vm315, 0, %v331
          %333 = vst [vmem:[#allocation2 + $0x3c] sm:$0x1] %v332
          %v334 = vld [vmem:[#allocation2 + $0x48] sm:$0x1]
          %v335 = vsel %vm315, 0, %v334
          %336 = vst [vmem:[#allocation2 + $0x48] sm:$0x1] %v335
          %v337 = vld [vmem:[#allocation2 + $0x54] sm:$0x1]
          %v338 = vsel %vm315, 0, %v337
          %339 = vst [vmem:[#allocation2 + $0x54] sm:$0x1] %v338
          %v340 = vld [vmem:[#allocation2 + $0x60] sm:$0x1]
          %v341 = vsel %vm315, 0, %v340
          %342 = vst [vmem:[#allocation2 + $0x60] sm:$0x1] %v341
          %v343 = vld [vmem:[#allocation2 + $0x6c] sm:$0x1]
          %v344 = vsel %vm315, 0, %v343
          %345 = vst [vmem:[#allocation2 + $0x6c] sm:$0x1] %v344
          %v346 = vld [vmem:[#allocation2 + $0x78] sm:$0x1]
          %v347 = vsel %vm315, 0, %v346
          %348 = vst [vmem:[#allocation2 + $0x78] sm:$0x1] %v347
          %v349 = vld [vmem:[#allocation2 + $0x84] sm:$0x1]
          %v350 = vsel %vm315, 0, %v349
          %351 = vst [vmem:[#allocation2 + $0x84] sm:$0x1] %v350
          %v352 = vld [vmem:[#allocation2 + $0x90] sm:$0x1]
          %v353 = vsel %vm315, 0, %v352
          %354 = vst [vmem:[#allocation2 + $0x90] sm:$0x1] %v353
          %v355 = vld [vmem:[#allocation2 + $0x9c] sm:$0x1]
          %v356 = vsel %vm315, 0, %v355
          %357 = vst [vmem:[#allocation2 + $0x9c] sm:$0x1] %v356
          %v358 = vld [vmem:[#allocation2 + $0xa8] sm:$0x1]
          %v359 = vsel %vm315, 0, %v358
          %360 = vst [vmem:[#allocation2 + $0xa8] sm:$0x1] %v359
          %v361 = vld [vmem:[#allocation2 + $0xb4] sm:$0x1]
          %v362 = vsel %vm315, 0, %v361
          %363 = vst [vmem:[#allocation2 + $0xb4] sm:$0x1] %v362
          %v364 = vld [vmem:[#allocation2 + $0xc0] sm:$0x1]
          %v365 = vsel %vm315, 0, %v364
          %366 = vst [vmem:[#allocation2 + $0xc0] sm:$0x1] %v365
          %v367 = vld [vmem:[#allocation2 + $0xcc] sm:$0x1]
          %v368 = vsel %vm315, 0, %v367
          %369 = vst [vmem:[#allocation2 + $0xcc] sm:$0x1] %v368
          %v370 = vld [vmem:[#allocation2 + $0xd8] sm:$0x1]
          %v371 = vsel %vm315, 0, %v370
          %372 = vst [vmem:[#allocation2 + $0xd8] sm:$0x1] %v371
          %v373 = vld [vmem:[#allocation2 + $0xe4] sm:$0x1]
          %v374 = vsel %vm315, 0, %v373
          %375 = vst [vmem:[#allocation2 + $0xe4] sm:$0x1] %v374
          %vm376 = vsmask.f32 7938
          %vm377 = vmand %vm313, %vm376
          %v378 = vld [vmem:[#allocation2 + $0x8] sm:$0x1]
          %v379 = vsel %vm377, 0, %v378
          %380 = vst [vmem:[#allocation2 + $0x8] sm:$0x1] %v379
          %v381 = vld [vmem:[#allocation2 + $0x14] sm:$0x1]
          %v382 = vsel %vm377, 0, %v381
          %383 = vst [vmem:[#allocation2 + $0x14] sm:$0x1] %v382
          %v384 = vld [vmem:[#allocation2 + $0x20] sm:$0x1]
          %v385 = vsel %vm377, 0, %v384
          %386 = vst [vmem:[#allocation2 + $0x20] sm:$0x1] %v385
          %v387 = vld [vmem:[#allocation2 + $0x2c] sm:$0x1]
          %v388 = vsel %vm377, 0, %v387
          %389 = vst [vmem:[#allocation2 + $0x2c] sm:$0x1] %v388
          %v390 = vld [vmem:[#allocation2 + $0x38] sm:$0x1]
          %v391 = vsel %vm377, 0, %v390
          %392 = vst [vmem:[#allocation2 + $0x38] sm:$0x1] %v391
          %v393 = vld [vmem:[#allocation2 + $0x44] sm:$0x1]
          %v394 = vsel %vm377, 0, %v393
          %395 = vst [vmem:[#allocation2 + $0x44] sm:$0x1] %v394
          %v396 = vld [vmem:[#allocation2 + $0x50] sm:$0x1]
          %v397 = vsel %vm377, 0, %v396
          %398 = vst [vmem:[#allocation2 + $0x50] sm:$0x1] %v397
          %v399 = vld [vmem:[#allocation2 + $0x5c] sm:$0x1]
          %v400 = vsel %vm377, 0, %v399
          %401 = vst [vmem:[#allocation2 + $0x5c] sm:$0x1] %v400
          %v402 = vld [vmem:[#allocation2 + $0x68] sm:$0x1]
          %v403 = vsel %vm377, 0, %v402
          %404 = vst [vmem:[#allocation2 + $0x68] sm:$0x1] %v403
          %v405 = vld [vmem:[#allocation2 + $0x74] sm:$0x1]
          %v406 = vsel %vm377, 0, %v405
          %407 = vst [vmem:[#allocation2 + $0x74] sm:$0x1] %v406
          %v408 = vld [vmem:[#allocation2 + $0x80] sm:$0x1]
          %v409 = vsel %vm377, 0, %v408
          %410 = vst [vmem:[#allocation2 + $0x80] sm:$0x1] %v409
          %v411 = vld [vmem:[#allocation2 + $0x8c] sm:$0x1]
          %v412 = vsel %vm377, 0, %v411
          %413 = vst [vmem:[#allocation2 + $0x8c] sm:$0x1] %v412
          %v414 = vld [vmem:[#allocation2 + $0x98] sm:$0x1]
          %v415 = vsel %vm377, 0, %v414
          %416 = vst [vmem:[#allocation2 + $0x98] sm:$0x1] %v415
          %v417 = vld [vmem:[#allocation2 + $0xa4] sm:$0x1]
          %v418 = vsel %vm377, 0, %v417
          %419 = vst [vmem:[#allocation2 + $0xa4] sm:$0x1] %v418
          %v420 = vld [vmem:[#allocation2 + $0xb0] sm:$0x1]
          %v421 = vsel %vm377, 0, %v420
          %422 = vst [vmem:[#allocation2 + $0xb0] sm:$0x1] %v421
          %v423 = vld [vmem:[#allocation2 + $0xbc] sm:$0x1]
          %v424 = vsel %vm377, 0, %v423
          %425 = vst [vmem:[#allocation2 + $0xbc] sm:$0x1] %v424
          %v426 = vld [vmem:[#allocation2 + $0xc8] sm:$0x1]
          %v427 = vsel %vm377, 0, %v426
          %428 = vst [vmem:[#allocation2 + $0xc8] sm:$0x1] %v427
          %v429 = vld [vmem:[#allocation2 + $0xd4] sm:$0x1]
          %v430 = vsel %vm377, 0, %v429
          %431 = vst [vmem:[#allocation2 + $0xd4] sm:$0x1] %v430
          %v432 = vld [vmem:[#allocation2 + $0xe0] sm:$0x1]
          %v433 = vsel %vm377, 0, %v432
          %434 = vst [vmem:[#allocation2 + $0xe0] sm:$0x1] %v433
          %v435 = vld [vmem:[#allocation2 + $0xec] sm:$0x1]
          %v436 = vsel %vm377, 0, %v435
          %437 = vst [vmem:[#allocation2 + $0xec] sm:$0x1] %v436
          %v438 = vld [vmem:[%s290] sm:$0xff]
          %v439 = vld [vmem:[%s290 + $0x8] sm:$0xff]
          %v440 = vld [vmem:[%s290 + $0x10] sm:$0xff]
          %v441 = vld [vmem:[%s290 + $0x18] sm:$0xff]
          %v442 = vld [vmem:[%s290 + $0x20] sm:$0xff]
          %v443 = vld [vmem:[%s290 + $0x28] sm:$0xff]
          %v444 = vld [vmem:[%s290 + $0x30] sm:$0xff]
          %v445 = vld [vmem:[%s290 + $0x38] sm:$0xff]
          %v446 = vld [vmem:[%s290 + $0x40] sm:$0xff]
          %v447 = vld [vmem:[%s290 + $0x48] sm:$0xff]
          %v448 = vld [vmem:[%s290 + $0x50] sm:$0xff]
          %v449 = vld [vmem:[%s290 + $0x58] sm:$0xff]
          %v450 = vld [vmem:[%s290 + $0x60] sm:$0xff]
          %v451 = vld [vmem:[%s290 + $0x68] sm:$0xff]
          %v452 = vld [vmem:[%s290 + $0x70] sm:$0xff]
          %v453 = vld [vmem:[%s290 + $0x78] sm:$0xff]
          %v454 = vld [vmem:[%s290 + $0x80] sm:$0xff]
          %v455 = vld [vmem:[%s290 + $0x88] sm:$0xff]
          %v456 = vld [vmem:[%s290 + $0x90] sm:$0xff]
          %v457 = vld [vmem:[%s290 + $0x98] sm:$0xff]
          %v458 = vld [vmem:[%s290 + $0xa0] sm:$0xff]
          %v459 = vld [vmem:[%s290 + $0xa8] sm:$0xff]
          %v460 = vld [vmem:[%s290 + $0xb0] sm:$0xff]
          %v461 = vld [vmem:[%s290 + $0xb8] sm:$0xff]
          %v462 = vld [vmem:[%s290 + $0xc0] sm:$0xff]
          %v463 = vld [vmem:[%s290 + $0xc8] sm:$0xff]
          %v464 = vld [vmem:[%s290 + $0xd0] sm:$0xff]
          %v465 = vld [vmem:[%s290 + $0xd8] sm:$0xff]
          %v466 = vld [vmem:[%s290 + $0xe0] sm:$0xff]
          %v467 = vld [vmem:[%s290 + $0xe8] sm:$0xff]
          %v468 = vld [vmem:[%s290 + $0xf0] sm:$0xff]
          %v469 = vld [vmem:[%s290 + $0xf8] sm:$0xff]
          %v470 = vpack.c.bf16 %v439, %v438
          %v471 = vpack.c.bf16 %v441, %v440
          %v472 = vpack.c.bf16 %v443, %v442
          %v473 = vpack.c.bf16 %v445, %v444
          %v474 = vpack.c.bf16 %v447, %v446
          %v475 = vpack.c.bf16 %v449, %v448
          %v476 = vpack.c.bf16 %v451, %v450
          %v477 = vpack.c.bf16 %v453, %v452
          %v478 = vpack.c.bf16 %v455, %v454
          %v479 = vpack.c.bf16 %v457, %v456
          %v480 = vpack.c.bf16 %v459, %v458
          %v481 = vpack.c.bf16 %v461, %v460
          %v482 = vpack.c.bf16 %v463, %v462
          %v483 = vpack.c.bf16 %v465, %v464
          %v484 = vpack.c.bf16 %v467, %v466
          %v485 = vpack.c.bf16 %v469, %v468
          %v502 = vunpack.c.l.b16 %v470
          %v503 = vunpack.c.h.b16 %v470
          %v504 = vunpack.c.l.b16 %v471
          %v505 = vunpack.c.h.b16 %v471
          %v506 = vunpack.c.l.b16 %v472
          %v507 = vunpack.c.h.b16 %v472
          %v508 = vunpack.c.l.b16 %v473
          %v509 = vunpack.c.h.b16 %v473
          %v510 = vunpack.c.l.b16 %v474
          %v511 = vunpack.c.h.b16 %v474
          %v512 = vunpack.c.l.b16 %v475
          %v513 = vunpack.c.h.b16 %v475
          %v514 = vunpack.c.l.b16 %v476
          %v515 = vunpack.c.h.b16 %v476
          %v516 = vunpack.c.l.b16 %v477
          %v517 = vunpack.c.h.b16 %v477
          %v518 = vunpack.c.l.b16 %v478
          %v519 = vunpack.c.h.b16 %v478
          %v520 = vunpack.c.l.b16 %v479
          %v521 = vunpack.c.h.b16 %v479
          %v522 = vunpack.c.l.b16 %v480
          %v523 = vunpack.c.h.b16 %v480
          %v524 = vunpack.c.l.b16 %v481
          %v525 = vunpack.c.h.b16 %v481
          %v526 = vunpack.c.l.b16 %v482
          %v527 = vunpack.c.h.b16 %v482
          %v528 = vunpack.c.l.b16 %v483
          %v529 = vunpack.c.h.b16 %v483
          %v530 = vunpack.c.l.b16 %v484
          %v531 = vunpack.c.h.b16 %v484
          %v532 = vunpack.c.l.b16 %v485
          %v533 = vunpack.c.h.b16 %v485
          %v534 = vpack.c.b16 %v502, %v502
          %v535 = vpack.c.b16 %v503, %v503
          %v536 = vpack.c.b16 %v504, %v504
          %v537 = vpack.c.b16 %v505, %v505
          %v538 = vpack.c.b16 %v506, %v506
          %v539 = vpack.c.b16 %v507, %v507
          %v540 = vpack.c.b16 %v508, %v508
          %v541 = vpack.c.b16 %v509, %v509
          %v542 = vpack.c.b16 %v510, %v510
          %v543 = vpack.c.b16 %v511, %v511
          %v544 = vpack.c.b16 %v512, %v512
          %v545 = vpack.c.b16 %v513, %v513
          %v546 = vpack.c.b16 %v514, %v514
          %v547 = vpack.c.b16 %v515, %v515
          %v548 = vpack.c.b16 %v516, %v516
          %v549 = vpack.c.b16 %v517, %v517
          %v550 = vpack.c.b16 %v518, %v518
          %v551 = vpack.c.b16 %v519, %v519
          %v552 = vpack.c.b16 %v520, %v520
          %v553 = vpack.c.b16 %v521, %v521
          %v554 = vpack.c.b16 %v522, %v522
          %v555 = vpack.c.b16 %v523, %v523
          %v556 = vpack.c.b16 %v524, %v524
          %v557 = vpack.c.b16 %v525, %v525
          %v558 = vpack.c.b16 %v526, %v526
          %v559 = vpack.c.b16 %v527, %v527
          %v560 = vpack.c.b16 %v528, %v528
          %v561 = vpack.c.b16 %v529, %v529
          %v562 = vpack.c.b16 %v530, %v530
          %v563 = vpack.c.b16 %v531, %v531
          %v564 = vpack.c.b16 %v532, %v532
          %v565 = vpack.c.b16 %v533, %v533
          %vm566 = vsmask.f32 4368
          %vm567 = vmor %vm314, %vm566
          %v569 = vshrl.u32 %v534, 16
          %v571 = vrot.slane %v569, 7
          %v572 = vshll.u32 %v534, 16
          %v574 = vor.u32 %v571, %v572
          %v575 = vrot.slane %v571, 4
          %v577 = vshrl.u32 %v535, 16
          %v579 = vrot.slane %v577, 7
          %v580 = vshll.u32 %v535, 16
          %v582 = vor.u32 %v579, %v580
          %v583 = vsel %vm567, %v575, %v582
          %v584 = vrot.slane %v579, 4
          %v586 = vshrl.u32 %v536, 16
          %v588 = vrot.slane %v586, 7
          %v589 = vshll.u32 %v536, 16
          %v591 = vor.u32 %v588, %v589
          %v592 = vrot.slane %v588, 4
          %v594 = vshrl.u32 %v537, 16
          %v596 = vrot.slane %v594, 7
          %v597 = vshll.u32 %v537, 16
          %v599 = vor.u32 %v596, %v597
          %v600 = vsel %vm567, %v592, %v599
          %v601 = vrot.slane %v596, 4
          %v603 = vshrl.u32 %v538, 16
          %v605 = vrot.slane %v603, 7
          %v606 = vshll.u32 %v538, 16
          %v608 = vor.u32 %v605, %v606
          %v609 = vrot.slane %v605, 4
          %v611 = vshrl.u32 %v539, 16
          %v613 = vrot.slane %v611, 7
          %v614 = vshll.u32 %v539, 16
          %v616 = vor.u32 %v613, %v614
          %v617 = vsel %vm567, %v609, %v616
          %v618 = vrot.slane %v613, 4
          %v620 = vshrl.u32 %v540, 16
          %v622 = vrot.slane %v620, 7
          %v623 = vshll.u32 %v540, 16
          %v625 = vor.u32 %v622, %v623
          %v626 = vrot.slane %v622, 4
          %v628 = vshrl.u32 %v541, 16
          %v630 = vrot.slane %v628, 7
          %v631 = vshll.u32 %v541, 16
          %v633 = vor.u32 %v630, %v631
          %v634 = vsel %vm567, %v626, %v633
          %v635 = vrot.slane %v630, 4
          %v637 = vshrl.u32 %v542, 16
          %v639 = vrot.slane %v637, 7
          %v640 = vshll.u32 %v542, 16
          %v642 = vor.u32 %v639, %v640
          %v643 = vrot.slane %v639, 4
          %v645 = vshrl.u32 %v543, 16
          %v647 = vrot.slane %v645, 7
          %v648 = vshll.u32 %v543, 16
          %v650 = vor.u32 %v647, %v648
          %v651 = vsel %vm567, %v643, %v650
          %v652 = vrot.slane %v647, 4
          %v654 = vshrl.u32 %v544, 16
          %v656 = vrot.slane %v654, 7
          %v657 = vshll.u32 %v544, 16
          %v659 = vor.u32 %v656, %v657
          %v660 = vrot.slane %v656, 4
          %v662 = vshrl.u32 %v545, 16
          %v664 = vrot.slane %v662, 7
          %v665 = vshll.u32 %v545, 16
          %v667 = vor.u32 %v664, %v665
          %v668 = vsel %vm567, %v660, %v667
          %v669 = vrot.slane %v664, 4
          %v671 = vshrl.u32 %v546, 16
          %v673 = vrot.slane %v671, 7
          %v674 = vshll.u32 %v546, 16
          %v676 = vor.u32 %v673, %v674
          %v677 = vrot.slane %v673, 4
          %v679 = vshrl.u32 %v547, 16
          %v681 = vrot.slane %v679, 7
          %v682 = vshll.u32 %v547, 16
          %v684 = vor.u32 %v681, %v682
          %v685 = vsel %vm567, %v677, %v684
          %v686 = vrot.slane %v681, 4
          %v688 = vshrl.u32 %v548, 16
          %v690 = vrot.slane %v688, 7
          %v691 = vshll.u32 %v548, 16
          %v693 = vor.u32 %v690, %v691
          %v694 = vrot.slane %v690, 4
          %v696 = vshrl.u32 %v549, 16
          %v698 = vrot.slane %v696, 7
          %v699 = vshll.u32 %v549, 16
          %v701 = vor.u32 %v698, %v699
          %v702 = vsel %vm567, %v694, %v701
          %v703 = vrot.slane %v698, 4
          %v705 = vshrl.u32 %v550, 16
          %v707 = vrot.slane %v705, 7
          %v708 = vshll.u32 %v550, 16
          %v710 = vor.u32 %v707, %v708
          %v711 = vrot.slane %v707, 4
          %v713 = vshrl.u32 %v551, 16
          %v715 = vrot.slane %v713, 7
          %v716 = vshll.u32 %v551, 16
          %v718 = vor.u32 %v715, %v716
          %v719 = vsel %vm567, %v711, %v718
          %v720 = vrot.slane %v715, 4
          %v722 = vshrl.u32 %v552, 16
          %v724 = vrot.slane %v722, 7
          %v725 = vshll.u32 %v552, 16
          %v727 = vor.u32 %v724, %v725
          %v728 = vrot.slane %v724, 4
          %v730 = vshrl.u32 %v553, 16
          %v732 = vrot.slane %v730, 7
          %v733 = vshll.u32 %v553, 16
          %v735 = vor.u32 %v732, %v733
          %v736 = vsel %vm567, %v728, %v735
          %v737 = vrot.slane %v732, 4
          %v739 = vshrl.u32 %v554, 16
          %v741 = vrot.slane %v739, 7
          %v742 = vshll.u32 %v554, 16
          %v744 = vor.u32 %v741, %v742
          %v745 = vrot.slane %v741, 4
          %v747 = vshrl.u32 %v555, 16
          %v749 = vrot.slane %v747, 7
          %v750 = vshll.u32 %v555, 16
          %v752 = vor.u32 %v749, %v750
          %v753 = vsel %vm567, %v745, %v752
          %v754 = vrot.slane %v749, 4
          %v756 = vshrl.u32 %v556, 16
          %v758 = vrot.slane %v756, 7
          %v759 = vshll.u32 %v556, 16
          %v761 = vor.u32 %v758, %v759
          %v762 = vrot.slane %v758, 4
          %v764 = vshrl.u32 %v557, 16
          %v766 = vrot.slane %v764, 7
          %v767 = vshll.u32 %v557, 16
          %v769 = vor.u32 %v766, %v767
          %v770 = vsel %vm567, %v762, %v769
          %v771 = vrot.slane %v766, 4
          %v773 = vshrl.u32 %v558, 16
          %v775 = vrot.slane %v773, 7
          %v776 = vshll.u32 %v558, 16
          %v778 = vor.u32 %v775, %v776
          %v779 = vrot.slane %v775, 4
          %v781 = vshrl.u32 %v559, 16
          %v783 = vrot.slane %v781, 7
          %v784 = vshll.u32 %v559, 16
          %v786 = vor.u32 %v783, %v784
          %v787 = vsel %vm567, %v779, %v786
          %v788 = vrot.slane %v783, 4
          %v790 = vshrl.u32 %v560, 16
          %v792 = vrot.slane %v790, 7
          %v793 = vshll.u32 %v560, 16
          %v795 = vor.u32 %v792, %v793
          %v796 = vrot.slane %v792, 4
          %v798 = vshrl.u32 %v561, 16
          %v800 = vrot.slane %v798, 7
          %v801 = vshll.u32 %v561, 16
          %v803 = vor.u32 %v800, %v801
          %v804 = vsel %vm567, %v796, %v803
          %v805 = vrot.slane %v800, 4
          %v807 = vshrl.u32 %v562, 16
          %v809 = vrot.slane %v807, 7
          %v810 = vshll.u32 %v562, 16
          %v812 = vor.u32 %v809, %v810
          %v813 = vrot.slane %v809, 4
          %v815 = vshrl.u32 %v563, 16
          %v817 = vrot.slane %v815, 7
          %v818 = vshll.u32 %v563, 16
          %v820 = vor.u32 %v817, %v818
          %v821 = vsel %vm567, %v813, %v820
          %v822 = vrot.slane %v817, 4
          %v824 = vshrl.u32 %v564, 16
          %v826 = vrot.slane %v824, 7
          %v827 = vshll.u32 %v564, 16
          %v829 = vor.u32 %v826, %v827
          %v830 = vrot.slane %v826, 4
          %v832 = vshrl.u32 %v565, 16
          %v834 = vrot.slane %v832, 7
          %v835 = vshll.u32 %v565, 16
          %v837 = vor.u32 %v834, %v835
          %v838 = vsel %vm567, %v830, %v837
          %v839 = vrot.slane %v834, 4
          %s888 = scalar_lea.vmem [#allocation2], 24
          %vm889 = vcmask 27648
          %vm890 = vmand %vm889, %vm376
          %v891 = vld [vmem:[%s888] sm:$0xf]
          %v892 = vsel %vm890, %v574, %v891
          %893 = vst [vmem:[%s888] sm:$0xf] %v892
          %894 = vst.msk [vmem:[%s888 + $0x4] sm:$0xf] %vm298, %v583
          %v895 = vld [vmem:[%s888 + $0x8] sm:$0x1]
          %v896 = vsel %vm315, %v584, %v895
          %897 = vst [vmem:[%s888 + $0x8] sm:$0x1] %v896
          %v898 = vld [vmem:[%s888 + $0xc] sm:$0xf]
          %v899 = vsel %vm890, %v591, %v898
          %900 = vst [vmem:[%s888 + $0xc] sm:$0xf] %v899
          %901 = vst.msk [vmem:[%s888 + $0x10] sm:$0xf] %vm298, %v600
          %v902 = vld [vmem:[%s888 + $0x14] sm:$0x1]
          %v903 = vsel %vm315, %v601, %v902
          %904 = vst [vmem:[%s888 + $0x14] sm:$0x1] %v903
          %v905 = vld [vmem:[%s888 + $0x18] sm:$0xf]
          %v906 = vsel %vm890, %v608, %v905
          %907 = vst [vmem:[%s888 + $0x18] sm:$0xf] %v906
          %908 = vst.msk [vmem:[%s888 + $0x1c] sm:$0xf] %vm298, %v617
          %v909 = vld [vmem:[%s888 + $0x20] sm:$0x1]
          %v910 = vsel %vm315, %v618, %v909
          %911 = vst [vmem:[%s888 + $0x20] sm:$0x1] %v910
          %v912 = vld [vmem:[%s888 + $0x24] sm:$0xf]
          %v913 = vsel %vm890, %v625, %v912
          %914 = vst [vmem:[%s888 + $0x24] sm:$0xf] %v913
          %915 = vst.msk [vmem:[%s888 + $0x28] sm:$0xf] %vm298, %v634
          %v916 = vld [vmem:[%s888 + $0x2c] sm:$0x1]
          %v917 = vsel %vm315, %v635, %v916
          %918 = vst [vmem:[%s888 + $0x2c] sm:$0x1] %v917
          %v919 = vld [vmem:[%s888 + $0x30] sm:$0xf]
          %v920 = vsel %vm890, %v642, %v919
          %921 = vst [vmem:[%s888 + $0x30] sm:$0xf] %v920
          %922 = vst.msk [vmem:[%s888 + $0x34] sm:$0xf] %vm298, %v651
          %v923 = vld [vmem:[%s888 + $0x38] sm:$0x1]
          %v924 = vsel %vm315, %v652, %v923
          %925 = vst [vmem:[%s888 + $0x38] sm:$0x1] %v924
          %v926 = vld [vmem:[%s888 + $0x3c] sm:$0xf]
          %v927 = vsel %vm890, %v659, %v926
          %928 = vst [vmem:[%s888 + $0x3c] sm:$0xf] %v927
          %929 = vst.msk [vmem:[%s888 + $0x40] sm:$0xf] %vm298, %v668
          %v930 = vld [vmem:[%s888 + $0x44] sm:$0x1]
          %v931 = vsel %vm315, %v669, %v930
          %932 = vst [vmem:[%s888 + $0x44] sm:$0x1] %v931
          %v933 = vld [vmem:[%s888 + $0x48] sm:$0xf]
          %v934 = vsel %vm890, %v676, %v933
          %935 = vst [vmem:[%s888 + $0x48] sm:$0xf] %v934
          %936 = vst.msk [vmem:[%s888 + $0x4c] sm:$0xf] %vm298, %v685
          %v937 = vld [vmem:[%s888 + $0x50] sm:$0x1]
          %v938 = vsel %vm315, %v686, %v937
          %939 = vst [vmem:[%s888 + $0x50] sm:$0x1] %v938
          %v940 = vld [vmem:[%s888 + $0x54] sm:$0xf]
          %v941 = vsel %vm890, %v693, %v940
          %942 = vst [vmem:[%s888 + $0x54] sm:$0xf] %v941
          %943 = vst.msk [vmem:[%s888 + $0x58] sm:$0xf] %vm298, %v702
          %v944 = vld [vmem:[%s888 + $0x5c] sm:$0x1]
          %v945 = vsel %vm315, %v703, %v944
          %946 = vst [vmem:[%s888 + $0x5c] sm:$0x1] %v945
          %v947 = vld [vmem:[%s888 + $0x60] sm:$0xf]
          %v948 = vsel %vm890, %v710, %v947
          %949 = vst [vmem:[%s888 + $0x60] sm:$0xf] %v948
          %950 = vst.msk [vmem:[%s888 + $0x64] sm:$0xf] %vm298, %v719
          %v951 = vld [vmem:[%s888 + $0x68] sm:$0x1]
          %v952 = vsel %vm315, %v720, %v951
          %953 = vst [vmem:[%s888 + $0x68] sm:$0x1] %v952
          %v954 = vld [vmem:[%s888 + $0x6c] sm:$0xf]
          %v955 = vsel %vm890, %v727, %v954
          %956 = vst [vmem:[%s888 + $0x6c] sm:$0xf] %v955
          %957 = vst.msk [vmem:[%s888 + $0x70] sm:$0xf] %vm298, %v736
          %v958 = vld [vmem:[%s888 + $0x74] sm:$0x1]
          %v959 = vsel %vm315, %v737, %v958
          %960 = vst [vmem:[%s888 + $0x74] sm:$0x1] %v959
          %v961 = vld [vmem:[%s888 + $0x78] sm:$0xf]
          %v962 = vsel %vm890, %v744, %v961
          %963 = vst [vmem:[%s888 + $0x78] sm:$0xf] %v962
          %964 = vst.msk [vmem:[%s888 + $0x7c] sm:$0xf] %vm298, %v753
          %v965 = vld [vmem:[%s888 + $0x80] sm:$0x1]
          %v966 = vsel %vm315, %v754, %v965
          %967 = vst [vmem:[%s888 + $0x80] sm:$0x1] %v966
          %v968 = vld [vmem:[%s888 + $0x84] sm:$0xf]
          %v969 = vsel %vm890, %v761, %v968
          %970 = vst [vmem:[%s888 + $0x84] sm:$0xf] %v969
          %971 = vst.msk [vmem:[%s888 + $0x88] sm:$0xf] %vm298, %v770
          %v972 = vld [vmem:[%s888 + $0x8c] sm:$0x1]
          %v973 = vsel %vm315, %v771, %v972
          %974 = vst [vmem:[%s888 + $0x8c] sm:$0x1] %v973
          %v975 = vld [vmem:[%s888 + $0x90] sm:$0xf]
          %v976 = vsel %vm890, %v778, %v975
          %977 = vst [vmem:[%s888 + $0x90] sm:$0xf] %v976
          %978 = vst.msk [vmem:[%s888 + $0x94] sm:$0xf] %vm298, %v787
          %v979 = vld [vmem:[%s888 + $0x98] sm:$0x1]
          %v980 = vsel %vm315, %v788, %v979
          %981 = vst [vmem:[%s888 + $0x98] sm:$0x1] %v980
          %v982 = vld [vmem:[%s888 + $0x9c] sm:$0xf]
          %v983 = vsel %vm890, %v795, %v982
          %984 = vst [vmem:[%s888 + $0x9c] sm:$0xf] %v983
          %985 = vst.msk [vmem:[%s888 + $0xa0] sm:$0xf] %vm298, %v804
          %v986 = vld [vmem:[%s888 + $0xa4] sm:$0x1]
          %v987 = vsel %vm315, %v805, %v986
          %988 = vst [vmem:[%s888 + $0xa4] sm:$0x1] %v987
          %v989 = vld [vmem:[%s888 + $0xa8] sm:$0xf]
          %v990 = vsel %vm890, %v812, %v989
          %991 = vst [vmem:[%s888 + $0xa8] sm:$0xf] %v990
          %992 = vst.msk [vmem:[%s888 + $0xac] sm:$0xf] %vm298, %v821
          %v993 = vld [vmem:[%s888 + $0xb0] sm:$0x1]
          %v994 = vsel %vm315, %v822, %v993
          %995 = vst [vmem:[%s888 + $0xb0] sm:$0x1] %v994
          %v996 = vld [vmem:[%s888 + $0xb4] sm:$0xf]
          %v997 = vsel %vm890, %v829, %v996
          %998 = vst [vmem:[%s888 + $0xb4] sm:$0xf] %v997
          %999 = vst.msk [vmem:[%s888 + $0xb8] sm:$0xf] %vm298, %v838
          %v1000 = vld [vmem:[%s888 + $0xbc] sm:$0x1]
          %v1001 = vsel %vm315, %v839, %v1000
          %1002 = vst [vmem:[%s888 + $0xbc] sm:$0x1] %v1001
          %vm1003 = vcmask 57344
          %vm1004 = vmand %vm1003, %vm314
          %v1005 = vld [vmem:[#allocation3] sm:$0x1]
          %v1006 = vsel %vm1004, 0, %v1005
          %1007 = vst [vmem:[#allocation3] sm:$0x1] %v1006
          %v1008 = vld [vmem:[#allocation3 + $0xc] sm:$0x1]
          %v1009 = vsel %vm1004, 0, %v1008
          %1010 = vst [vmem:[#allocation3 + $0xc] sm:$0x1] %v1009
          %v1011 = vld [vmem:[#allocation3 + $0x18] sm:$0x1]
          %v1012 = vsel %vm1004, 0, %v1011
          %1013 = vst [vmem:[#allocation3 + $0x18] sm:$0x1] %v1012
          %v1014 = vld [vmem:[#allocation3 + $0x24] sm:$0x1]
          %v1015 = vsel %vm1004, 0, %v1014
          %1016 = vst [vmem:[#allocation3 + $0x24] sm:$0x1] %v1015
          %v1017 = vld [vmem:[#allocation3 + $0x30] sm:$0x1]
          %v1018 = vsel %vm1004, 0, %v1017
          %1019 = vst [vmem:[#allocation3 + $0x30] sm:$0x1] %v1018
          %v1020 = vld [vmem:[#allocation3 + $0x3c] sm:$0x1]
          %v1021 = vsel %vm1004, 0, %v1020
          %1022 = vst [vmem:[#allocation3 + $0x3c] sm:$0x1] %v1021
          %v1023 = vld [vmem:[#allocation3 + $0x48] sm:$0x1]
          %v1024 = vsel %vm1004, 0, %v1023
          %1025 = vst [vmem:[#allocation3 + $0x48] sm:$0x1] %v1024
          %v1026 = vld [vmem:[#allocation3 + $0x54] sm:$0x1]
          %v1027 = vsel %vm1004, 0, %v1026
          %1028 = vst [vmem:[#allocation3 + $0x54] sm:$0x1] %v1027
          %v1029 = vld [vmem:[#allocation3 + $0x60] sm:$0x1]
          %v1030 = vsel %vm1004, 0, %v1029
          %1031 = vst [vmem:[#allocation3 + $0x60] sm:$0x1] %v1030
          %v1032 = vld [vmem:[#allocation3 + $0x6c] sm:$0x1]
          %v1033 = vsel %vm1004, 0, %v1032
          %1034 = vst [vmem:[#allocation3 + $0x6c] sm:$0x1] %v1033
          %vm1035 = vmand %vm1003, %vm376
          %v1036 = vld [vmem:[#allocation3 + $0x8] sm:$0x1]
          %v1037 = vsel %vm1035, 0, %v1036
          %1038 = vst [vmem:[#allocation3 + $0x8] sm:$0x1] %v1037
          %v1039 = vld [vmem:[#allocation3 + $0x14] sm:$0x1]
          %v1040 = vsel %vm1035, 0, %v1039
          %1041 = vst [vmem:[#allocation3 + $0x14] sm:$0x1] %v1040
          %v1042 = vld [vmem:[#allocation3 + $0x20] sm:$0x1]
          %v1043 = vsel %vm1035, 0, %v1042
          %1044 = vst [vmem:[#allocation3 + $0x20] sm:$0x1] %v1043
          %v1045 = vld [vmem:[#allocation3 + $0x2c] sm:$0x1]
          %v1046 = vsel %vm1035, 0, %v1045
          %1047 = vst [vmem:[#allocation3 + $0x2c] sm:$0x1] %v1046
          %v1048 = vld [vmem:[#allocation3 + $0x38] sm:$0x1]
          %v1049 = vsel %vm1035, 0, %v1048
          %1050 = vst [vmem:[#allocation3 + $0x38] sm:$0x1] %v1049
          %v1051 = vld [vmem:[#allocation3 + $0x44] sm:$0x1]
          %v1052 = vsel %vm1035, 0, %v1051
          %1053 = vst [vmem:[#allocation3 + $0x44] sm:$0x1] %v1052
          %v1054 = vld [vmem:[#allocation3 + $0x50] sm:$0x1]
          %v1055 = vsel %vm1035, 0, %v1054
          %1056 = vst [vmem:[#allocation3 + $0x50] sm:$0x1] %v1055
          %v1057 = vld [vmem:[#allocation3 + $0x5c] sm:$0x1]
          %v1058 = vsel %vm1035, 0, %v1057
          %1059 = vst [vmem:[#allocation3 + $0x5c] sm:$0x1] %v1058
          %v1060 = vld [vmem:[#allocation3 + $0x68] sm:$0x1]
          %v1061 = vsel %vm1035, 0, %v1060
          %1062 = vst [vmem:[#allocation3 + $0x68] sm:$0x1] %v1061
          %v1063 = vld [vmem:[#allocation3 + $0x74] sm:$0x1]
          %v1064 = vsel %vm1035, 0, %v1063
          %1065 = vst [vmem:[#allocation3 + $0x74] sm:$0x1] %v1064
        $region52: #{tpu_custom_call.1} parent=47 // pred_fallthru
          _
        %s1066 = smul.u32 %s293, 3
        %s1067 = smul.addr %s1066, 4
        %s1068 = scalar_lea.vmem [#allocation2], %s1067
        %v1069 = vld [vmem:[%s1068] sm:$0xf]
        %v1070 = vld [vmem:[%s1068 + $0x4] sm:$0xf]
        %v1071 = vld [vmem:[%s1068 + $0x8] sm:$0x1]
        %v1072 = vld [vmem:[%s1068 + $0xc] sm:$0xf]
        %v1073 = vld [vmem:[%s1068 + $0x10] sm:$0xf]
        %v1074 = vld [vmem:[%s1068 + $0x14] sm:$0x1]
        %v1075 = vld [vmem:[%s1068 + $0x18] sm:$0xf]
        %v1076 = vld [vmem:[%s1068 + $0x1c] sm:$0xf]
        %v1077 = vld [vmem:[%s1068 + $0x20] sm:$0x1]
        %v1078 = vld [vmem:[%s1068 + $0x24] sm:$0xf]
        %v1079 = vld [vmem:[%s1068 + $0x28] sm:$0xf]
        %v1080 = vld [vmem:[%s1068 + $0x2c] sm:$0x1]
        %v1081 = vld [vmem:[%s1068 + $0x30] sm:$0xf]
        %v1082 = vld [vmem:[%s1068 + $0x34] sm:$0xf]
        %v1083 = vld [vmem:[%s1068 + $0x38] sm:$0x1]
        %v1084 = vld [vmem:[%s1068 + $0x3c] sm:$0xf]
        %v1085 = vld [vmem:[%s1068 + $0x40] sm:$0xf]
        %v1086 = vld [vmem:[%s1068 + $0x44] sm:$0x1]
        %v1087 = vld [vmem:[%s1068 + $0x48] sm:$0xf]
        %v1088 = vld [vmem:[%s1068 + $0x4c] sm:$0xf]
        %v1089 = vld [vmem:[%s1068 + $0x50] sm:$0x1]
        %v1090 = vld [vmem:[%s1068 + $0x54] sm:$0xf]
        %v1091 = vld [vmem:[%s1068 + $0x58] sm:$0xf]
        %v1092 = vld [vmem:[%s1068 + $0x5c] sm:$0x1]
        %v1093 = vld [vmem:[%s1068 + $0x60] sm:$0xf]
        %v1094 = vld [vmem:[%s1068 + $0x64] sm:$0xf]
        %v1095 = vld [vmem:[%s1068 + $0x68] sm:$0x1]
        %v1096 = vld [vmem:[%s1068 + $0x6c] sm:$0xf]
        %v1097 = vld [vmem:[%s1068 + $0x70] sm:$0xf]
        %v1098 = vld [vmem:[%s1068 + $0x74] sm:$0x1]
        %v1099 = vld [vmem:[%s1068 + $0x78] sm:$0xf]
        %v1100 = vld [vmem:[%s1068 + $0x7c] sm:$0xf]
        %v1101 = vld [vmem:[%s1068 + $0x80] sm:$0x1]
        %v1102 = vld [vmem:[%s1068 + $0x84] sm:$0xf]
        %v1103 = vld [vmem:[%s1068 + $0x88] sm:$0xf]
        %v1104 = vld [vmem:[%s1068 + $0x8c] sm:$0x1]
        %vm1105 = vsmask.f32 3328
        %vm1106 = vsmask.f32 7440
        %vm1107 = vmor %vm1105, %vm1106
        %v1109 = vshrl.u32 %v1069, 16
        %v1111 = vrot.slane %v1109, 4
        %v1112 = vshll.u32 %v1069, 16
        %v1114 = vrot.slane %v1112, 5
        %v1115 = vor.u32 %v1111, %v1114
        %v1116 = vrot.slane %v1115, 4
        %v1118 = vshll.u32 %v1070, 16
        %v1120 = vrot.slane %v1118, 5
        %v1121 = vsel %vm1107, %v1116, %v1120
        %v1122 = vshrl.u32 %v1070, 16
        %v1124 = vrot.slane %v1122, 4
        %v1125 = vor.u32 %v1124, %v1120
        %v1126 = vrot.slane %v1125, 4
        %v1128 = vshll.u32 %v1071, 16
        %v1130 = vrot.slane %v1128, 5
        %v1131 = vsel %vm1107, %v1126, %v1130
        %v1133 = vshrl.u32 %v1072, 16
        %v1135 = vrot.slane %v1133, 4
        %v1136 = vshll.u32 %v1072, 16
        %v1138 = vrot.slane %v1136, 5
        %v1139 = vor.u32 %v1135, %v1138
        %v1140 = vrot.slane %v1139, 4
        %v1142 = vshll.u32 %v1073, 16
        %v1144 = vrot.slane %v1142, 5
        %v1145 = vsel %vm1107, %v1140, %v1144
        %v1146 = vshrl.u32 %v1073, 16
        %v1148 = vrot.slane %v1146, 4
        %v1149 = vor.u32 %v1148, %v1144
        %v1150 = vrot.slane %v1149, 4
        %v1152 = vshll.u32 %v1074, 16
        %v1154 = vrot.slane %v1152, 5
        %v1155 = vsel %vm1107, %v1150, %v1154
        %v1157 = vshrl.u32 %v1075, 16
        %v1159 = vrot.slane %v1157, 4
        %v1160 = vshll.u32 %v1075, 16
        %v1162 = vrot.slane %v1160, 5
        %v1163 = vor.u32 %v1159, %v1162
        %v1164 = vrot.slane %v1163, 4
        %v1166 = vshll.u32 %v1076, 16
        %v1168 = vrot.slane %v1166, 5
        %v1169 = vsel %vm1107, %v1164, %v1168
        %v1170 = vshrl.u32 %v1076, 16
        %v1172 = vrot.slane %v1170, 4
        %v1173 = vor.u32 %v1172, %v1168
        %v1174 = vrot.slane %v1173, 4
        %v1176 = vshll.u32 %v1077, 16
        %v1178 = vrot.slane %v1176, 5
        %v1179 = vsel %vm1107, %v1174, %v1178
        %v1181 = vshrl.u32 %v1078, 16
        %v1183 = vrot.slane %v1181, 4
        %v1184 = vshll.u32 %v1078, 16
        %v1186 = vrot.slane %v1184, 5
        %v1187 = vor.u32 %v1183, %v1186
        %v1188 = vrot.slane %v1187, 4
        %v1190 = vshll.u32 %v1079, 16
        %v1192 = vrot.slane %v1190, 5
        %v1193 = vsel %vm1107, %v1188, %v1192
        %v1194 = vshrl.u32 %v1079, 16
        %v1196 = vrot.slane %v1194, 4
        %v1197 = vor.u32 %v1196, %v1192
        %v1198 = vrot.slane %v1197, 4
        %v1200 = vshll.u32 %v1080, 16
        %v1202 = vrot.slane %v1200, 5
        %v1203 = vsel %vm1107, %v1198, %v1202
        %v1205 = vshrl.u32 %v1081, 16
        %v1207 = vrot.slane %v1205, 4
        %v1208 = vshll.u32 %v1081, 16
        %v1210 = vrot.slane %v1208, 5
        %v1211 = vor.u32 %v1207, %v1210
        %v1212 = vrot.slane %v1211, 4
        %v1214 = vshll.u32 %v1082, 16
        %v1216 = vrot.slane %v1214, 5
        %v1217 = vsel %vm1107, %v1212, %v1216
        %v1218 = vshrl.u32 %v1082, 16
        %v1220 = vrot.slane %v1218, 4
        %v1221 = vor.u32 %v1220, %v1216
        %v1222 = vrot.slane %v1221, 4
        %v1224 = vshll.u32 %v1083, 16
        %v1226 = vrot.slane %v1224, 5
        %v1227 = vsel %vm1107, %v1222, %v1226
        %v1229 = vshrl.u32 %v1084, 16
        %v1231 = vrot.slane %v1229, 4
        %v1232 = vshll.u32 %v1084, 16
        %v1234 = vrot.slane %v1232, 5
        %v1235 = vor.u32 %v1231, %v1234
        %v1236 = vrot.slane %v1235, 4
        %v1238 = vshll.u32 %v1085, 16
        %v1240 = vrot.slane %v1238, 5
        %v1241 = vsel %vm1107, %v1236, %v1240
        %v1242 = vshrl.u32 %v1085, 16
        %v1244 = vrot.slane %v1242, 4
        %v1245 = vor.u32 %v1244, %v1240
        %v1246 = vrot.slane %v1245, 4
        %v1248 = vshll.u32 %v1086, 16
        %v1250 = vrot.slane %v1248, 5
        %v1251 = vsel %vm1107, %v1246, %v1250
        %v1253 = vshrl.u32 %v1087, 16
        %v1255 = vrot.slane %v1253, 4
        %v1256 = vshll.u32 %v1087, 16
        %v1258 = vrot.slane %v1256, 5
        %v1259 = vor.u32 %v1255, %v1258
        %v1260 = vrot.slane %v1259, 4
        %v1262 = vshll.u32 %v1088, 16
        %v1264 = vrot.slane %v1262, 5
        %v1265 = vsel %vm1107, %v1260, %v1264
        %v1266 = vshrl.u32 %v1088, 16
        %v1268 = vrot.slane %v1266, 4
        %v1269 = vor.u32 %v1268, %v1264
        %v1270 = vrot.slane %v1269, 4
        %v1272 = vshll.u32 %v1089, 16
        %v1274 = vrot.slane %v1272, 5
        %v1275 = vsel %vm1107, %v1270, %v1274
        %v1277 = vshrl.u32 %v1090, 16
        %v1279 = vrot.slane %v1277, 4
        %v1280 = vshll.u32 %v1090, 16
        %v1282 = vrot.slane %v1280, 5
        %v1283 = vor.u32 %v1279, %v1282
        %v1284 = vrot.slane %v1283, 4
        %v1286 = vshll.u32 %v1091, 16
        %v1288 = vrot.slane %v1286, 5
        %v1289 = vsel %vm1107, %v1284, %v1288
        %v1290 = vshrl.u32 %v1091, 16
        %v1292 = vrot.slane %v1290, 4
        %v1293 = vor.u32 %v1292, %v1288
        %v1294 = vrot.slane %v1293, 4
        %v1296 = vshll.u32 %v1092, 16
        %v1298 = vrot.slane %v1296, 5
        %v1299 = vsel %vm1107, %v1294, %v1298
        %v1301 = vshrl.u32 %v1093, 16
        %v1303 = vrot.slane %v1301, 4
        %v1304 = vshll.u32 %v1093, 16
        %v1306 = vrot.slane %v1304, 5
        %v1307 = vor.u32 %v1303, %v1306
        %v1308 = vrot.slane %v1307, 4
        %v1310 = vshll.u32 %v1094, 16
        %v1312 = vrot.slane %v1310, 5
        %v1313 = vsel %vm1107, %v1308, %v1312
        %v1314 = vshrl.u32 %v1094, 16
        %v1316 = vrot.slane %v1314, 4
        %v1317 = vor.u32 %v1316, %v1312
        %v1318 = vrot.slane %v1317, 4
        %v1320 = vshll.u32 %v1095, 16
        %v1322 = vrot.slane %v1320, 5
        %v1323 = vsel %vm1107, %v1318, %v1322
        %v1325 = vshrl.u32 %v1096, 16
        %v1327 = vrot.slane %v1325, 4
        %v1328 = vshll.u32 %v1096, 16
        %v1330 = vrot.slane %v1328, 5
        %v1331 = vor.u32 %v1327, %v1330
        %v1332 = vrot.slane %v1331, 4
        %v1334 = vshll.u32 %v1097, 16
        %v1336 = vrot.slane %v1334, 5
        %v1337 = vsel %vm1107, %v1332, %v1336
        %v1338 = vshrl.u32 %v1097, 16
        %v1340 = vrot.slane %v1338, 4
        %v1341 = vor.u32 %v1340, %v1336
        %v1342 = vrot.slane %v1341, 4
        %v1344 = vshll.u32 %v1098, 16
        %v1346 = vrot.slane %v1344, 5
        %v1347 = vsel %vm1107, %v1342, %v1346
        %vm1378 = vcmask 1042432
        %vm1379 = vcmask 1046532
        %vm1380 = vmor %vm1378, %vm1379
        %v1381 = vrot.slane %v1069, 5
        %v1382 = vrot.slane %v1381, 4
        %v1383 = vrot.slane %v1070, 5
        %v1384 = vsel %vm1380, %v1382, %v1383
        %v1385 = vrot.slane %v1383, 4
        %v1386 = vrot.slane %v1071, 5
        %v1387 = vsel %vm1380, %v1385, %v1386
        %v1388 = vrot.slane %v1072, 5
        %v1389 = vrot.slane %v1388, 4
        %v1390 = vrot.slane %v1073, 5
        %v1391 = vsel %vm1380, %v1389, %v1390
        %v1392 = vrot.slane %v1390, 4
        %v1393 = vrot.slane %v1074, 5
        %v1394 = vsel %vm1380, %v1392, %v1393
        %v1395 = vrot.slane %v1075, 5
        %v1396 = vrot.slane %v1395, 4
        %v1397 = vrot.slane %v1076, 5
        %v1398 = vsel %vm1380, %v1396, %v1397
        %v1399 = vrot.slane %v1397, 4
        %v1400 = vrot.slane %v1077, 5
        %v1401 = vsel %vm1380, %v1399, %v1400
        %v1402 = vrot.slane %v1078, 5
        %v1403 = vrot.slane %v1402, 4
        %v1404 = vrot.slane %v1079, 5
        %v1405 = vsel %vm1380, %v1403, %v1404
        %v1406 = vrot.slane %v1404, 4
        %v1407 = vrot.slane %v1080, 5
        %v1408 = vsel %vm1380, %v1406, %v1407
        %v1409 = vrot.slane %v1081, 5
        %v1410 = vrot.slane %v1409, 4
        %v1411 = vrot.slane %v1082, 5
        %v1412 = vsel %vm1380, %v1410, %v1411
        %v1413 = vrot.slane %v1411, 4
        %v1414 = vrot.slane %v1083, 5
        %v1415 = vsel %vm1380, %v1413, %v1414
        %v1416 = vrot.slane %v1084, 5
        %v1417 = vrot.slane %v1416, 4
        %v1418 = vrot.slane %v1085, 5
        %v1419 = vsel %vm1380, %v1417, %v1418
        %v1420 = vrot.slane %v1418, 4
        %v1421 = vrot.slane %v1086, 5
        %v1422 = vsel %vm1380, %v1420, %v1421
        %v1423 = vrot.slane %v1087, 5
        %v1424 = vrot.slane %v1423, 4
        %v1425 = vrot.slane %v1088, 5
        %v1426 = vsel %vm1380, %v1424, %v1425
        %v1427 = vrot.slane %v1425, 4
        %v1428 = vrot.slane %v1089, 5
        %v1429 = vsel %vm1380, %v1427, %v1428
        %v1430 = vrot.slane %v1090, 5
        %v1431 = vrot.slane %v1430, 4
        %v1432 = vrot.slane %v1091, 5
        %v1433 = vsel %vm1380, %v1431, %v1432
        %v1434 = vrot.slane %v1432, 4
        %v1435 = vrot.slane %v1092, 5
        %v1436 = vsel %vm1380, %v1434, %v1435
        %v1437 = vrot.slane %v1093, 5
        %v1438 = vrot.slane %v1437, 4
        %v1439 = vrot.slane %v1094, 5
        %v1440 = vsel %vm1380, %v1438, %v1439
        %v1441 = vrot.slane %v1439, 4
        %v1442 = vrot.slane %v1095, 5
        %v1443 = vsel %vm1380, %v1441, %v1442
        %v1444 = vrot.slane %v1096, 5
        %v1445 = vrot.slane %v1444, 4
        %v1446 = vrot.slane %v1097, 5
        %v1447 = vsel %vm1380, %v1445, %v1446
        %v1448 = vrot.slane %v1446, 4
        %v1449 = vrot.slane %v1098, 5
        %v1450 = vsel %vm1380, %v1448, %v1449
        %v1452 = vshrl.u32 %v1099, 16
        %v1454 = vrot.slane %v1452, 4
        %v1455 = vshll.u32 %v1099, 16
        %v1457 = vrot.slane %v1455, 5
        %v1458 = vor.u32 %v1454, %v1457
        %v1459 = vrot.slane %v1458, 4
        %v1461 = vshll.u32 %v1100, 16
        %v1463 = vrot.slane %v1461, 5
        %v1464 = vsel %vm1107, %v1459, %v1463
        %v1465 = vshrl.u32 %v1100, 16
        %v1467 = vrot.slane %v1465, 4
        %v1468 = vor.u32 %v1467, %v1463
        %v1469 = vrot.slane %v1468, 4
        %v1471 = vshll.u32 %v1101, 16
        %v1473 = vrot.slane %v1471, 5
        %v1474 = vsel %vm1107, %v1469, %v1473
        %v1478 = vrot.slane %v1099, 5
        %v1479 = vrot.slane %v1478, 4
        %v1480 = vrot.slane %v1100, 5
        %v1481 = vsel %vm1380, %v1479, %v1480
        %v1482 = vrot.slane %v1480, 4
        %v1483 = vrot.slane %v1101, 5
        %v1484 = vsel %vm1380, %v1482, %v1483
        %v1486 = vshrl.u32 %v1102, 16
        %v1488 = vrot.slane %v1486, 4
        %v1489 = vshll.u32 %v1102, 16
        %v1491 = vrot.slane %v1489, 5
        %v1492 = vor.u32 %v1488, %v1491
        %v1493 = vrot.slane %v1492, 4
        %v1495 = vshll.u32 %v1103, 16
        %v1497 = vrot.slane %v1495, 5
        %v1498 = vsel %vm1107, %v1493, %v1497
        %v1499 = vshrl.u32 %v1103, 16
        %v1501 = vrot.slane %v1499, 4
        %v1502 = vor.u32 %v1501, %v1497
        %v1503 = vrot.slane %v1502, 4
        %v1505 = vshll.u32 %v1104, 16
        %v1507 = vrot.slane %v1505, 5
        %v1508 = vsel %vm1107, %v1503, %v1507
        %v1512 = vrot.slane %v1102, 5
        %v1513 = vrot.slane %v1512, 4
        %v1514 = vrot.slane %v1103, 5
        %v1515 = vsel %vm1380, %v1513, %v1514
        %v1516 = vrot.slane %v1514, 4
        %v1517 = vrot.slane %v1104, 5
        %v1518 = vsel %vm1380, %v1516, %v1517
        %v1519 = vunpack.c.l.b16 %v1069
        %v1520 = vunpack.c.l.b16 %v1070
        %v1521 = vunpack.c.l.b16 %v1072
        %v1522 = vunpack.c.l.b16 %v1073
        %v1523 = vunpack.c.l.b16 %v1075
        %v1524 = vunpack.c.l.b16 %v1076
        %v1525 = vunpack.c.l.b16 %v1078
        %v1526 = vunpack.c.l.b16 %v1079
        %v1527 = vunpack.c.l.b16 %v1081
        %v1528 = vunpack.c.l.b16 %v1082
        %v1529 = vunpack.c.l.b16 %v1084
        %v1530 = vunpack.c.l.b16 %v1085
        %v1531 = vunpack.c.l.b16 %v1087
        %v1532 = vunpack.c.l.b16 %v1088
        %v1533 = vunpack.c.l.b16 %v1090
        %v1534 = vunpack.c.l.b16 %v1091
        %v1535 = vunpack.c.l.b16 %v1093
        %v1536 = vunpack.c.l.b16 %v1094
        %v1537 = vunpack.c.l.b16 %v1096
        %v1538 = vunpack.c.l.b16 %v1097
        %v1539 = vpack.c.b16 %v1520, %v1519
        %v1540 = vpack.c.b16 %v1522, %v1521
        %v1541 = vpack.c.b16 %v1524, %v1523
        %v1542 = vpack.c.b16 %v1526, %v1525
        %v1543 = vpack.c.b16 %v1528, %v1527
        %v1544 = vpack.c.b16 %v1530, %v1529
        %v1545 = vpack.c.b16 %v1532, %v1531
        %v1546 = vpack.c.b16 %v1534, %v1533
        %v1547 = vpack.c.b16 %v1536, %v1535
        %v1548 = vpack.c.b16 %v1538, %v1537
        %v1549 = vunpack.c.l.b16 %v1121
        %v1550 = vunpack.c.l.b16 %v1131
        %v1551 = vunpack.c.l.b16 %v1145
        %v1552 = vunpack.c.l.b16 %v1155
        %v1553 = vunpack.c.l.b16 %v1169
        %v1554 = vunpack.c.l.b16 %v1179
        %v1555 = vunpack.c.l.b16 %v1193
        %v1556 = vunpack.c.l.b16 %v1203
        %v1557 = vunpack.c.l.b16 %v1217
        %v1558 = vunpack.c.l.b16 %v1227
        %v1559 = vunpack.c.l.b16 %v1241
        %v1560 = vunpack.c.l.b16 %v1251
        %v1561 = vunpack.c.l.b16 %v1265
        %v1562 = vunpack.c.l.b16 %v1275
        %v1563 = vunpack.c.l.b16 %v1289
        %v1564 = vunpack.c.l.b16 %v1299
        %v1565 = vunpack.c.l.b16 %v1313
        %v1566 = vunpack.c.l.b16 %v1323
        %v1567 = vunpack.c.l.b16 %v1337
        %v1568 = vunpack.c.l.b16 %v1347
        %v1569 = vpack.c.b16 %v1550, %v1549
        %v1570 = vpack.c.b16 %v1552, %v1551
        %v1571 = vpack.c.b16 %v1554, %v1553
        %v1572 = vpack.c.b16 %v1556, %v1555
        %v1573 = vpack.c.b16 %v1558, %v1557
        %v1574 = vpack.c.b16 %v1560, %v1559
        %v1575 = vpack.c.b16 %v1562, %v1561
        %v1576 = vpack.c.b16 %v1564, %v1563
        %v1577 = vpack.c.b16 %v1566, %v1565
        %v1578 = vpack.c.b16 %v1568, %v1567
        %1579 = vrot.lane.b32.xlu0 %v1569, 4
        %v1580 = vpop.permute.xlu0 %1579
        %1581 = vrot.lane.b32.xlu0 %v1570, 4
        %v1582 = vpop.permute.xlu0 %1581
        %1583 = vrot.lane.b32.xlu0 %v1571, 4
        %v1584 = vpop.permute.xlu0 %1583
        %1585 = vrot.lane.b32.xlu0 %v1572, 4
        %v1586 = vpop.permute.xlu0 %1585
        %1587 = vrot.lane.b32.xlu0 %v1573, 4
        %v1588 = vpop.permute.xlu0 %1587
        %1589 = vrot.lane.b32.xlu0 %v1574, 4
        %v1590 = vpop.permute.xlu0 %1589
        %1591 = vrot.lane.b32.xlu0 %v1575, 4
        %v1592 = vpop.permute.xlu0 %1591
        %1593 = vrot.lane.b32.xlu0 %v1576, 4
        %v1594 = vpop.permute.xlu0 %1593
        %1595 = vrot.lane.b32.xlu0 %v1577, 4
        %v1596 = vpop.permute.xlu0 %1595
        %1597 = vrot.lane.b32.xlu0 %v1578, 4
        %v1598 = vpop.permute.xlu0 %1597
        %v1599 = vunpack.c.l.b16 %v1384
        %v1600 = vunpack.c.l.b16 %v1387
        %v1601 = vunpack.c.l.b16 %v1391
        %v1602 = vunpack.c.l.b16 %v1394
        %v1603 = vunpack.c.l.b16 %v1398
        %v1604 = vunpack.c.l.b16 %v1401
        %v1605 = vunpack.c.l.b16 %v1405
        %v1606 = vunpack.c.l.b16 %v1408
        %v1607 = vunpack.c.l.b16 %v1412
        %v1608 = vunpack.c.l.b16 %v1415
        %v1609 = vunpack.c.l.b16 %v1419
        %v1610 = vunpack.c.l.b16 %v1422
        %v1611 = vunpack.c.l.b16 %v1426
        %v1612 = vunpack.c.l.b16 %v1429
        %v1613 = vunpack.c.l.b16 %v1433
        %v1614 = vunpack.c.l.b16 %v1436
        %v1615 = vunpack.c.l.b16 %v1440
        %v1616 = vunpack.c.l.b16 %v1443
        %v1617 = vunpack.c.l.b16 %v1447
        %v1618 = vunpack.c.l.b16 %v1450
        %v1619 = vpack.c.b16 %v1600, %v1599
        %v1620 = vpack.c.b16 %v1602, %v1601
        %v1621 = vpack.c.b16 %v1604, %v1603
        %v1622 = vpack.c.b16 %v1606, %v1605
        %v1623 = vpack.c.b16 %v1608, %v1607
        %v1624 = vpack.c.b16 %v1610, %v1609
        %v1625 = vpack.c.b16 %v1612, %v1611
        %v1626 = vpack.c.b16 %v1614, %v1613
        %v1627 = vpack.c.b16 %v1616, %v1615
        %v1628 = vpack.c.b16 %v1618, %v1617
        %1629 = vrot.lane.b32.xlu0 %v1619, 8
        %v1630 = vpop.permute.xlu0 %1629
        %1631 = vrot.lane.b32.xlu0 %v1620, 8
        %v1632 = vpop.permute.xlu0 %1631
        %1633 = vrot.lane.b32.xlu0 %v1621, 8
        %v1634 = vpop.permute.xlu0 %1633
        %1635 = vrot.lane.b32.xlu0 %v1622, 8
        %v1636 = vpop.permute.xlu0 %1635
        %1637 = vrot.lane.b32.xlu0 %v1623, 8
        %v1638 = vpop.permute.xlu0 %1637
        %1639 = vrot.lane.b32.xlu0 %v1624, 8
        %v1640 = vpop.permute.xlu0 %1639
        %1641 = vrot.lane.b32.xlu0 %v1625, 8
        %v1642 = vpop.permute.xlu0 %1641
        %1643 = vrot.lane.b32.xlu0 %v1626, 8
        %v1644 = vpop.permute.xlu0 %1643
        %1645 = vrot.lane.b32.xlu0 %v1627, 8
        %v1646 = vpop.permute.xlu0 %1645
        %1647 = vrot.lane.b32.xlu0 %v1628, 8
        %v1648 = vpop.permute.xlu0 %1647
        %v1649 = vunpack.c.l.b16 %v1099
        %v1650 = vunpack.c.l.b16 %v1100
        %v1651 = vpack.c.b16 %v1650, %v1649
        %1652 = vrot.lane.b32.xlu0 %v1540, 12
        %v1653 = vpop.permute.xlu0 %1652
        %1654 = vrot.lane.b32.xlu0 %v1541, 12
        %v1655 = vpop.permute.xlu0 %1654
        %1656 = vrot.lane.b32.xlu0 %v1542, 12
        %v1657 = vpop.permute.xlu0 %1656
        %1658 = vrot.lane.b32.xlu0 %v1543, 12
        %v1659 = vpop.permute.xlu0 %1658
        %1660 = vrot.lane.b32.xlu0 %v1544, 12
        %v1661 = vpop.permute.xlu0 %1660
        %1662 = vrot.lane.b32.xlu0 %v1545, 12
        %v1663 = vpop.permute.xlu0 %1662
        %1664 = vrot.lane.b32.xlu0 %v1546, 12
        %v1665 = vpop.permute.xlu0 %1664
        %1666 = vrot.lane.b32.xlu0 %v1547, 12
        %v1667 = vpop.permute.xlu0 %1666
        %1668 = vrot.lane.b32.xlu0 %v1548, 12
        %v1669 = vpop.permute.xlu0 %1668
        %1670 = vrot.lane.b32.xlu0 %v1651, 12
        %v1671 = vpop.permute.xlu0 %1670
        %v1672 = vunpack.c.l.b16 %v1464
        %v1673 = vunpack.c.l.b16 %v1474
        %v1674 = vpack.c.b16 %v1673, %v1672
        %1675 = vrot.lane.b32.xlu0 %v1570, 16
        %v1676 = vpop.permute.xlu0 %1675
        %1677 = vrot.lane.b32.xlu0 %v1571, 16
        %v1678 = vpop.permute.xlu0 %1677
        %1679 = vrot.lane.b32.xlu0 %v1572, 16
        %v1680 = vpop.permute.xlu0 %1679
        %1681 = vrot.lane.b32.xlu0 %v1573, 16
        %v1682 = vpop.permute.xlu0 %1681
        %1683 = vrot.lane.b32.xlu0 %v1574, 16
        %v1684 = vpop.permute.xlu0 %1683
        %1685 = vrot.lane.b32.xlu0 %v1575, 16
        %v1686 = vpop.permute.xlu0 %1685
        %1687 = vrot.lane.b32.xlu0 %v1576, 16
        %v1688 = vpop.permute.xlu0 %1687
        %1689 = vrot.lane.b32.xlu0 %v1577, 16
        %v1690 = vpop.permute.xlu0 %1689
        %1691 = vrot.lane.b32.xlu0 %v1578, 16
        %v1692 = vpop.permute.xlu0 %1691
        %1693 = vrot.lane.b32.xlu0 %v1674, 16
        %v1694 = vpop.permute.xlu0 %1693
        %v1695 = vunpack.c.l.b16 %v1481
        %v1696 = vunpack.c.l.b16 %v1484
        %v1697 = vpack.c.b16 %v1696, %v1695
        %1698 = vrot.lane.b32.xlu0 %v1620, 20
        %v1699 = vpop.permute.xlu0 %1698
        %1700 = vrot.lane.b32.xlu0 %v1621, 20
        %v1701 = vpop.permute.xlu0 %1700
        %1702 = vrot.lane.b32.xlu0 %v1622, 20
        %v1703 = vpop.permute.xlu0 %1702
        %1704 = vrot.lane.b32.xlu0 %v1623, 20
        %v1705 = vpop.permute.xlu0 %1704
        %1706 = vrot.lane.b32.xlu0 %v1624, 20
        %v1707 = vpop.permute.xlu0 %1706
        %1708 = vrot.lane.b32.xlu0 %v1625, 20
        %v1709 = vpop.permute.xlu0 %1708
        %1710 = vrot.lane.b32.xlu0 %v1626, 20
        %v1711 = vpop.permute.xlu0 %1710
        %1712 = vrot.lane.b32.xlu0 %v1627, 20
        %v1713 = vpop.permute.xlu0 %1712
        %1714 = vrot.lane.b32.xlu0 %v1628, 20
        %v1715 = vpop.permute.xlu0 %1714
        %1716 = vrot.lane.b32.xlu0 %v1697, 20
        %v1717 = vpop.permute.xlu0 %1716
        %v1718 = vunpack.c.l.b16 %v1102
        %v1719 = vunpack.c.l.b16 %v1103
        %v1720 = vpack.c.b16 %v1719, %v1718
        %1721 = vrot.lane.b32.xlu0 %v1541, 24
        %v1722 = vpop.permute.xlu0 %1721
        %1723 = vrot.lane.b32.xlu0 %v1542, 24
        %v1724 = vpop.permute.xlu0 %1723
        %1725 = vrot.lane.b32.xlu0 %v1543, 24
        %v1726 = vpop.permute.xlu0 %1725
        %1727 = vrot.lane.b32.xlu0 %v1544, 24
        %v1728 = vpop.permute.xlu0 %1727
        %1729 = vrot.lane.b32.xlu0 %v1545, 24
        %v1730 = vpop.permute.xlu0 %1729
        %1731 = vrot.lane.b32.xlu0 %v1546, 24
        %v1732 = vpop.permute.xlu0 %1731
        %1733 = vrot.lane.b32.xlu0 %v1547, 24
        %v1734 = vpop.permute.xlu0 %1733
        %1735 = vrot.lane.b32.xlu0 %v1548, 24
        %v1736 = vpop.permute.xlu0 %1735
        %1737 = vrot.lane.b32.xlu0 %v1651, 24
        %v1738 = vpop.permute.xlu0 %1737
        %1739 = vrot.lane.b32.xlu0 %v1720, 24
        %v1740 = vpop.permute.xlu0 %1739
        %v1741 = vunpack.c.l.b16 %v1498
        %v1742 = vunpack.c.l.b16 %v1508
        %v1743 = vpack.c.b16 %v1742, %v1741
        %1744 = vrot.lane.b32.xlu0 %v1571, 28
        %v1745 = vpop.permute.xlu0 %1744
        %1746 = vrot.lane.b32.xlu0 %v1572, 28
        %v1747 = vpop.permute.xlu0 %1746
        %1748 = vrot.lane.b32.xlu0 %v1573, 28
        %v1749 = vpop.permute.xlu0 %1748
        %1750 = vrot.lane.b32.xlu0 %v1574, 28
        %v1751 = vpop.permute.xlu0 %1750
        %1752 = vrot.lane.b32.xlu0 %v1575, 28
        %v1753 = vpop.permute.xlu0 %1752
        %1754 = vrot.lane.b32.xlu0 %v1576, 28
        %v1755 = vpop.permute.xlu0 %1754
        %1756 = vrot.lane.b32.xlu0 %v1577, 28
        %v1757 = vpop.permute.xlu0 %1756
        %1758 = vrot.lane.b32.xlu0 %v1578, 28
        %v1759 = vpop.permute.xlu0 %1758
        %1760 = vrot.lane.b32.xlu0 %v1674, 28
        %v1761 = vpop.permute.xlu0 %1760
        %1762 = vrot.lane.b32.xlu0 %v1743, 28
        %v1763 = vpop.permute.xlu0 %1762
        %v1764 = vunpack.c.l.b16 %v1515
        %v1765 = vunpack.c.l.b16 %v1518
        %v1766 = vpack.c.b16 %v1765, %v1764
        %1767 = vrot.lane.b32.xlu0 %v1621, 32
        %v1768 = vpop.permute.xlu0 %1767
        %1769 = vrot.lane.b32.xlu0 %v1622, 32
        %v1770 = vpop.permute.xlu0 %1769
        %1771 = vrot.lane.b32.xlu0 %v1623, 32
        %v1772 = vpop.permute.xlu0 %1771
        %1773 = vrot.lane.b32.xlu0 %v1624, 32
        %v1774 = vpop.permute.xlu0 %1773
        %1775 = vrot.lane.b32.xlu0 %v1625, 32
        %v1776 = vpop.permute.xlu0 %1775
        %1777 = vrot.lane.b32.xlu0 %v1626, 32
        %v1778 = vpop.permute.xlu0 %1777
        %1779 = vrot.lane.b32.xlu0 %v1627, 32
        %v1780 = vpop.permute.xlu0 %1779
        %1781 = vrot.lane.b32.xlu0 %v1628, 32
        %v1782 = vpop.permute.xlu0 %1781
        %1783 = vrot.lane.b32.xlu0 %v1697, 32
        %v1784 = vpop.permute.xlu0 %1783
        %1785 = vrot.lane.b32.xlu0 %v1766, 32
        %v1786 = vpop.permute.xlu0 %1785
        %vm1787 = vcmask 31744
        %v1790 = vsel %vm1787, %v1539, %v1580
        %v1793 = vsel %vm1787, %v1540, %v1582
        %v1796 = vsel %vm1787, %v1541, %v1584
        %v1799 = vsel %vm1787, %v1542, %v1586
        %v1802 = vsel %vm1787, %v1543, %v1588
        %v1805 = vsel %vm1787, %v1544, %v1590
        %v1808 = vsel %vm1787, %v1545, %v1592
        %v1811 = vsel %vm1787, %v1546, %v1594
        %v1814 = vsel %vm1787, %v1547, %v1596
        %v1817 = vsel %vm1787, %v1548, %v1598
        %vm1818 = vcmask 64512
        %v1820 = vsel %vm1818, %v1790, %v1630
        %v1822 = vsel %vm1818, %v1793, %v1632
        %v1824 = vsel %vm1818, %v1796, %v1634
        %v1826 = vsel %vm1818, %v1799, %v1636
        %v1828 = vsel %vm1818, %v1802, %v1638
        %v1830 = vsel %vm1818, %v1805, %v1640
        %v1832 = vsel %vm1818, %v1808, %v1642
        %v1834 = vsel %vm1818, %v1811, %v1644
        %v1836 = vsel %vm1818, %v1814, %v1646
        %v1838 = vsel %vm1818, %v1817, %v1648
        %vm1839 = vcmask 97280
        %v1841 = vsel %vm1839, %v1820, %v1653
        %v1843 = vsel %vm1839, %v1822, %v1655
        %v1845 = vsel %vm1839, %v1824, %v1657
        %v1847 = vsel %vm1839, %v1826, %v1659
        %v1849 = vsel %vm1839, %v1828, %v1661
        %v1851 = vsel %vm1839, %v1830, %v1663
        %v1853 = vsel %vm1839, %v1832, %v1665
        %v1855 = vsel %vm1839, %v1834, %v1667
        %v1857 = vsel %vm1839, %v1836, %v1669
        %v1859 = vsel %vm1839, %v1838, %v1671
        %vm1860 = vcmask 130048
        %v1862 = vsel %vm1860, %v1841, %v1676
        %v1864 = vsel %vm1860, %v1843, %v1678
        %v1866 = vsel %vm1860, %v1845, %v1680
        %v1868 = vsel %vm1860, %v1847, %v1682
        %v1870 = vsel %vm1860, %v1849, %v1684
        %v1872 = vsel %vm1860, %v1851, %v1686
        %v1874 = vsel %vm1860, %v1853, %v1688
        %v1876 = vsel %vm1860, %v1855, %v1690
        %v1878 = vsel %vm1860, %v1857, %v1692
        %v1880 = vsel %vm1860, %v1859, %v1694
        %vm1881 = vcmask 162816
        %v1883 = vsel %vm1881, %v1862, %v1699
        %v1885 = vsel %vm1881, %v1864, %v1701
        %v1887 = vsel %vm1881, %v1866, %v1703
        %v1889 = vsel %vm1881, %v1868, %v1705
        %v1891 = vsel %vm1881, %v1870, %v1707
        %v1893 = vsel %vm1881, %v1872, %v1709
        %v1895 = vsel %vm1881, %v1874, %v1711
        %v1897 = vsel %vm1881, %v1876, %v1713
        %v1899 = vsel %vm1881, %v1878, %v1715
        %v1901 = vsel %vm1881, %v1880, %v1717
        %vm1902 = vcmask 195584
        %v1904 = vsel %vm1902, %v1883, %v1722
        %v1906 = vsel %vm1902, %v1885, %v1724
        %v1908 = vsel %vm1902, %v1887, %v1726
        %v1910 = vsel %vm1902, %v1889, %v1728
        %v1912 = vsel %vm1902, %v1891, %v1730
        %v1914 = vsel %vm1902, %v1893, %v1732
        %v1916 = vsel %vm1902, %v1895, %v1734
        %v1918 = vsel %vm1902, %v1897, %v1736
        %v1920 = vsel %vm1902, %v1899, %v1738
        %v1922 = vsel %vm1902, %v1901, %v1740
        %vm1923 = vcmask 228352
        %v1925 = vsel %vm1923, %v1904, %v1745
        %v1927 = vsel %vm1923, %v1906, %v1747
        %v1929 = vsel %vm1923, %v1908, %v1749
        %v1931 = vsel %vm1923, %v1910, %v1751
        %v1933 = vsel %vm1923, %v1912, %v1753
        %v1935 = vsel %vm1923, %v1914, %v1755
        %v1937 = vsel %vm1923, %v1916, %v1757
        %v1939 = vsel %vm1923, %v1918, %v1759
        %v1941 = vsel %vm1923, %v1920, %v1761
        %v1943 = vsel %vm1923, %v1922, %v1763
        %vm1944 = vcmask 261120
        %v1946 = vsel %vm1944, %v1925, %v1768
        %v1948 = vsel %vm1944, %v1927, %v1770
        %v1950 = vsel %vm1944, %v1929, %v1772
        %v1952 = vsel %vm1944, %v1931, %v1774
        %v1954 = vsel %vm1944, %v1933, %v1776
        %v1956 = vsel %vm1944, %v1935, %v1778
        %v1958 = vsel %vm1944, %v1937, %v1780
        %v1960 = vsel %vm1944, %v1939, %v1782
        %v1962 = vsel %vm1944, %v1941, %v1784
        %v1964 = vsel %vm1944, %v1943, %v1786
        %vm1965 = vcmask 293888
        %v1967 = vsel %vm1965, %v1946, 0
        %v1969 = vsel %vm1965, %v1948, 0
        %v1971 = vsel %vm1965, %v1950, 0
        %v1973 = vsel %vm1965, %v1952, 0
        %v1975 = vsel %vm1965, %v1954, 0
        %v1977 = vsel %vm1965, %v1956, 0
        %v1979 = vsel %vm1965, %v1958, 0
        %v1981 = vsel %vm1965, %v1960, 0
        %v1983 = vsel %vm1965, %v1962, 0
        %v1985 = vsel %vm1965, %v1964, 0
        %v1987 = vld [vmem:[%s1] sm:$0xf]
        %v1988 = vld [vmem:[%s1 + $0x4] sm:$0xf]
        %v1989 = vld [vmem:[%s1 + $0x8] sm:$0xf]
        %v1990 = vld [vmem:[%s1 + $0xc] sm:$0xf]
        %v1991 = vld [vmem:[%s1 + $0x10] sm:$0xf]
        %v1992 = vld [vmem:[%s1 + $0x14] sm:$0xf]
        %v1993 = vld [vmem:[%s1 + $0x18] sm:$0xf]
        %v1994 = vld [vmem:[%s1 + $0x1c] sm:$0xf]
        %v1995 = vld [vmem:[%s1 + $0x20] sm:$0xf]
        %v1996 = vld [vmem:[%s1 + $0x24] sm:$0xf]
        %v1997 = vld [vmem:[%s1 + $0x28] sm:$0xf]
        %v1998 = vld [vmem:[%s1 + $0x2c] sm:$0xf]
        %v1999 = vld [vmem:[%s1 + $0x30] sm:$0xf]
        %v2000 = vld [vmem:[%s1 + $0x34] sm:$0xf]
        %v2001 = vld [vmem:[%s1 + $0x38] sm:$0xf]
        %v2002 = vld [vmem:[%s1 + $0x3c] sm:$0xf]
        %v2019 = vunpack.c.l.b16 %v1987
        %v2020 = vunpack.c.l.b16 %v1988
        %v2021 = vunpack.c.l.b16 %v1989
        %v2022 = vunpack.c.l.b16 %v1990
        %v2023 = vunpack.c.l.b16 %v1991
        %v2024 = vunpack.c.l.b16 %v1992
        %v2025 = vunpack.c.l.b16 %v1993
        %v2026 = vunpack.c.l.b16 %v1994
        %v2027 = vunpack.c.l.b16 %v1995
        %v2028 = vunpack.c.l.b16 %v1996
        %v2029 = vunpack.c.l.b16 %v1997
        %v2030 = vunpack.c.l.b16 %v1998
        %v2031 = vunpack.c.l.b16 %v1999
        %v2032 = vunpack.c.l.b16 %v2000
        %v2033 = vunpack.c.l.b16 %v2001
        %v2034 = vunpack.c.l.b16 %v2002
        %v2035 = vpack.c.b16 %v2020, %v2019
        %v2036 = vpack.c.b16 %v2022, %v2021
        %v2037 = vpack.c.b16 %v2024, %v2023
        %v2038 = vpack.c.b16 %v2026, %v2025
        %v2039 = vpack.c.b16 %v2028, %v2027
        %v2040 = vpack.c.b16 %v2030, %v2029
        %v2041 = vpack.c.b16 %v2032, %v2031
        %v2042 = vpack.c.b16 %v2034, %v2033
        %2051 = vmatprep.subr.bf16.mxu0 0
        %2052 = vmatpush1.bf16.msra.mxu0 %v2035
        %2053 = vmatprep.subr.bf16.mxu0 0
        %2054 = vmatpush1.bf16.msra.mxu0 %v2036
        %2055 = vmatprep.subr.bf16.mxu0 0
        %2056 = vmatpush1.bf16.msra.mxu0 %v2037
        %2057 = vmatprep.subr.bf16.mxu0 0
        %2058 = vmatpush1.bf16.msra.mxu0 %v2038
        %2059 = vmatprep.subr.bf16.mxu0 0
        %2060 = vmatpush1.bf16.msra.mxu0 %v2039
        %2061 = vmatprep.subr.bf16.mxu0 0
        %2062 = vmatpush1.bf16.msra.mxu0 %v2040
        %2063 = vmatprep.subr.bf16.mxu0 0
        %2064 = vmatpush1.bf16.msra.mxu0 %v2041
        %2065 = vmatprep.subr.bf16.mxu0 0
        %2066 = vmatpush1.bf16.msra.mxu0 %v2042
        %2067 = vmatprep.subr.bf16.mxu0 0
        %2068 = vmatpush1.bf16.msra.mxu0 0
        %2069 = vmatprep.subr.bf16.mxu0 0
        %2070 = vmatpush1.bf16.msra.mxu0 0
        %2071 = vmatprep.subr.bf16.mxu0 0
        %2072 = vmatpush1.bf16.msra.mxu0 0
        %2073 = vmatprep.subr.bf16.mxu0 0
        %2074 = vmatpush1.bf16.msra.mxu0 0
        %2075 = vmatprep.subr.bf16.mxu0 0
        %2076 = vmatpush1.bf16.msra.mxu0 0
        %2077 = vmatprep.subr.bf16.mxu0 0
        %2078 = vmatpush1.bf16.msra.mxu0 0
        %2079 = vmatprep.subr.bf16.mxu0 0
        %2080 = vmatpush1.bf16.msra.mxu0 0
        %2081 = vmatprep.subr.bf16.mxu0 0
        %2082 = vmatpush1.bf16.msra.mxu0 0
        %2083 = vmatprep.mubr.bf16.mxu0 0
        %2084 = vmatmul.mubr.bf16.gmra.mrb[0].mxu0 %v1967
        %v2085 = vpop.f32.mrb[0].mxu0
        %v2086 = vadd.f32 0.0, %v2085
        %v2087 = vpop.f32.mrb[0].mxu0
        %v2088 = vpop.f32.mrb[0].mxu0
        %v2089 = vadd.f32 0.0, %v2088
        %v2090 = vpop.f32.mrb[0].mxu0
        %2091 = vmatprep.mubr.bf16.mxu0 0
        %2092 = vmatmul.mubr.bf16.gmra.mrb[0].mxu0 %v1969
        %v2093 = vpop.f32.mrb[0].mxu0
        %v2094 = vadd.f32 0.0, %v2093
        %v2095 = vpop.f32.mrb[0].mxu0
        %v2096 = vpop.f32.mrb[0].mxu0
        %v2097 = vadd.f32 0.0, %v2096
        %v2098 = vpop.f32.mrb[0].mxu0
        %2099 = vmatprep.mubr.bf16.mxu0 0
        %2100 = vmatmul.mubr.bf16.gmra.mrb[0].mxu0 %v1971
        %v2101 = vpop.f32.mrb[0].mxu0
        %v2102 = vadd.f32 0.0, %v2101
        %v2103 = vpop.f32.mrb[0].mxu0
        %v2104 = vpop.f32.mrb[0].mxu0
        %v2105 = vadd.f32 0.0, %v2104
        %v2106 = vpop.f32.mrb[0].mxu0
        %2107 = vmatprep.mubr.bf16.mxu0 0
        %2108 = vmatmul.mubr.bf16.gmra.mrb[0].mxu0 %v1973
        %v2109 = vpop.f32.mrb[0].mxu0
        %v2110 = vadd.f32 0.0, %v2109
        %v2111 = vpop.f32.mrb[0].mxu0
        %v2112 = vpop.f32.mrb[0].mxu0
        %v2113 = vadd.f32 0.0, %v2112
        %v2114 = vpop.f32.mrb[0].mxu0
        %2115 = vmatprep.mubr.bf16.mxu0 0
        %2116 = vmatmul.mubr.bf16.gmra.mrb[0].mxu0 %v1975
        %v2117 = vpop.f32.mrb[0].mxu0
        %v2118 = vadd.f32 0.0, %v2117
        %v2119 = vpop.f32.mrb[0].mxu0
        %v2120 = vpop.f32.mrb[0].mxu0
        %v2121 = vadd.f32 0.0, %v2120
        %v2122 = vpop.f32.mrb[0].mxu0
        %2123 = vmatprep.mubr.bf16.mxu0 0
        %2124 = vmatmul.mubr.bf16.gmra.mrb[0].mxu0 %v1977
        %v2125 = vpop.f32.mrb[0].mxu0
        %v2126 = vadd.f32 0.0, %v2125
        %v2127 = vpop.f32.mrb[0].mxu0
        %v2128 = vpop.f32.mrb[0].mxu0
        %v2129 = vadd.f32 0.0, %v2128
        %v2130 = vpop.f32.mrb[0].mxu0
        %2131 = vmatprep.mubr.bf16.mxu0 0
        %2132 = vmatmul.mubr.bf16.gmra.mrb[0].mxu0 %v1979
        %v2133 = vpop.f32.mrb[0].mxu0
        %v2134 = vadd.f32 0.0, %v2133
        %v2135 = vpop.f32.mrb[0].mxu0
        %v2136 = vpop.f32.mrb[0].mxu0
        %v2137 = vadd.f32 0.0, %v2136
        %v2138 = vpop.f32.mrb[0].mxu0
        %2139 = vmatprep.mubr.bf16.mxu0 0
        %2140 = vmatmul.mubr.bf16.gmra.mrb[0].mxu0 %v1981
        %v2141 = vpop.f32.mrb[0].mxu0
        %v2142 = vadd.f32 0.0, %v2141
        %v2143 = vpop.f32.mrb[0].mxu0
        %v2144 = vpop.f32.mrb[0].mxu0
        %v2145 = vadd.f32 0.0, %v2144
        %v2146 = vpop.f32.mrb[0].mxu0
        %2147 = vmatprep.mubr.bf16.mxu0 0
        %2148 = vmatmul.mubr.bf16.gmra.mrb[0].mxu0 %v1983
        %v2149 = vpop.f32.mrb[0].mxu0
        %v2150 = vadd.f32 0.0, %v2149
        %v2151 = vpop.f32.mrb[0].mxu0
        %v2152 = vpop.f32.mrb[0].mxu0
        %v2153 = vadd.f32 0.0, %v2152
        %v2154 = vpop.f32.mrb[0].mxu0
        %2155 = vmatprep.mubr.bf16.mxu0 0
        %2156 = vmatmul.mubr.bf16.gmra.mrb[0].mxu0 %v1985
        %v2157 = vpop.f32.mrb[0].mxu0
        %v2158 = vadd.f32 0.0, %v2157
        %v2159 = vpop.f32.mrb[0].mxu0
        %v2160 = vpop.f32.mrb[0].mxu0
        %v2161 = vadd.f32 0.0, %v2160
        %v2162 = vpop.f32.mrb[0].mxu0
        %2163 = vdwg.mxu0
        %v2164 = vld [vmem:[%s2] sm:$0x1]
        %v2166 = vlaneseq
        %v2167 = vshrl.u32 %v2166, 7
        %v2168 = vsub.s32 0, %v2167
        %v2169 = vrot.slane %v2164, %v2168
        %v2171 = vmul.f32 %v2086, %v2169
        %v2172 = vmul.f32 %v2089, %v2169
        %v2173 = vmul.f32 %v2094, %v2169
        %v2174 = vmul.f32 %v2097, %v2169
        %v2175 = vmul.f32 %v2102, %v2169
        %v2176 = vmul.f32 %v2105, %v2169
        %v2177 = vmul.f32 %v2110, %v2169
        %v2178 = vmul.f32 %v2113, %v2169
        %v2179 = vmul.f32 %v2118, %v2169
        %v2180 = vmul.f32 %v2121, %v2169
        %v2181 = vmul.f32 %v2126, %v2169
        %v2182 = vmul.f32 %v2129, %v2169
        %v2183 = vmul.f32 %v2134, %v2169
        %v2184 = vmul.f32 %v2137, %v2169
        %v2185 = vmul.f32 %v2142, %v2169
        %v2186 = vmul.f32 %v2145, %v2169
        %v2187 = vmul.f32 %v2150, %v2169
        %v2188 = vmul.f32 %v2153, %v2169
        %v2189 = vmul.f32 %v2158, %v2169
        %v2190 = vmul.f32 %v2161, %v2169
        %v2191 = vld [vmem:[%s3] sm:$0x1]
        %v2193 = vlaneseq
        %v2194 = vshrl.u32 %v2193, 7
        %v2195 = vsub.s32 0, %v2194
        %v2196 = vrot.slane %v2191, %v2195
        %v2198 = vadd.f32 %v2171, %v2196
        %v2199 = vadd.f32 %v2172, %v2196
        %v2200 = vadd.f32 %v2173, %v2196
        %v2201 = vadd.f32 %v2174, %v2196
        %v2202 = vadd.f32 %v2175, %v2196
        %v2203 = vadd.f32 %v2176, %v2196
        %v2204 = vadd.f32 %v2177, %v2196
        %v2205 = vadd.f32 %v2178, %v2196
        %v2206 = vadd.f32 %v2179, %v2196
        %v2207 = vadd.f32 %v2180, %v2196
        %v2208 = vadd.f32 %v2181, %v2196
        %v2209 = vadd.f32 %v2182, %v2196
        %v2210 = vadd.f32 %v2183, %v2196
        %v2211 = vadd.f32 %v2184, %v2196
        %v2212 = vadd.f32 %v2185, %v2196
        %v2213 = vadd.f32 %v2186, %v2196
        %v2214 = vadd.f32 %v2187, %v2196
        %v2215 = vadd.f32 %v2188, %v2196
        %v2216 = vadd.f32 %v2189, %v2196
        %v2217 = vadd.f32 %v2190, %v2196
        %v2218 = vmax.f32 %v2198, 0.0
        %v2219 = vmax.f32 %v2199, 0.0
        %v2220 = vmax.f32 %v2200, 0.0
        %v2221 = vmax.f32 %v2201, 0.0
        %v2222 = vmax.f32 %v2202, 0.0
        %v2223 = vmax.f32 %v2203, 0.0
        %v2224 = vmax.f32 %v2204, 0.0
        %v2225 = vmax.f32 %v2205, 0.0
        %v2226 = vmax.f32 %v2206, 0.0
        %v2227 = vmax.f32 %v2207, 0.0
        %v2228 = vmax.f32 %v2208, 0.0
        %v2229 = vmax.f32 %v2209, 0.0
        %v2230 = vmax.f32 %v2210, 0.0
        %v2231 = vmax.f32 %v2211, 0.0
        %v2232 = vmax.f32 %v2212, 0.0
        %v2233 = vmax.f32 %v2213, 0.0
        %v2234 = vmax.f32 %v2214, 0.0
        %v2235 = vmax.f32 %v2215, 0.0
        %v2236 = vmax.f32 %v2216, 0.0
        %v2237 = vmax.f32 %v2217, 0.0
        %v2238 = vpack.c.bf16 %v2219, %v2218
        %v2239 = vpack.c.bf16 %v2221, %v2220
        %v2240 = vpack.c.bf16 %v2223, %v2222
        %v2241 = vpack.c.bf16 %v2225, %v2224
        %v2242 = vpack.c.bf16 %v2227, %v2226
        %v2243 = vpack.c.bf16 %v2229, %v2228
        %v2244 = vpack.c.bf16 %v2231, %v2230
        %v2245 = vpack.c.bf16 %v2233, %v2232
        %v2246 = vpack.c.bf16 %v2235, %v2234
        %v2247 = vpack.c.bf16 %v2237, %v2236
        %v2258 = vunpack.c.l.b16 %v2238
        %v2259 = vunpack.c.h.b16 %v2238
        %v2260 = vunpack.c.l.b16 %v2239
        %v2261 = vunpack.c.h.b16 %v2239
        %v2262 = vunpack.c.l.b16 %v2240
        %v2263 = vunpack.c.h.b16 %v2240
        %v2264 = vunpack.c.l.b16 %v2241
        %v2265 = vunpack.c.h.b16 %v2241
        %v2266 = vunpack.c.l.b16 %v2242
        %v2267 = vunpack.c.h.b16 %v2242
        %v2268 = vunpack.c.l.b16 %v2243
        %v2269 = vunpack.c.h.b16 %v2243
        %v2270 = vunpack.c.l.b16 %v2244
        %v2271 = vunpack.c.h.b16 %v2244
        %v2272 = vunpack.c.l.b16 %v2245
        %v2273 = vunpack.c.h.b16 %v2245
        %v2274 = vunpack.c.l.b16 %v2246
        %v2275 = vunpack.c.h.b16 %v2246
        %v2276 = vunpack.c.l.b16 %v2247
        %v2277 = vunpack.c.h.b16 %v2247
        %v2278 = vpack.c.b16 %v2258, %v2258
        %v2279 = vpack.c.b16 %v2259, %v2259
        %v2280 = vpack.c.b16 %v2260, %v2260
        %v2281 = vpack.c.b16 %v2261, %v2261
        %v2282 = vpack.c.b16 %v2262, %v2262
        %v2283 = vpack.c.b16 %v2263, %v2263
        %v2284 = vpack.c.b16 %v2264, %v2264
        %v2285 = vpack.c.b16 %v2265, %v2265
        %v2286 = vpack.c.b16 %v2266, %v2266
        %v2287 = vpack.c.b16 %v2267, %v2267
        %v2288 = vpack.c.b16 %v2268, %v2268
        %v2289 = vpack.c.b16 %v2269, %v2269
        %v2290 = vpack.c.b16 %v2270, %v2270
        %v2291 = vpack.c.b16 %v2271, %v2271
        %v2292 = vpack.c.b16 %v2272, %v2272
        %v2293 = vpack.c.b16 %v2273, %v2273
        %v2294 = vpack.c.b16 %v2274, %v2274
        %v2295 = vpack.c.b16 %v2275, %v2275
        %v2296 = vpack.c.b16 %v2276, %v2276
        %v2297 = vpack.c.b16 %v2277, %v2277
        %vm2298 = vsmask.f32 256
        %vm2299 = vsmask.f32 4368
        %vm2300 = vmor %vm2298, %vm2299
        %v2302 = vshrl.u32 %v2278, 16
        %v2304 = vrot.slane %v2302, 7
        %v2305 = vshll.u32 %v2278, 16
        %v2307 = vor.u32 %v2304, %v2305
        %v2308 = vrot.slane %v2304, 4
        %v2310 = vshrl.u32 %v2279, 16
        %v2312 = vrot.slane %v2310, 7
        %v2313 = vshll.u32 %v2279, 16
        %v2315 = vor.u32 %v2312, %v2313
        %v2316 = vsel %vm2300, %v2308, %v2315
        %v2317 = vrot.slane %v2312, 4
        %v2319 = vshrl.u32 %v2280, 16
        %v2321 = vrot.slane %v2319, 7
        %v2322 = vshll.u32 %v2280, 16
        %v2324 = vor.u32 %v2321, %v2322
        %v2325 = vrot.slane %v2321, 4
        %v2327 = vshrl.u32 %v2281, 16
        %v2329 = vrot.slane %v2327, 7
        %v2330 = vshll.u32 %v2281, 16
        %v2332 = vor.u32 %v2329, %v2330
        %v2333 = vsel %vm2300, %v2325, %v2332
        %v2334 = vrot.slane %v2329, 4
        %v2336 = vshrl.u32 %v2282, 16
        %v2338 = vrot.slane %v2336, 7
        %v2339 = vshll.u32 %v2282, 16
        %v2341 = vor.u32 %v2338, %v2339
        %v2342 = vrot.slane %v2338, 4
        %v2344 = vshrl.u32 %v2283, 16
        %v2346 = vrot.slane %v2344, 7
        %v2347 = vshll.u32 %v2283, 16
        %v2349 = vor.u32 %v2346, %v2347
        %v2350 = vsel %vm2300, %v2342, %v2349
        %v2351 = vrot.slane %v2346, 4
        %v2353 = vshrl.u32 %v2284, 16
        %v2355 = vrot.slane %v2353, 7
        %v2356 = vshll.u32 %v2284, 16
        %v2358 = vor.u32 %v2355, %v2356
        %v2359 = vrot.slane %v2355, 4
        %v2361 = vshrl.u32 %v2285, 16
        %v2363 = vrot.slane %v2361, 7
        %v2364 = vshll.u32 %v2285, 16
        %v2366 = vor.u32 %v2363, %v2364
        %v2367 = vsel %vm2300, %v2359, %v2366
        %v2368 = vrot.slane %v2363, 4
        %v2370 = vshrl.u32 %v2286, 16
        %v2372 = vrot.slane %v2370, 7
        %v2373 = vshll.u32 %v2286, 16
        %v2375 = vor.u32 %v2372, %v2373
        %v2376 = vrot.slane %v2372, 4
        %v2378 = vshrl.u32 %v2287, 16
        %v2380 = vrot.slane %v2378, 7
        %v2381 = vshll.u32 %v2287, 16
        %v2383 = vor.u32 %v2380, %v2381
        %v2384 = vsel %vm2300, %v2376, %v2383
        %v2385 = vrot.slane %v2380, 4
        %v2387 = vshrl.u32 %v2288, 16
        %v2389 = vrot.slane %v2387, 7
        %v2390 = vshll.u32 %v2288, 16
        %v2392 = vor.u32 %v2389, %v2390
        %v2393 = vrot.slane %v2389, 4
        %v2395 = vshrl.u32 %v2289, 16
        %v2397 = vrot.slane %v2395, 7
        %v2398 = vshll.u32 %v2289, 16
        %v2400 = vor.u32 %v2397, %v2398
        %v2401 = vsel %vm2300, %v2393, %v2400
        %v2402 = vrot.slane %v2397, 4
        %v2404 = vshrl.u32 %v2290, 16
        %v2406 = vrot.slane %v2404, 7
        %v2407 = vshll.u32 %v2290, 16
        %v2409 = vor.u32 %v2406, %v2407
        %v2410 = vrot.slane %v2406, 4
        %v2412 = vshrl.u32 %v2291, 16
        %v2414 = vrot.slane %v2412, 7
        %v2415 = vshll.u32 %v2291, 16
        %v2417 = vor.u32 %v2414, %v2415
        %v2418 = vsel %vm2300, %v2410, %v2417
        %v2419 = vrot.slane %v2414, 4
        %v2421 = vshrl.u32 %v2292, 16
        %v2423 = vrot.slane %v2421, 7
        %v2424 = vshll.u32 %v2292, 16
        %v2426 = vor.u32 %v2423, %v2424
        %v2427 = vrot.slane %v2423, 4
        %v2429 = vshrl.u32 %v2293, 16
        %v2431 = vrot.slane %v2429, 7
        %v2432 = vshll.u32 %v2293, 16
        %v2434 = vor.u32 %v2431, %v2432
        %v2435 = vsel %vm2300, %v2427, %v2434
        %v2436 = vrot.slane %v2431, 4
        %v2438 = vshrl.u32 %v2294, 16
        %v2440 = vrot.slane %v2438, 7
        %v2441 = vshll.u32 %v2294, 16
        %v2443 = vor.u32 %v2440, %v2441
        %v2444 = vrot.slane %v2440, 4
        %v2446 = vshrl.u32 %v2295, 16
        %v2448 = vrot.slane %v2446, 7
        %v2449 = vshll.u32 %v2295, 16
        %v2451 = vor.u32 %v2448, %v2449
        %v2452 = vsel %vm2300, %v2444, %v2451
        %v2453 = vrot.slane %v2448, 4
        %v2455 = vshrl.u32 %v2296, 16
        %v2457 = vrot.slane %v2455, 7
        %v2458 = vshll.u32 %v2296, 16
        %v2460 = vor.u32 %v2457, %v2458
        %v2461 = vrot.slane %v2457, 4
        %v2463 = vshrl.u32 %v2297, 16
        %v2465 = vrot.slane %v2463, 7
        %v2466 = vshll.u32 %v2297, 16
        %v2468 = vor.u32 %v2465, %v2466
        %v2469 = vsel %vm2300, %v2461, %v2468
        %v2470 = vrot.slane %v2465, 4
        %vm2501 = vcmask 60416
        %vm2502 = vsmask.f32 7938
        %vm2503 = vmand %vm2501, %vm2502
        %v2504 = vld [vmem:[#allocation3] sm:$0xf]
        %v2505 = vsel %vm2503, %v2307, %v2504
        %2506 = vst [vmem:[#allocation3] sm:$0xf] %v2505
        %vm2507 = vcmask 60416
        %2508 = vst.msk [vmem:[#allocation3 + $0x4] sm:$0xf] %vm2507, %v2316
        %vm2509 = vcmask 57344
        %vm2510 = vmand %vm2509, %vm2298
        %v2511 = vld [vmem:[#allocation3 + $0x8] sm:$0x1]
        %v2512 = vsel %vm2510, %v2317, %v2511
        %2513 = vst [vmem:[#allocation3 + $0x8] sm:$0x1] %v2512
        %v2514 = vld [vmem:[#allocation3 + $0xc] sm:$0xf]
        %v2515 = vsel %vm2503, %v2324, %v2514
        %2516 = vst [vmem:[#allocation3 + $0xc] sm:$0xf] %v2515
        %2517 = vst.msk [vmem:[#allocation3 + $0x10] sm:$0xf] %vm2507, %v2333
        %v2518 = vld [vmem:[#allocation3 + $0x14] sm:$0x1]
        %v2519 = vsel %vm2510, %v2334, %v2518
        %2520 = vst [vmem:[#allocation3 + $0x14] sm:$0x1] %v2519
        %v2521 = vld [vmem:[#allocation3 + $0x18] sm:$0xf]
        %v2522 = vsel %vm2503, %v2341, %v2521
        %2523 = vst [vmem:[#allocation3 + $0x18] sm:$0xf] %v2522
        %2524 = vst.msk [vmem:[#allocation3 + $0x1c] sm:$0xf] %vm2507, %v2350
        %v2525 = vld [vmem:[#allocation3 + $0x20] sm:$0x1]
        %v2526 = vsel %vm2510, %v2351, %v2525
        %2527 = vst [vmem:[#allocation3 + $0x20] sm:$0x1] %v2526
        %v2528 = vld [vmem:[#allocation3 + $0x24] sm:$0xf]
        %v2529 = vsel %vm2503, %v2358, %v2528
        %2530 = vst [vmem:[#allocation3 + $0x24] sm:$0xf] %v2529
        %2531 = vst.msk [vmem:[#allocation3 + $0x28] sm:$0xf] %vm2507, %v2367
        %v2532 = vld [vmem:[#allocation3 + $0x2c] sm:$0x1]
        %v2533 = vsel %vm2510, %v2368, %v2532
        %2534 = vst [vmem:[#allocation3 + $0x2c] sm:$0x1] %v2533
        %v2535 = vld [vmem:[#allocation3 + $0x30] sm:$0xf]
        %v2536 = vsel %vm2503, %v2375, %v2535
        %2537 = vst [vmem:[#allocation3 + $0x30] sm:$0xf] %v2536
        %2538 = vst.msk [vmem:[#allocation3 + $0x34] sm:$0xf] %vm2507, %v2384
        %v2539 = vld [vmem:[#allocation3 + $0x38] sm:$0x1]
        %v2540 = vsel %vm2510, %v2385, %v2539
        %2541 = vst [vmem:[#allocation3 + $0x38] sm:$0x1] %v2540
        %v2542 = vld [vmem:[#allocation3 + $0x3c] sm:$0xf]
        %v2543 = vsel %vm2503, %v2392, %v2542
        %2544 = vst [vmem:[#allocation3 + $0x3c] sm:$0xf] %v2543
        %2545 = vst.msk [vmem:[#allocation3 + $0x40] sm:$0xf] %vm2507, %v2401
        %v2546 = vld [vmem:[#allocation3 + $0x44] sm:$0x1]
        %v2547 = vsel %vm2510, %v2402, %v2546
        %2548 = vst [vmem:[#allocation3 + $0x44] sm:$0x1] %v2547
        %v2549 = vld [vmem:[#allocation3 + $0x48] sm:$0xf]
        %v2550 = vsel %vm2503, %v2409, %v2549
        %2551 = vst [vmem:[#allocation3 + $0x48] sm:$0xf] %v2550
        %2552 = vst.msk [vmem:[#allocation3 + $0x4c] sm:$0xf] %vm2507, %v2418
        %v2553 = vld [vmem:[#allocation3 + $0x50] sm:$0x1]
        %v2554 = vsel %vm2510, %v2419, %v2553
        %2555 = vst [vmem:[#allocation3 + $0x50] sm:$0x1] %v2554
        %v2556 = vld [vmem:[#allocation3 + $0x54] sm:$0xf]
        %v2557 = vsel %vm2503, %v2426, %v2556
        %2558 = vst [vmem:[#allocation3 + $0x54] sm:$0xf] %v2557
        %2559 = vst.msk [vmem:[#allocation3 + $0x58] sm:$0xf] %vm2507, %v2435
        %v2560 = vld [vmem:[#allocation3 + $0x5c] sm:$0x1]
        %v2561 = vsel %vm2510, %v2436, %v2560
        %2562 = vst [vmem:[#allocation3 + $0x5c] sm:$0x1] %v2561
        %v2563 = vld [vmem:[#allocation3 + $0x60] sm:$0xf]
        %v2564 = vsel %vm2503, %v2443, %v2563
        %2565 = vst [vmem:[#allocation3 + $0x60] sm:$0xf] %v2564
        %2566 = vst.msk [vmem:[#allocation3 + $0x64] sm:$0xf] %vm2507, %v2452
        %v2567 = vld [vmem:[#allocation3 + $0x68] sm:$0x1]
        %v2568 = vsel %vm2510, %v2453, %v2567
        %2569 = vst [vmem:[#allocation3 + $0x68] sm:$0x1] %v2568
        %v2570 = vld [vmem:[#allocation3 + $0x6c] sm:$0xf]
        %v2571 = vsel %vm2503, %v2460, %v2570
        %2572 = vst [vmem:[#allocation3 + $0x6c] sm:$0xf] %v2571
        %2573 = vst.msk [vmem:[#allocation3 + $0x70] sm:$0xf] %vm2507, %v2469
        %v2574 = vld [vmem:[#allocation3 + $0x74] sm:$0x1]
        %v2575 = vsel %vm2510, %v2470, %v2574
        %2576 = vst [vmem:[#allocation3 + $0x74] sm:$0x1] %v2575
        // Predicated region
        $region53: #{tpu_custom_call.1} parent=47 // pred_check
          %p2577 = pneg %p294
        $region54: #{tpu_custom_call.1} parent=47 // pred_check_branch
          %2579 = sbr.rel (%p2577) target = $region56
        $region55: #{tpu_custom_call.1} parent=47 // pred_region
          %v2580 = vld [vmem:[#allocation3] sm:$0xf]
          %v2581 = vsel %vm2503, 0, %v2580
          %2582 = vst [vmem:[#allocation3] sm:$0xf] %v2581
          %2583 = vst.msk [vmem:[#allocation3 + $0x4] sm:$0xf] %vm2507, 0
          %v2584 = vld [vmem:[#allocation3 + $0x8] sm:$0x1]
          %v2585 = vsel %vm2510, 0, %v2584
          %2586 = vst [vmem:[#allocation3 + $0x8] sm:$0x1] %v2585
        $region56: #{tpu_custom_call.1} parent=47 // pred_fallthru
          _
        %p2587 = scmp.eq.s32.totalorder %s26, 1
        // Predicated region
        $region57: #{tpu_custom_call.1} parent=47 // pred_check
          %p2588 = pneg %p2587
        $region58: #{tpu_custom_call.1} parent=47 // pred_check_branch
          %2590 = sbr.rel (%p2588) target = $region60
        $region59: #{tpu_custom_call.1} parent=47 // pred_region
          %s2591 = scalar_lea.vmem [#allocation3], 108
          %v2592 = vld [vmem:[%s2591] sm:$0xf]
          %v2593 = vsel %vm2503, 0, %v2592
          %2594 = vst [vmem:[%s2591] sm:$0xf] %v2593
          %2595 = vst.msk [vmem:[%s2591 + $0x4] sm:$0xf] %vm2507, 0
          %v2596 = vld [vmem:[%s2591 + $0x8] sm:$0x1]
          %v2597 = vsel %vm2510, 0, %v2596
          %2598 = vst [vmem:[%s2591 + $0x8] sm:$0x1] %v2597
        $region60: #{tpu_custom_call.1} parent=47 // pred_fallthru
          _
        %v2599 = vld [vmem:[#allocation3] sm:$0xf]
        %v2600 = vld [vmem:[#allocation3 + $0x4] sm:$0xf]
        %v2601 = vld [vmem:[#allocation3 + $0x8] sm:$0x1]
        %v2602 = vld [vmem:[#allocation3 + $0xc] sm:$0xf]
        %v2603 = vld [vmem:[#allocation3 + $0x10] sm:$0xf]
        %v2604 = vld [vmem:[#allocation3 + $0x14] sm:$0x1]
        %v2605 = vld [vmem:[#allocation3 + $0x18] sm:$0xf]
        %v2606 = vld [vmem:[#allocation3 + $0x1c] sm:$0xf]
        %v2607 = vld [vmem:[#allocation3 + $0x20] sm:$0x1]
        %v2608 = vld [vmem:[#allocation3 + $0x24] sm:$0xf]
        %v2609 = vld [vmem:[#allocation3 + $0x28] sm:$0xf]
        %v2610 = vld [vmem:[#allocation3 + $0x2c] sm:$0x1]
        %v2611 = vld [vmem:[#allocation3 + $0x30] sm:$0xf]
        %v2612 = vld [vmem:[#allocation3 + $0x34] sm:$0xf]
        %v2613 = vld [vmem:[#allocation3 + $0x38] sm:$0x1]
        %v2614 = vld [vmem:[#allocation3 + $0x3c] sm:$0xf]
        %v2615 = vld [vmem:[#allocation3 + $0x40] sm:$0xf]
        %v2616 = vld [vmem:[#allocation3 + $0x44] sm:$0x1]
        %v2617 = vld [vmem:[#allocation3 + $0x48] sm:$0xf]
        %v2618 = vld [vmem:[#allocation3 + $0x4c] sm:$0xf]
        %v2619 = vld [vmem:[#allocation3 + $0x50] sm:$0x1]
        %v2620 = vld [vmem:[#allocation3 + $0x54] sm:$0xf]
        %v2621 = vld [vmem:[#allocation3 + $0x58] sm:$0xf]
        %v2622 = vld [vmem:[#allocation3 + $0x5c] sm:$0x1]
        %v2623 = vld [vmem:[#allocation3 + $0x60] sm:$0xf]
        %v2624 = vld [vmem:[#allocation3 + $0x64] sm:$0xf]
        %v2625 = vld [vmem:[#allocation3 + $0x68] sm:$0x1]
        %v2626 = vld [vmem:[#allocation3 + $0x6c] sm:$0xf]
        %v2627 = vld [vmem:[#allocation3 + $0x70] sm:$0xf]
        %v2628 = vld [vmem:[#allocation3 + $0x74] sm:$0x1]
        %v2630 = vshrl.u32 %v2599, 16
        %v2632 = vrot.slane %v2630, 4
        %v2633 = vshll.u32 %v2599, 16
        %v2635 = vrot.slane %v2633, 5
        %v2636 = vor.u32 %v2632, %v2635
        %v2637 = vrot.slane %v2636, 4
        %v2639 = vshll.u32 %v2600, 16
        %v2641 = vrot.slane %v2639, 5
        %v2642 = vsel %vm1107, %v2637, %v2641
        %v2643 = vshrl.u32 %v2600, 16
        %v2645 = vrot.slane %v2643, 4
        %v2646 = vor.u32 %v2645, %v2641
        %v2647 = vrot.slane %v2646, 4
        %v2649 = vshll.u32 %v2601, 16
        %v2651 = vrot.slane %v2649, 5
        %v2652 = vsel %vm1107, %v2647, %v2651
        %v2654 = vshrl.u32 %v2602, 16
        %v2656 = vrot.slane %v2654, 4
        %v2657 = vshll.u32 %v2602, 16
        %v2659 = vrot.slane %v2657, 5
        %v2660 = vor.u32 %v2656, %v2659
        %v2661 = vrot.slane %v2660, 4
        %v2663 = vshll.u32 %v2603, 16
        %v2665 = vrot.slane %v2663, 5
        %v2666 = vsel %vm1107, %v2661, %v2665
        %v2667 = vshrl.u32 %v2603, 16
        %v2669 = vrot.slane %v2667, 4
        %v2670 = vor.u32 %v2669, %v2665
        %v2671 = vrot.slane %v2670, 4
        %v2673 = vshll.u32 %v2604, 16
        %v2675 = vrot.slane %v2673, 5
        %v2676 = vsel %vm1107, %v2671, %v2675
        %v2678 = vshrl.u32 %v2605, 16
        %v2680 = vrot.slane %v2678, 4
        %v2681 = vshll.u32 %v2605, 16
        %v2683 = vrot.slane %v2681, 5
        %v2684 = vor.u32 %v2680, %v2683
        %v2685 = vrot.slane %v2684, 4
        %v2687 = vshll.u32 %v2606, 16
        %v2689 = vrot.slane %v2687, 5
        %v2690 = vsel %vm1107, %v2685, %v2689
        %v2691 = vshrl.u32 %v2606, 16
        %v2693 = vrot.slane %v2691, 4
        %v2694 = vor.u32 %v2693, %v2689
        %v2695 = vrot.slane %v2694, 4
        %v2697 = vshll.u32 %v2607, 16
        %v2699 = vrot.slane %v2697, 5
        %v2700 = vsel %vm1107, %v2695, %v2699
        %v2702 = vshrl.u32 %v2608, 16
        %v2704 = vrot.slane %v2702, 4
        %v2705 = vshll.u32 %v2608, 16
        %v2707 = vrot.slane %v2705, 5
        %v2708 = vor.u32 %v2704, %v2707
        %v2709 = vrot.slane %v2708, 4
        %v2711 = vshll.u32 %v2609, 16
        %v2713 = vrot.slane %v2711, 5
        %v2714 = vsel %vm1107, %v2709, %v2713
        %v2715 = vshrl.u32 %v2609, 16
        %v2717 = vrot.slane %v2715, 4
        %v2718 = vor.u32 %v2717, %v2713
        %v2719 = vrot.slane %v2718, 4
        %v2721 = vshll.u32 %v2610, 16
        %v2723 = vrot.slane %v2721, 5
        %v2724 = vsel %vm1107, %v2719, %v2723
        %v2726 = vshrl.u32 %v2611, 16
        %v2728 = vrot.slane %v2726, 4
        %v2729 = vshll.u32 %v2611, 16
        %v2731 = vrot.slane %v2729, 5
        %v2732 = vor.u32 %v2728, %v2731
        %v2733 = vrot.slane %v2732, 4
        %v2735 = vshll.u32 %v2612, 16
        %v2737 = vrot.slane %v2735, 5
        %v2738 = vsel %vm1107, %v2733, %v2737
        %v2739 = vshrl.u32 %v2612, 16
        %v2741 = vrot.slane %v2739, 4
        %v2742 = vor.u32 %v2741, %v2737
        %v2743 = vrot.slane %v2742, 4
        %v2745 = vshll.u32 %v2613, 16
        %v2747 = vrot.slane %v2745, 5
        %v2748 = vsel %vm1107, %v2743, %v2747
        %v2750 = vshrl.u32 %v2614, 16
        %v2752 = vrot.slane %v2750, 4
        %v2753 = vshll.u32 %v2614, 16
        %v2755 = vrot.slane %v2753, 5
        %v2756 = vor.u32 %v2752, %v2755
        %v2757 = vrot.slane %v2756, 4
        %v2759 = vshll.u32 %v2615, 16
        %v2761 = vrot.slane %v2759, 5
        %v2762 = vsel %vm1107, %v2757, %v2761
        %v2763 = vshrl.u32 %v2615, 16
        %v2765 = vrot.slane %v2763, 4
        %v2766 = vor.u32 %v2765, %v2761
        %v2767 = vrot.slane %v2766, 4
        %v2769 = vshll.u32 %v2616, 16
        %v2771 = vrot.slane %v2769, 5
        %v2772 = vsel %vm1107, %v2767, %v2771
        %v2774 = vshrl.u32 %v2617, 16
        %v2776 = vrot.slane %v2774, 4
        %v2777 = vshll.u32 %v2617, 16
        %v2779 = vrot.slane %v2777, 5
        %v2780 = vor.u32 %v2776, %v2779
        %v2781 = vrot.slane %v2780, 4
        %v2783 = vshll.u32 %v2618, 16
        %v2785 = vrot.slane %v2783, 5
        %v2786 = vsel %vm1107, %v2781, %v2785
        %v2787 = vshrl.u32 %v2618, 16
        %v2789 = vrot.slane %v2787, 4
        %v2790 = vor.u32 %v2789, %v2785
        %v2791 = vrot.slane %v2790, 4
        %v2793 = vshll.u32 %v2619, 16
        %v2795 = vrot.slane %v2793, 5
        %v2796 = vsel %vm1107, %v2791, %v2795
        %v2798 = vshrl.u32 %v2620, 16
        %v2800 = vrot.slane %v2798, 4
        %v2801 = vshll.u32 %v2620, 16
        %v2803 = vrot.slane %v2801, 5
        %v2804 = vor.u32 %v2800, %v2803
        %v2805 = vrot.slane %v2804, 4
        %v2807 = vshll.u32 %v2621, 16
        %v2809 = vrot.slane %v2807, 5
        %v2810 = vsel %vm1107, %v2805, %v2809
        %v2811 = vshrl.u32 %v2621, 16
        %v2813 = vrot.slane %v2811, 4
        %v2814 = vor.u32 %v2813, %v2809
        %v2815 = vrot.slane %v2814, 4
        %v2817 = vshll.u32 %v2622, 16
        %v2819 = vrot.slane %v2817, 5
        %v2820 = vsel %vm1107, %v2815, %v2819
        %v2845 = vrot.slane %v2599, 5
        %v2846 = vrot.slane %v2845, 4
        %v2847 = vrot.slane %v2600, 5
        %v2848 = vsel %vm1380, %v2846, %v2847
        %v2849 = vrot.slane %v2847, 4
        %v2850 = vrot.slane %v2601, 5
        %v2851 = vsel %vm1380, %v2849, %v2850
        %v2852 = vrot.slane %v2602, 5
        %v2853 = vrot.slane %v2852, 4
        %v2854 = vrot.slane %v2603, 5
        %v2855 = vsel %vm1380, %v2853, %v2854
        %v2856 = vrot.slane %v2854, 4
        %v2857 = vrot.slane %v2604, 5
        %v2858 = vsel %vm1380, %v2856, %v2857
        %v2859 = vrot.slane %v2605, 5
        %v2860 = vrot.slane %v2859, 4
        %v2861 = vrot.slane %v2606, 5
        %v2862 = vsel %vm1380, %v2860, %v2861
        %v2863 = vrot.slane %v2861, 4
        %v2864 = vrot.slane %v2607, 5
        %v2865 = vsel %vm1380, %v2863, %v2864
        %v2866 = vrot.slane %v2608, 5
        %v2867 = vrot.slane %v2866, 4
        %v2868 = vrot.slane %v2609, 5
        %v2869 = vsel %vm1380, %v2867, %v2868
        %v2870 = vrot.slane %v2868, 4
        %v2871 = vrot.slane %v2610, 5
        %v2872 = vsel %vm1380, %v2870, %v2871
        %v2873 = vrot.slane %v2611, 5
        %v2874 = vrot.slane %v2873, 4
        %v2875 = vrot.slane %v2612, 5
        %v2876 = vsel %vm1380, %v2874, %v2875
        %v2877 = vrot.slane %v2875, 4
        %v2878 = vrot.slane %v2613, 5
        %v2879 = vsel %vm1380, %v2877, %v2878
        %v2880 = vrot.slane %v2614, 5
        %v2881 = vrot.slane %v2880, 4
        %v2882 = vrot.slane %v2615, 5
        %v2883 = vsel %vm1380, %v2881, %v2882
        %v2884 = vrot.slane %v2882, 4
        %v2885 = vrot.slane %v2616, 5
        %v2886 = vsel %vm1380, %v2884, %v2885
        %v2887 = vrot.slane %v2617, 5
        %v2888 = vrot.slane %v2887, 4
        %v2889 = vrot.slane %v2618, 5
        %v2890 = vsel %vm1380, %v2888, %v2889
        %v2891 = vrot.slane %v2889, 4
        %v2892 = vrot.slane %v2619, 5
        %v2893 = vsel %vm1380, %v2891, %v2892
        %v2894 = vrot.slane %v2620, 5
        %v2895 = vrot.slane %v2894, 4
        %v2896 = vrot.slane %v2621, 5
        %v2897 = vsel %vm1380, %v2895, %v2896
        %v2898 = vrot.slane %v2896, 4
        %v2899 = vrot.slane %v2622, 5
        %v2900 = vsel %vm1380, %v2898, %v2899
        %v2902 = vshrl.u32 %v2623, 16
        %v2904 = vrot.slane %v2902, 4
        %v2905 = vshll.u32 %v2623, 16
        %v2907 = vrot.slane %v2905, 5
        %v2908 = vor.u32 %v2904, %v2907
        %v2909 = vrot.slane %v2908, 4
        %v2911 = vshll.u32 %v2624, 16
        %v2913 = vrot.slane %v2911, 5
        %v2914 = vsel %vm1107, %v2909, %v2913
        %v2915 = vshrl.u32 %v2624, 16
        %v2917 = vrot.slane %v2915, 4
        %v2918 = vor.u32 %v2917, %v2913
        %v2919 = vrot.slane %v2918, 4
        %v2921 = vshll.u32 %v2625, 16
        %v2923 = vrot.slane %v2921, 5
        %v2924 = vsel %vm1107, %v2919, %v2923
        %v2928 = vrot.slane %v2623, 5
        %v2929 = vrot.slane %v2928, 4
        %v2930 = vrot.slane %v2624, 5
        %v2931 = vsel %vm1380, %v2929, %v2930
        %v2932 = vrot.slane %v2930, 4
        %v2933 = vrot.slane %v2625, 5
        %v2934 = vsel %vm1380, %v2932, %v2933
        %v2936 = vshrl.u32 %v2626, 16
        %v2938 = vrot.slane %v2936, 4
        %v2939 = vshll.u32 %v2626, 16
        %v2941 = vrot.slane %v2939, 5
        %v2942 = vor.u32 %v2938, %v2941
        %v2943 = vrot.slane %v2942, 4
        %v2945 = vshll.u32 %v2627, 16
        %v2947 = vrot.slane %v2945, 5
        %v2948 = vsel %vm1107, %v2943, %v2947
        %v2949 = vshrl.u32 %v2627, 16
        %v2951 = vrot.slane %v2949, 4
        %v2952 = vor.u32 %v2951, %v2947
        %v2953 = vrot.slane %v2952, 4
        %v2955 = vshll.u32 %v2628, 16
        %v2957 = vrot.slane %v2955, 5
        %v2958 = vsel %vm1107, %v2953, %v2957
        %v2962 = vrot.slane %v2626, 5
        %v2963 = vrot.slane %v2962, 4
        %v2964 = vrot.slane %v2627, 5
        %v2965 = vsel %vm1380, %v2963, %v2964
        %v2966 = vrot.slane %v2964, 4
        %v2967 = vrot.slane %v2628, 5
        %v2968 = vsel %vm1380, %v2966, %v2967
        %v2969 = vunpack.c.l.b16 %v2599
        %v2970 = vunpack.c.l.b16 %v2600
        %v2971 = vunpack.c.l.b16 %v2602
        %v2972 = vunpack.c.l.b16 %v2603
        %v2973 = vunpack.c.l.b16 %v2605
        %v2974 = vunpack.c.l.b16 %v2606
        %v2975 = vunpack.c.l.b16 %v2608
        %v2976 = vunpack.c.l.b16 %v2609
        %v2977 = vunpack.c.l.b16 %v2611
        %v2978 = vunpack.c.l.b16 %v2612
        %v2979 = vunpack.c.l.b16 %v2614
        %v2980 = vunpack.c.l.b16 %v2615
        %v2981 = vunpack.c.l.b16 %v2617
        %v2982 = vunpack.c.l.b16 %v2618
        %v2983 = vunpack.c.l.b16 %v2620
        %v2984 = vunpack.c.l.b16 %v2621
        %v2985 = vpack.c.b16 %v2970, %v2969
        %v2986 = vpack.c.b16 %v2972, %v2971
        %v2987 = vpack.c.b16 %v2974, %v2973
        %v2988 = vpack.c.b16 %v2976, %v2975
        %v2989 = vpack.c.b16 %v2978, %v2977
        %v2990 = vpack.c.b16 %v2980, %v2979
        %v2991 = vpack.c.b16 %v2982, %v2981
        %v2992 = vpack.c.b16 %v2984, %v2983
        %v2993 = vunpack.c.l.b16 %v2642
        %v2994 = vunpack.c.l.b16 %v2652
        %v2995 = vunpack.c.l.b16 %v2666
        %v2996 = vunpack.c.l.b16 %v2676
        %v2997 = vunpack.c.l.b16 %v2690
        %v2998 = vunpack.c.l.b16 %v2700
        %v2999 = vunpack.c.l.b16 %v2714
        %v3000 = vunpack.c.l.b16 %v2724
        %v3001 = vunpack.c.l.b16 %v2738
        %v3002 = vunpack.c.l.b16 %v2748
        %v3003 = vunpack.c.l.b16 %v2762
        %v3004 = vunpack.c.l.b16 %v2772
        %v3005 = vunpack.c.l.b16 %v2786
        %v3006 = vunpack.c.l.b16 %v2796
        %v3007 = vunpack.c.l.b16 %v2810
        %v3008 = vunpack.c.l.b16 %v2820
        %v3009 = vpack.c.b16 %v2994, %v2993
        %v3010 = vpack.c.b16 %v2996, %v2995
        %v3011 = vpack.c.b16 %v2998, %v2997
        %v3012 = vpack.c.b16 %v3000, %v2999
        %v3013 = vpack.c.b16 %v3002, %v3001
        %v3014 = vpack.c.b16 %v3004, %v3003
        %v3015 = vpack.c.b16 %v3006, %v3005
        %v3016 = vpack.c.b16 %v3008, %v3007
        %3017 = vrot.lane.b32.xlu0 %v3009, 8
        %v3018 = vpop.permute.xlu0 %3017
        %3019 = vrot.lane.b32.xlu0 %v3010, 8
        %v3020 = vpop.permute.xlu0 %3019
        %3021 = vrot.lane.b32.xlu0 %v3011, 8
        %v3022 = vpop.permute.xlu0 %3021
        %3023 = vrot.lane.b32.xlu0 %v3012, 8
        %v3024 = vpop.permute.xlu0 %3023
        %3025 = vrot.lane.b32.xlu0 %v3013, 8
        %v3026 = vpop.permute.xlu0 %3025
        %3027 = vrot.lane.b32.xlu0 %v3014, 8
        %v3028 = vpop.permute.xlu0 %3027
        %3029 = vrot.lane.b32.xlu0 %v3015, 8
        %v3030 = vpop.permute.xlu0 %3029
        %3031 = vrot.lane.b32.xlu0 %v3016, 8
        %v3032 = vpop.permute.xlu0 %3031
        %v3033 = vunpack.c.l.b16 %v2848
        %v3034 = vunpack.c.l.b16 %v2851
        %v3035 = vunpack.c.l.b16 %v2855
        %v3036 = vunpack.c.l.b16 %v2858
        %v3037 = vunpack.c.l.b16 %v2862
        %v3038 = vunpack.c.l.b16 %v2865
        %v3039 = vunpack.c.l.b16 %v2869
        %v3040 = vunpack.c.l.b16 %v2872
        %v3041 = vunpack.c.l.b16 %v2876
        %v3042 = vunpack.c.l.b16 %v2879
        %v3043 = vunpack.c.l.b16 %v2883
        %v3044 = vunpack.c.l.b16 %v2886
        %v3045 = vunpack.c.l.b16 %v2890
        %v3046 = vunpack.c.l.b16 %v2893
        %v3047 = vunpack.c.l.b16 %v2897
        %v3048 = vunpack.c.l.b16 %v2900
        %v3049 = vpack.c.b16 %v3034, %v3033
        %v3050 = vpack.c.b16 %v3036, %v3035
        %v3051 = vpack.c.b16 %v3038, %v3037
        %v3052 = vpack.c.b16 %v3040, %v3039
        %v3053 = vpack.c.b16 %v3042, %v3041
        %v3054 = vpack.c.b16 %v3044, %v3043
        %v3055 = vpack.c.b16 %v3046, %v3045
        %v3056 = vpack.c.b16 %v3048, %v3047
        %3057 = vrot.lane.b32.xlu0 %v3049, 16
        %v3058 = vpop.permute.xlu0 %3057
        %3059 = vrot.lane.b32.xlu0 %v3050, 16
        %v3060 = vpop.permute.xlu0 %3059
        %3061 = vrot.lane.b32.xlu0 %v3051, 16
        %v3062 = vpop.permute.xlu0 %3061
        %3063 = vrot.lane.b32.xlu0 %v3052, 16
        %v3064 = vpop.permute.xlu0 %3063
        %3065 = vrot.lane.b32.xlu0 %v3053, 16
        %v3066 = vpop.permute.xlu0 %3065
        %3067 = vrot.lane.b32.xlu0 %v3054, 16
        %v3068 = vpop.permute.xlu0 %3067
        %3069 = vrot.lane.b32.xlu0 %v3055, 16
        %v3070 = vpop.permute.xlu0 %3069
        %3071 = vrot.lane.b32.xlu0 %v3056, 16
        %v3072 = vpop.permute.xlu0 %3071
        %v3073 = vunpack.c.l.b16 %v2623
        %v3074 = vunpack.c.l.b16 %v2624
        %v3075 = vpack.c.b16 %v3074, %v3073
        %3076 = vrot.lane.b32.xlu0 %v2986, 24
        %v3077 = vpop.permute.xlu0 %3076
        %3078 = vrot.lane.b32.xlu0 %v2987, 24
        %v3079 = vpop.permute.xlu0 %3078
        %3080 = vrot.lane.b32.xlu0 %v2988, 24
        %v3081 = vpop.permute.xlu0 %3080
        %3082 = vrot.lane.b32.xlu0 %v2989, 24
        %v3083 = vpop.permute.xlu0 %3082
        %3084 = vrot.lane.b32.xlu0 %v2990, 24
        %v3085 = vpop.permute.xlu0 %3084
        %3086 = vrot.lane.b32.xlu0 %v2991, 24
        %v3087 = vpop.permute.xlu0 %3086
        %3088 = vrot.lane.b32.xlu0 %v2992, 24
        %v3089 = vpop.permute.xlu0 %3088
        %3090 = vrot.lane.b32.xlu0 %v3075, 24
        %v3091 = vpop.permute.xlu0 %3090
        %v3092 = vunpack.c.l.b16 %v2914
        %v3093 = vunpack.c.l.b16 %v2924
        %v3094 = vpack.c.b16 %v3093, %v3092
        %3095 = vrot.lane.b32.xlu0 %v3010, 32
        %v3096 = vpop.permute.xlu0 %3095
        %3097 = vrot.lane.b32.xlu0 %v3011, 32
        %v3098 = vpop.permute.xlu0 %3097
        %3099 = vrot.lane.b32.xlu0 %v3012, 32
        %v3100 = vpop.permute.xlu0 %3099
        %3101 = vrot.lane.b32.xlu0 %v3013, 32
        %v3102 = vpop.permute.xlu0 %3101
        %3103 = vrot.lane.b32.xlu0 %v3014, 32
        %v3104 = vpop.permute.xlu0 %3103
        %3105 = vrot.lane.b32.xlu0 %v3015, 32
        %v3106 = vpop.permute.xlu0 %3105
        %3107 = vrot.lane.b32.xlu0 %v3016, 32
        %v3108 = vpop.permute.xlu0 %3107
        %3109 = vrot.lane.b32.xlu0 %v3094, 32
        %v3110 = vpop.permute.xlu0 %3109
        %v3111 = vunpack.c.l.b16 %v2931
        %v3112 = vunpack.c.l.b16 %v2934
        %v3113 = vpack.c.b16 %v3112, %v3111
        %3114 = vrot.lane.b32.xlu0 %v3050, 40
        %v3115 = vpop.permute.xlu0 %3114
        %3116 = vrot.lane.b32.xlu0 %v3051, 40
        %v3117 = vpop.permute.xlu0 %3116
        %3118 = vrot.lane.b32.xlu0 %v3052, 40
        %v3119 = vpop.permute.xlu0 %3118
        %3120 = vrot.lane.b32.xlu0 %v3053, 40
        %v3121 = vpop.permute.xlu0 %3120
        %3122 = vrot.lane.b32.xlu0 %v3054, 40
        %v3123 = vpop.permute.xlu0 %3122
        %3124 = vrot.lane.b32.xlu0 %v3055, 40
        %v3125 = vpop.permute.xlu0 %3124
        %3126 = vrot.lane.b32.xlu0 %v3056, 40
        %v3127 = vpop.permute.xlu0 %3126
        %3128 = vrot.lane.b32.xlu0 %v3113, 40
        %v3129 = vpop.permute.xlu0 %3128
        %v3130 = vunpack.c.l.b16 %v2626
        %v3131 = vunpack.c.l.b16 %v2627
        %v3132 = vpack.c.b16 %v3131, %v3130
        %3133 = vrot.lane.b32.xlu0 %v2987, 48
        %v3134 = vpop.permute.xlu0 %3133
        %3135 = vrot.lane.b32.xlu0 %v2988, 48
        %v3136 = vpop.permute.xlu0 %3135
        %3137 = vrot.lane.b32.xlu0 %v2989, 48
        %v3138 = vpop.permute.xlu0 %3137
        %3139 = vrot.lane.b32.xlu0 %v2990, 48
        %v3140 = vpop.permute.xlu0 %3139
        %3141 = vrot.lane.b32.xlu0 %v2991, 48
        %v3142 = vpop.permute.xlu0 %3141
        %3143 = vrot.lane.b32.xlu0 %v2992, 48
        %v3144 = vpop.permute.xlu0 %3143
        %3145 = vrot.lane.b32.xlu0 %v3075, 48
        %v3146 = vpop.permute.xlu0 %3145
        %3147 = vrot.lane.b32.xlu0 %v3132, 48
        %v3148 = vpop.permute.xlu0 %3147
        %v3149 = vunpack.c.l.b16 %v2948
        %v3150 = vunpack.c.l.b16 %v2958
        %v3151 = vpack.c.b16 %v3150, %v3149
        %3152 = vrot.lane.b32.xlu0 %v3011, 56
        %v3153 = vpop.permute.xlu0 %3152
        %3154 = vrot.lane.b32.xlu0 %v3012, 56
        %v3155 = vpop.permute.xlu0 %3154
        %3156 = vrot.lane.b32.xlu0 %v3013, 56
        %v3157 = vpop.permute.xlu0 %3156
        %3158 = vrot.lane.b32.xlu0 %v3014, 56
        %v3159 = vpop.permute.xlu0 %3158
        %3160 = vrot.lane.b32.xlu0 %v3015, 56
        %v3161 = vpop.permute.xlu0 %3160
        %3162 = vrot.lane.b32.xlu0 %v3016, 56
        %v3163 = vpop.permute.xlu0 %3162
        %3164 = vrot.lane.b32.xlu0 %v3094, 56
        %v3165 = vpop.permute.xlu0 %3164
        %3166 = vrot.lane.b32.xlu0 %v3151, 56
        %v3167 = vpop.permute.xlu0 %3166
        %v3168 = vunpack.c.l.b16 %v2965
        %v3169 = vunpack.c.l.b16 %v2968
        %v3170 = vpack.c.b16 %v3169, %v3168
        %3171 = vrot.lane.b32.xlu0 %v3051, 64
        %v3172 = vpop.permute.xlu0 %3171
        %3173 = vrot.lane.b32.xlu0 %v3052, 64
        %v3174 = vpop.permute.xlu0 %3173
        %3175 = vrot.lane.b32.xlu0 %v3053, 64
        %v3176 = vpop.permute.xlu0 %3175
        %3177 = vrot.lane.b32.xlu0 %v3054, 64
        %v3178 = vpop.permute.xlu0 %3177
        %3179 = vrot.lane.b32.xlu0 %v3055, 64
        %v3180 = vpop.permute.xlu0 %3179
        %3181 = vrot.lane.b32.xlu0 %v3056, 64
        %v3182 = vpop.permute.xlu0 %3181
        %3183 = vrot.lane.b32.xlu0 %v3113, 64
        %v3184 = vpop.permute.xlu0 %3183
        %3185 = vrot.lane.b32.xlu0 %v3170, 64
        %v3186 = vpop.permute.xlu0 %3185
        %v3189 = vsel %vm1818, %v2985, %v3018
        %v3192 = vsel %vm1818, %v2986, %v3020
        %v3195 = vsel %vm1818, %v2987, %v3022
        %v3198 = vsel %vm1818, %v2988, %v3024
        %v3201 = vsel %vm1818, %v2989, %v3026
        %v3204 = vsel %vm1818, %v2990, %v3028
        %v3207 = vsel %vm1818, %v2991, %v3030
        %v3210 = vsel %vm1818, %v2992, %v3032
        %v3212 = vsel %vm1860, %v3189, %v3058
        %v3214 = vsel %vm1860, %v3192, %v3060
        %v3216 = vsel %vm1860, %v3195, %v3062
        %v3218 = vsel %vm1860, %v3198, %v3064
        %v3220 = vsel %vm1860, %v3201, %v3066
        %v3222 = vsel %vm1860, %v3204, %v3068
        %v3224 = vsel %vm1860, %v3207, %v3070
        %v3226 = vsel %vm1860, %v3210, %v3072
        %v3228 = vsel %vm1902, %v3212, %v3077
        %v3230 = vsel %vm1902, %v3214, %v3079
        %v3232 = vsel %vm1902, %v3216, %v3081
        %v3234 = vsel %vm1902, %v3218, %v3083
        %v3236 = vsel %vm1902, %v3220, %v3085
        %v3238 = vsel %vm1902, %v3222, %v3087
        %v3240 = vsel %vm1902, %v3224, %v3089
        %v3242 = vsel %vm1902, %v3226, %v3091
        %v3244 = vsel %vm1944, %v3228, %v3096
        %v3246 = vsel %vm1944, %v3230, %v3098
        %v3248 = vsel %vm1944, %v3232, %v3100
        %v3250 = vsel %vm1944, %v3234, %v3102
        %v3252 = vsel %vm1944, %v3236, %v3104
        %v3254 = vsel %vm1944, %v3238, %v3106
        %v3256 = vsel %vm1944, %v3240, %v3108
        %v3258 = vsel %vm1944, %v3242, %v3110
        %vm3259 = vcmask 326656
        %v3261 = vsel %vm3259, %v3244, %v3115
        %v3263 = vsel %vm3259, %v3246, %v3117
        %v3265 = vsel %vm3259, %v3248, %v3119
        %v3267 = vsel %vm3259, %v3250, %v3121
        %v3269 = vsel %vm3259, %v3252, %v3123
        %v3271 = vsel %vm3259, %v3254, %v3125
        %v3273 = vsel %vm3259, %v3256, %v3127
        %v3275 = vsel %vm3259, %v3258, %v3129
        %vm3276 = vcmask 392192
        %v3278 = vsel %vm3276, %v3261, %v3134
        %v3280 = vsel %vm3276, %v3263, %v3136
        %v3282 = vsel %vm3276, %v3265, %v3138
        %v3284 = vsel %vm3276, %v3267, %v3140
        %v3286 = vsel %vm3276, %v3269, %v3142
        %v3288 = vsel %vm3276, %v3271, %v3144
        %v3290 = vsel %vm3276, %v3273, %v3146
        %v3292 = vsel %vm3276, %v3275, %v3148
        %vm3293 = vcmask 457728
        %v3295 = vsel %vm3293, %v3278, %v3153
        %v3297 = vsel %vm3293, %v3280, %v3155
        %v3299 = vsel %vm3293, %v3282, %v3157
        %v3301 = vsel %vm3293, %v3284, %v3159
        %v3303 = vsel %vm3293, %v3286, %v3161
        %v3305 = vsel %vm3293, %v3288, %v3163
        %v3307 = vsel %vm3293, %v3290, %v3165
        %v3309 = vsel %vm3293, %v3292, %v3167
        %vm3310 = vcmask 523264
        %v3312 = vsel %vm3310, %v3295, %v3172
        %v3314 = vsel %vm3310, %v3297, %v3174
        %v3316 = vsel %vm3310, %v3299, %v3176
        %v3318 = vsel %vm3310, %v3301, %v3178
        %v3320 = vsel %vm3310, %v3303, %v3180
        %v3322 = vsel %vm3310, %v3305, %v3182
        %v3324 = vsel %vm3310, %v3307, %v3184
        %v3326 = vsel %vm3310, %v3309, %v3186
        %vm3327 = vcmask 588800
        %v3328 = vsel %vm3327, %v3312, 0
        %v3330 = vsel %vm3327, %v3314, 0
        %v3332 = vsel %vm3327, %v3316, 0
        %v3334 = vsel %vm3327, %v3318, 0
        %v3336 = vsel %vm3327, %v3320, 0
        %v3338 = vsel %vm3327, %v3322, 0
        %v3340 = vsel %vm3327, %v3324, 0
        %v3342 = vsel %vm3327, %v3326, 0
        %v3344 = vld [vmem:[%s4] sm:$0xf]
        %v3345 = vld [vmem:[%s4 + $0x4] sm:$0xf]
        %v3346 = vld [vmem:[%s4 + $0x8] sm:$0xf]
        %v3347 = vld [vmem:[%s4 + $0xc] sm:$0xf]
        %v3348 = vld [vmem:[%s4 + $0x10] sm:$0xf]
        %v3349 = vld [vmem:[%s4 + $0x14] sm:$0xf]
        %v3350 = vld [vmem:[%s4 + $0x18] sm:$0xf]
        %v3351 = vld [vmem:[%s4 + $0x1c] sm:$0xf]
        %v3352 = vld [vmem:[%s4 + $0x20] sm:$0xf]
        %v3353 = vld [vmem:[%s4 + $0x24] sm:$0xf]
        %v3354 = vld [vmem:[%s4 + $0x28] sm:$0xf]
        %v3355 = vld [vmem:[%s4 + $0x2c] sm:$0xf]
        %v3356 = vld [vmem:[%s4 + $0x30] sm:$0xf]
        %v3357 = vld [vmem:[%s4 + $0x34] sm:$0xf]
        %v3358 = vld [vmem:[%s4 + $0x38] sm:$0xf]
        %v3359 = vld [vmem:[%s4 + $0x3c] sm:$0xf]
        %v3376 = vunpack.c.l.b16 %v3344
        %v3377 = vunpack.c.l.b16 %v3345
        %v3378 = vunpack.c.l.b16 %v3346
        %v3379 = vunpack.c.l.b16 %v3347
        %v3380 = vunpack.c.l.b16 %v3348
        %v3381 = vunpack.c.l.b16 %v3349
        %v3382 = vunpack.c.l.b16 %v3350
        %v3383 = vunpack.c.l.b16 %v3351
        %v3384 = vunpack.c.l.b16 %v3352
        %v3385 = vunpack.c.l.b16 %v3353
        %v3386 = vunpack.c.l.b16 %v3354
        %v3387 = vunpack.c.l.b16 %v3355
        %v3388 = vunpack.c.l.b16 %v3356
        %v3389 = vunpack.c.l.b16 %v3357
        %v3390 = vunpack.c.l.b16 %v3358
        %v3391 = vunpack.c.l.b16 %v3359
        %v3392 = vpack.c.b16 %v3377, %v3376
        %v3393 = vpack.c.b16 %v3379, %v3378
        %v3394 = vpack.c.b16 %v3381, %v3380
        %v3395 = vpack.c.b16 %v3383, %v3382
        %v3396 = vpack.c.b16 %v3385, %v3384
        %v3397 = vpack.c.b16 %v3387, %v3386
        %v3398 = vpack.c.b16 %v3389, %v3388
        %v3399 = vpack.c.b16 %v3391, %v3390
        %3408 = vmatprep.subr.bf16.mxu0 0
        %3409 = vmatpush1.bf16.msra.mxu0 %v3392
        %3410 = vmatprep.subr.bf16.mxu0 0
        %3411 = vmatpush1.bf16.msra.mxu0 %v3393
        %3412 = vmatprep.subr.bf16.mxu0 0
        %3413 = vmatpush1.bf16.msra.mxu0 %v3394
        %3414 = vmatprep.subr.bf16.mxu0 0
        %3415 = vmatpush1.bf16.msra.mxu0 %v3395
        %3416 = vmatprep.subr.bf16.mxu0 0
        %3417 = vmatpush1.bf16.msra.mxu0 %v3396
        %3418 = vmatprep.subr.bf16.mxu0 0
        %3419 = vmatpush1.bf16.msra.mxu0 %v3397
        %3420 = vmatprep.subr.bf16.mxu0 0
        %3421 = vmatpush1.bf16.msra.mxu0 %v3398
        %3422 = vmatprep.subr.bf16.mxu0 0
        %3423 = vmatpush1.bf16.msra.mxu0 %v3399
        %3424 = vmatprep.subr.bf16.mxu0 0
        %3425 = vmatpush1.bf16.msra.mxu0 0
        %3426 = vmatprep.subr.bf16.mxu0 0
        %3427 = vmatpush1.bf16.msra.mxu0 0
        %3428 = vmatprep.subr.bf16.mxu0 0
        %3429 = vmatpush1.bf16.msra.mxu0 0
        %3430 = vmatprep.subr.bf16.mxu0 0
        %3431 = vmatpush1.bf16.msra.mxu0 0
        %3432 = vmatprep.subr.bf16.mxu0 0
        %3433 = vmatpush1.bf16.msra.mxu0 0
        %3434 = vmatprep.subr.bf16.mxu0 0
        %3435 = vmatpush1.bf16.msra.mxu0 0
        %3436 = vmatprep.subr.bf16.mxu0 0
        %3437 = vmatpush1.bf16.msra.mxu0 0
        %3438 = vmatprep.subr.bf16.mxu0 0
        %3439 = vmatpush1.bf16.msra.mxu0 0
        %3440 = vmatprep.mubr.bf16.mxu0 0
        %3441 = vmatmul.mubr.bf16.gmra.mrb[0].mxu0 %v3328
        %v3442 = vpop.f32.mrb[0].mxu0
        %v3443 = vadd.f32 0.0, %v3442
        %v3444 = vpop.f32.mrb[0].mxu0
        %v3445 = vpop.f32.mrb[0].mxu0
        %v3446 = vadd.f32 0.0, %v3445
        %v3447 = vpop.f32.mrb[0].mxu0
        %3448 = vmatprep.mubr.bf16.mxu0 0
        %3449 = vmatmul.mubr.bf16.gmra.mrb[0].mxu0 %v3330
        %v3450 = vpop.f32.mrb[0].mxu0
        %v3451 = vadd.f32 0.0, %v3450
        %v3452 = vpop.f32.mrb[0].mxu0
        %v3453 = vpop.f32.mrb[0].mxu0
        %v3454 = vadd.f32 0.0, %v3453
        %v3455 = vpop.f32.mrb[0].mxu0
        %3456 = vmatprep.mubr.bf16.mxu0 0
        %3457 = vmatmul.mubr.bf16.gmra.mrb[0].mxu0 %v3332
        %v3458 = vpop.f32.mrb[0].mxu0
        %v3459 = vadd.f32 0.0, %v3458
        %v3460 = vpop.f32.mrb[0].mxu0
        %v3461 = vpop.f32.mrb[0].mxu0
        %v3462 = vadd.f32 0.0, %v3461
        %v3463 = vpop.f32.mrb[0].mxu0
        %3464 = vmatprep.mubr.bf16.mxu0 0
        %3465 = vmatmul.mubr.bf16.gmra.mrb[0].mxu0 %v3334
        %v3466 = vpop.f32.mrb[0].mxu0
        %v3467 = vadd.f32 0.0, %v3466
        %v3468 = vpop.f32.mrb[0].mxu0
        %v3469 = vpop.f32.mrb[0].mxu0
        %v3470 = vadd.f32 0.0, %v3469
        %v3471 = vpop.f32.mrb[0].mxu0
        %3472 = vmatprep.mubr.bf16.mxu0 0
        %3473 = vmatmul.mubr.bf16.gmra.mrb[0].mxu0 %v3336
        %v3474 = vpop.f32.mrb[0].mxu0
        %v3475 = vadd.f32 0.0, %v3474
        %v3476 = vpop.f32.mrb[0].mxu0
        %v3477 = vpop.f32.mrb[0].mxu0
        %v3478 = vadd.f32 0.0, %v3477
        %v3479 = vpop.f32.mrb[0].mxu0
        %3480 = vmatprep.mubr.bf16.mxu0 0
        %3481 = vmatmul.mubr.bf16.gmra.mrb[0].mxu0 %v3338
        %v3482 = vpop.f32.mrb[0].mxu0
        %v3483 = vadd.f32 0.0, %v3482
        %v3484 = vpop.f32.mrb[0].mxu0
        %v3485 = vpop.f32.mrb[0].mxu0
        %v3486 = vadd.f32 0.0, %v3485
        %v3487 = vpop.f32.mrb[0].mxu0
        %3488 = vmatprep.mubr.bf16.mxu0 0
        %3489 = vmatmul.mubr.bf16.gmra.mrb[0].mxu0 %v3340
        %v3490 = vpop.f32.mrb[0].mxu0
        %v3491 = vadd.f32 0.0, %v3490
        %v3492 = vpop.f32.mrb[0].mxu0
        %v3493 = vpop.f32.mrb[0].mxu0
        %v3494 = vadd.f32 0.0, %v3493
        %v3495 = vpop.f32.mrb[0].mxu0
        %3496 = vmatprep.mubr.bf16.mxu0 0
        %3497 = vmatmul.mubr.bf16.gmra.mrb[0].mxu0 %v3342
        %v3498 = vpop.f32.mrb[0].mxu0
        %v3499 = vadd.f32 0.0, %v3498
        %v3500 = vpop.f32.mrb[0].mxu0
        %v3501 = vpop.f32.mrb[0].mxu0
        %v3502 = vadd.f32 0.0, %v3501
        %v3503 = vpop.f32.mrb[0].mxu0
        %3504 = vdwg.mxu0
        %v3505 = vld [vmem:[%s5] sm:$0x1]
        %v3507 = vlaneseq
        %v3508 = vshrl.u32 %v3507, 7
        %v3509 = vsub.s32 0, %v3508
        %v3510 = vrot.slane %v3505, %v3509
        %v3512 = vmul.f32 %v3443, %v3510
        %v3513 = vmul.f32 %v3446, %v3510
        %v3514 = vmul.f32 %v3451, %v3510
        %v3515 = vmul.f32 %v3454, %v3510
        %v3516 = vmul.f32 %v3459, %v3510
        %v3517 = vmul.f32 %v3462, %v3510
        %v3518 = vmul.f32 %v3467, %v3510
        %v3519 = vmul.f32 %v3470, %v3510
        %v3520 = vmul.f32 %v3475, %v3510
        %v3521 = vmul.f32 %v3478, %v3510
        %v3522 = vmul.f32 %v3483, %v3510
        %v3523 = vmul.f32 %v3486, %v3510
        %v3524 = vmul.f32 %v3491, %v3510
        %v3525 = vmul.f32 %v3494, %v3510
        %v3526 = vmul.f32 %v3499, %v3510
        %v3527 = vmul.f32 %v3502, %v3510
        %v3528 = vld [vmem:[%s6] sm:$0x1]
        %v3530 = vlaneseq
        %v3531 = vshrl.u32 %v3530, 7
        %v3532 = vsub.s32 0, %v3531
        %v3533 = vrot.slane %v3528, %v3532
        %v3535 = vadd.f32 %v3512, %v3533
        %v3536 = vadd.f32 %v3513, %v3533
        %v3537 = vadd.f32 %v3514, %v3533
        %v3538 = vadd.f32 %v3515, %v3533
        %v3539 = vadd.f32 %v3516, %v3533
        %v3540 = vadd.f32 %v3517, %v3533
        %v3541 = vadd.f32 %v3518, %v3533
        %v3542 = vadd.f32 %v3519, %v3533
        %v3543 = vadd.f32 %v3520, %v3533
        %v3544 = vadd.f32 %v3521, %v3533
        %v3545 = vadd.f32 %v3522, %v3533
        %v3546 = vadd.f32 %v3523, %v3533
        %v3547 = vadd.f32 %v3524, %v3533
        %v3548 = vadd.f32 %v3525, %v3533
        %v3549 = vadd.f32 %v3526, %v3533
        %v3550 = vadd.f32 %v3527, %v3533
        %v3551 = vmax.f32 %v3535, 0.0
        %v3552 = vmax.f32 %v3536, 0.0
        %v3553 = vmax.f32 %v3537, 0.0
        %v3554 = vmax.f32 %v3538, 0.0
        %v3555 = vmax.f32 %v3539, 0.0
        %v3556 = vmax.f32 %v3540, 0.0
        %v3557 = vmax.f32 %v3541, 0.0
        %v3558 = vmax.f32 %v3542, 0.0
        %v3559 = vmax.f32 %v3543, 0.0
        %v3560 = vmax.f32 %v3544, 0.0
        %v3561 = vmax.f32 %v3545, 0.0
        %v3562 = vmax.f32 %v3546, 0.0
        %v3563 = vmax.f32 %v3547, 0.0
        %v3564 = vmax.f32 %v3548, 0.0
        %v3565 = vmax.f32 %v3549, 0.0
        %v3566 = vmax.f32 %v3550, 0.0
        %3567 = vst [vmem:[%s285] sm:$0xff] %v3551
        %3568 = vst [vmem:[%s285 + $0x8] sm:$0xff] %v3552
        %3569 = vst [vmem:[%s285 + $0x10] sm:$0xff] %v3553
        %3570 = vst [vmem:[%s285 + $0x18] sm:$0xff] %v3554
        %3571 = vst [vmem:[%s285 + $0x20] sm:$0xff] %v3555
        %3572 = vst [vmem:[%s285 + $0x28] sm:$0xff] %v3556
        %3573 = vst [vmem:[%s285 + $0x30] sm:$0xff] %v3557
        %3574 = vst [vmem:[%s285 + $0x38] sm:$0xff] %v3558
        %3575 = vst [vmem:[%s285 + $0x40] sm:$0xff] %v3559
        %3576 = vst [vmem:[%s285 + $0x48] sm:$0xff] %v3560
        %3577 = vst [vmem:[%s285 + $0x50] sm:$0xff] %v3561
        %3578 = vst [vmem:[%s285 + $0x58] sm:$0xff] %v3562
        %3579 = vst [vmem:[%s285 + $0x60] sm:$0xff] %v3563
        %3580 = vst [vmem:[%s285 + $0x68] sm:$0xff] %v3564
        %3581 = vst [vmem:[%s285 + $0x70] sm:$0xff] %v3565
        %3582 = vst [vmem:[%s285 + $0x78] sm:$0xff] %v3566
        %s3583 = sand.u32 %s195, 1
        %s3584 = scalar_lea.sflag [#allocation5], %s3583
        %s3585 = sand.u32 %s195, 1
        %s3586 = smul.addr %s3585, 128
        %s3587 = scalar_lea.vmem [#allocation4], %s3586
        // Predicated region
        $region61: #{tpu_custom_call.1} parent=47 // pred_check
          %p3588 = pneg %p205
        $region62: #{tpu_custom_call.1} parent=47 // pred_check_branch
          %3590 = sbr.rel (%p3588) target = $region64
        $region63: #{tpu_custom_call.1} parent=47 // pred_region
          %s3591 = smul.u32 16, %s26
          %s3593 = ssub.s32 2048, 2048
          %3594 = vsyncadd %s3584, %s3593
          %s3595 = smul.addr %s25, 32
          %s3596 = sadd.s32 %s3591, %s3595
          %s3597 = smul.addr %s3596, 128
          %s3598 = scalar_lea.hbm %s7, %s3597
          %s3599 = sshll.u32 %s3587, 4
          %s3600 = int_to_ptr.vmem [resolvable:$true] %s3599
          %3605 = dma.vmem_to_hbm [thread:$0]  %s3600, 2048, %s3598, %s3584, 128, 128, 8
        $region64: #{tpu_custom_call.1} parent=47 // pred_fallthru
          _
      $region48: #{tpu_custom_call.1} parent=5 // pred_fallthru
        _
      %p3606 = scmp.le.s32.totalorder 2, %s16
      // Predicated region
      $region65: #{tpu_custom_call.1} parent=5 // pred_check
        %p3607 = pneg %p3606
      $region66: #{tpu_custom_call.1} parent=5 // pred_check_branch
        %3609 = sbr.rel (%p3607) target = $region68
      $region67: #{tpu_custom_call.1} parent=5 // pred_region
        %s3610 = ssub.s32 %s16, 2
        // Predicated region
        $region69: #{tpu_custom_call.1} parent=67 // pred_check
          %p3611 = pneg %p211
        $region70: #{tpu_custom_call.1} parent=67 // pred_check_branch
          %3613 = sbr.rel (%p3611) target = $region72
        $region71: #{tpu_custom_call.1} parent=67 // pred_region
          %s3614 = sand.u32 %s196, 1
          %s3615 = scalar_lea.sflag [#allocation5], %s3614
          %s3616 = sand.u32 %s196, 1
          %s3617 = smul.addr %s3616, 128
          %s3618 = scalar_lea.vmem [#allocation4], %s3617
          %3619 = dma.done %s3615, 2048
        $region72: #{tpu_custom_call.1} parent=67 // pred_fallthru
          _
      $region68: #{tpu_custom_call.1} parent=5 // pred_fallthru
        _
    $region6: #{tpu_custom_call.1} parent=1 // loop_footer
      %s20 = sadd.s32 1, %s16
    $region7: #{tpu_custom_call.1} parent=1 // loop_footer_branch
      %15 = sbr.rel target = $region3
    $region8: #{tpu_custom_call.1} parent=1 // loop_exit
      _
    %3620 = vsyncpa [#allocation5], 1
    %s3621 = scalar_lea.sflag [#allocation5], 1
    %3622 = vsyncpa %s3621, 1

</llo_original>
